<compile_context>
chip_gen: v7x
topology: tpu7x:2x2x1
jax: 0.10.0
libtpu: 0.0.40
codegen_flags: <defaults>
</compile_context>

<pallas_src>
import functools
import math

import jax
import jax.numpy as jnp
from jax.experimental import pallas as pl
from jax.experimental.pallas import tpu as pltpu

# ----------------------------------------------------------------------------
# Config (small, deterministic)
# ----------------------------------------------------------------------------
CFG = dict(
    vocab_size=128,
    hidden_size=32,
    num_layers=2,
    num_heads=2,
    d_ff=64,
    seq_len=32,
    num_buckets=32,
    max_distance=128,
    eps=1e-6,
    init_std=0.02,
)


# ----------------------------------------------------------------------------
# Fused whole-model Pallas kernel: one grid step = one T5Block of one stack.
# ----------------------------------------------------------------------------
def _t5_fused_kernel(
    x_ref, bias_ref, ln_ref,
    wqkv_ref, bqkv_ref, wo_ref, bo_ref,
    wqkv_c_ref, bqkv_c_ref, wo_c_ref, bo_c_ref,
    w1_ref, b1_ref, w2_ref, b2_ref, fln_ref,
    out_ref,
    h_scr,
    *, B, S, H, nh, hd, eps,
):
    f32 = jnp.float32
    layer = pl.program_id(1)
    last_layer = pl.num_programs(1) - 1
    is_decoder = pl.program_id(0) == 1          # stack 0 = encoder, 1 = decoder

    def rmsnorm(x2d, w_row):
        # T5LayerNorm: x * rsqrt(mean(x^2) + eps) * weight
        var = jnp.mean(x2d * x2d, axis=-1, keepdims=True)
        return w_row * (x2d * jax.lax.rsqrt(var + eps))

    def attention(x2d, wqkv, bqkv, wo, bo, bias):
        # One fused lane-dense (H, 3H) QKV matmul; score scale already folded
        # into the Q columns at pack time.
        qkv = jnp.dot(x2d, wqkv, preferred_element_type=f32) + bqkv      # (B*S, 3H)
        ctx_heads = []
        for hi in range(nh):                     # tiny head loop, batched over B
            c0 = hi * hd
            q = qkv[:, c0:c0 + hd].reshape(B, S, hd)
            k = qkv[:, H + c0:H + c0 + hd].reshape(B, S, hd)
            v = qkv[:, 2 * H + c0:2 * H + c0 + hd].reshape(B, S, hd)
            s = jnp.einsum('bqd,bkd->bqk', q, k,
                           preferred_element_type=f32)                   # (B, S, S)
            if bias is not None:
                s = s + bias[hi]                  # (S, S) broadcast over batch
            s = s - jnp.max(s, axis=-1, keepdims=True)
            p = jnp.exp(s)
            p = p / jnp.sum(p, axis=-1, keepdims=True)                   # exact softmax
            ctx = jnp.einsum('bqk,bkd->bqd', p, v,
                             preferred_element_type=f32)                 # (B, S, hd)
            ctx_heads.append(ctx.reshape(B * S, hd))
        ctx2d = jnp.concatenate(ctx_heads, axis=-1)                      # (B*S, H)
        # ONE fused output projection for all heads.
        return jnp.dot(ctx2d, wo, preferred_element_type=f32) + bo

    # Layer 0 of each stack: (re)load the embedded tokens into the VMEM carry.
    @pl.when(layer == 0)
    def _():
        h_scr[...] = x_ref[0]

    ln_w = ln_ref[0, 0]              # (1, H) single LayerNorm weight of this block
    bias = bias_ref[0]               # (nh, S, S) relative position bias of this stack

    # --- self-attention sublayer ---------------------------------------------
    x = h_scr[...]
    h_scr[...] = x + attention(rmsnorm(x, ln_w), wqkv_ref[0, 0], bqkv_ref[0, 0],
                               wo_ref[0, 0], bo_ref[0, 0], bias)

    # --- "cross"-attention sublayer (decoder stack only; the reference module
    #     never feeds it encoder states -- it re-attends the decoder states) ---
    @pl.when(is_decoder)
    def _():
        xc = h_scr[...]
        h_scr[...] = xc + attention(rmsnorm(xc, ln_w), wqkv_c_ref[0, 0],
                                    bqkv_c_ref[0, 0], wo_c_ref[0, 0],
                                    bo_c_ref[0, 0], None)

    # --- MLP sublayer (d_ff intermediate never leaves VMEM/vregs) -------------
    x = h_scr[...]
    ff = jnp.maximum(
        jnp.dot(rmsnorm(x, ln_w), w1_ref[0, 0], preferred_element_type=f32)
        + b1_ref[0, 0], 0.0)
    ff = jnp.dot(ff, w2_ref[0, 0], preferred_element_type=f32) + b2_ref[0, 0]
    h_scr[...] = x + ff

    # --- stack-level final LayerNorm; HBM write happens once per stack --------
    @pl.when(layer == last_layer)
    def _():
        out_ref[0] = rmsnorm(h_scr[...], fln_ref[0])


# ----------------------------------------------------------------------------
# Relative position bias (glue: integer / log math + embedding gather)
# ----------------------------------------------------------------------------
def _relative_position_bucket(rel_pos, num_buckets, max_distance):
    # bidirectional=True branch of the reference
    num_buckets //= 2
    rel_buckets = (rel_pos > 0).astype(jnp.int32) * num_buckets
    rel_pos = jnp.abs(rel_pos)
    max_exact = num_buckets // 2
    is_small = rel_pos < max_exact
    safe = jnp.maximum(rel_pos, 1)            # avoid log(0); masked by is_small
    rel_if_large = max_exact + (
        jnp.log(safe.astype(jnp.float32) / max_exact)
        / math.log(max_distance / max_exact)
        * (num_buckets - max_exact)
    ).astype(jnp.int32)
    rel_if_large = jnp.minimum(rel_if_large, num_buckets - 1)
    return rel_buckets + jnp.where(is_small, rel_pos, rel_if_large)


def compute_bias(q_len, k_len, rel_emb, cfg):
    ctx = jnp.arange(q_len, dtype=jnp.int32)[:, None]
    mem = jnp.arange(k_len, dtype=jnp.int32)[None, :]
    rel_pos = mem - ctx
    buckets = _relative_position_bucket(
        rel_pos, cfg["num_buckets"], cfg["max_distance"])
    values = jnp.take(rel_emb, buckets, axis=0)          # (q, k, nh)
    return jnp.transpose(values, (2, 0, 1))              # (nh, q, k)


# ----------------------------------------------------------------------------
# Model forward: embedding/bias glue + ONE pallas_call for the whole model.
# ----------------------------------------------------------------------------
def t5_forward(packed, input_ids, decoder_input_ids, cfg):
    B, S = input_ids.shape
    H, nh, L = cfg["hidden_size"], cfg["num_heads"], cfg["num_layers"]
    hd = H // nh
    BS = B * S

    # Embedding gather + relative-position bucket math stay in plain-JAX glue.
    x = jnp.stack([
        jnp.take(packed["shared"], input_ids.reshape(-1), axis=0),
        jnp.take(packed["shared"], decoder_input_ids.reshape(-1), axis=0),
    ])                                                            # (2, B*S, H)
    bias = jnp.stack([compute_bias(S, S, packed["rel_emb"][i], cfg)
                      for i in range(2)])                         # (2, nh, S, S)

    def per_stack(a):        # constant block across the layer axis
        return pl.BlockSpec((1,) + a.shape[1:],
                            lambda s, l: (s,) + (0,) * (a.ndim - 1))

    def per_layer(a):        # one (stack, layer) weight slab per grid step
        return pl.BlockSpec((1, 1) + a.shape[2:],
                            lambda s, l: (s, l) + (0,) * (a.ndim - 2))

    weights = (packed["ln_w"],
               packed["wqkv_s"], packed["bqkv_s"], packed["wo_s"], packed["bo_s"],
               packed["wqkv_c"], packed["bqkv_c"], packed["wo_c"], packed["bo_c"],
               packed["w1"], packed["b1"], packed["w2"], packed["b2"])

    kernel = functools.partial(_t5_fused_kernel, B=B, S=S, H=H, nh=nh, hd=hd,
                               eps=cfg["eps"])

    out = pl.pallas_call(
        kernel,
        out_shape=jax.ShapeDtypeStruct((2, BS, H), jnp.float32),
        grid=(2, L),                 # (stack, layer); stacks are independent
        in_specs=[per_stack(x), per_stack(bias)]
                 + [per_layer(w) for w in weights]
                 + [per_stack(packed["fln"])],
        out_specs=pl.BlockSpec((1, BS, H), lambda s, l: (s, 0, 0)),
        scratch_shapes=[pltpu.VMEM((BS, H), jnp.float32)],   # hidden-state carry
        compiler_params=pltpu.CompilerParams(
            dimension_semantics=("parallel", "arbitrary")),
    )(x, bias, *weights, packed["fln"])

    return {"encoder_last_hidden_state": out[0].reshape(B, S, H),
            "decoder_last_hidden_state": out[1].reshape(B, S, H)}


# ----------------------------------------------------------------------------
# Deterministic parameter init (normal(0, 0.02) weights, zero biases, LN ones)
# and host-side one-off packing into (stack, layer, ...) slabs.
# ----------------------------------------------------------------------------
def init_params(key, cfg):
    H, nh = cfg["hidden_size"], cfg["num_heads"]
    dff, V = cfg["d_ff"], cfg["vocab_size"]
    nb, L = cfg["num_buckets"], cfg["num_layers"]
    std = cfg["init_std"]
    keys = iter(jax.random.split(key, 256))

    def nrm(shape):
        return std * jax.random.normal(next(keys), shape, jnp.float32)

    def attn():
        # nn.Linear weights ~ N(0, 0.02); biases are zero-initialised by the
        # reference _init_weights and added as explicit zeros at pack time.
        return {"w_q": nrm((H, H)), "w_k": nrm((H, H)),
                "w_v": nrm((H, H)), "w_o": nrm((H, H))}

    def block(has_rel):
        p = {"ln_w": jnp.ones((H,), jnp.float32),   # single LN shared per block
             "self": attn(),
             "cross": attn(),     # reference creates layer[1] in BOTH stacks
             "mlp": {"w1": nrm((H, dff)), "w2": nrm((dff, H))}}
        if has_rel:
            p["rel_emb"] = nrm((nb, nh))
        return p

    def stack():
        return {"blocks": [block(i == 0) for i in range(L)],
                "final_ln_w": jnp.ones((H,), jnp.float32)}

    return {"shared": nrm((V, H)), "encoder": stack(), "decoder": stack()}


def pack_params(params, cfg):
    """One-off host-side packing.  Folds the 1/sqrt(head_dim) score scale into
    the Q projection columns and fuses Q/K/V into a single (H, 3H) slab."""
    H, L, dff = cfg["hidden_size"], cfg["num_layers"], cfg["d_ff"]
    hd = H // cfg["num_heads"]
    scale = 1.0 / math.sqrt(hd)

    def fused_qkv(a):
        return jnp.concatenate([a["w_q"] * scale, a["w_k"], a["w_v"]], axis=1)

    def stacked(fn):
        return jnp.stack([jnp.stack([fn(b) for b in params[s]["blocks"]])
                          for s in ("encoder", "decoder")])

    z = lambda n: jnp.zeros((1, n), jnp.float32)    # zero-initialised Linear biases

    return {
        "shared": params["shared"],
        "rel_emb": jnp.stack([params[s]["blocks"][0]["rel_emb"]
                              for s in ("encoder", "decoder")]),    # (2, nb, nh)
        "ln_w":   stacked(lambda b: b["ln_w"][None, :]),            # (2, L, 1, H)
        "wqkv_s": stacked(lambda b: fused_qkv(b["self"])),          # (2, L, H, 3H)
        "bqkv_s": stacked(lambda b: z(3 * H)),
        "wo_s":   stacked(lambda b: b["self"]["w_o"]),              # (2, L, H, H)
        "bo_s":   stacked(lambda b: z(H)),
        "wqkv_c": stacked(lambda b: fused_qkv(b["cross"])),
        "bqkv_c": stacked(lambda b: z(3 * H)),
        "wo_c":   stacked(lambda b: b["cross"]["w_o"]),
        "bo_c":   stacked(lambda b: z(H)),
        "w1":     stacked(lambda b: b["mlp"]["w1"]),                # (2, L, H, dff)
        "b1":     stacked(lambda b: z(dff)),
        "w2":     stacked(lambda b: b["mlp"]["w2"]),                # (2, L, dff, H)
        "b2":     stacked(lambda b: z(H)),
        "fln":    jnp.stack([params[s]["final_ln_w"][None, :]
                             for s in ("encoder", "decoder")]),     # (2, 1, H)
    }


# ----------------------------------------------------------------------------
if __name__ == "__main__":
    cfg = CFG
    key = jax.random.PRNGKey(0)
    pkey, ik1, ik2 = jax.random.split(key, 3)
    params = init_params(pkey, cfg)
    packed = pack_params(params, cfg)

    B, S = 2, cfg["seq_len"]
    input_ids = jax.random.randint(ik1, (B, S), 0, cfg["vocab_size"], dtype=jnp.int32)
    decoder_input_ids = jax.random.randint(
        ik2, (B, S), 0, cfg["vocab_size"], dtype=jnp.int32)

    fwd = jax.jit(functools.partial(t5_forward, cfg=cfg))
    out = fwd(packed, input_ids, decoder_input_ids)
    jax.block_until_ready(out)

    assert out["encoder_last_hidden_state"].shape == (B, S, cfg["hidden_size"])
    assert out["decoder_last_hidden_state"].shape == (B, S, cfg["hidden_size"])
    assert bool(jnp.all(jnp.isfinite(out["encoder_last_hidden_state"])))
    assert bool(jnp.all(jnp.isfinite(out["decoder_last_hidden_state"])))
    print("KERNEL_OK")
</pallas_src>

<mosaic_0001>
module attributes {stable_mosaic.version = 11 : i64} {
  func.func @_t5_fused_kernel(%arg0: i32, %arg1: i32, %arg2: memref<1x64x32xf32, #tpu.memory_space<vmem>>, %arg3: memref<1x2x32x32xf32, #tpu.memory_space<vmem>>, %arg4: memref<1x1x1x32xf32, #tpu.memory_space<vmem>>, %arg5: memref<1x1x32x96xf32, #tpu.memory_space<vmem>>, %arg6: memref<1x1x1x96xf32, #tpu.memory_space<vmem>>, %arg7: memref<1x1x32x32xf32, #tpu.memory_space<vmem>>, %arg8: memref<1x1x1x32xf32, #tpu.memory_space<vmem>>, %arg9: memref<1x1x32x96xf32, #tpu.memory_space<vmem>>, %arg10: memref<1x1x1x96xf32, #tpu.memory_space<vmem>>, %arg11: memref<1x1x32x32xf32, #tpu.memory_space<vmem>>, %arg12: memref<1x1x1x32xf32, #tpu.memory_space<vmem>>, %arg13: memref<1x1x32x64xf32, #tpu.memory_space<vmem>>, %arg14: memref<1x1x1x64xf32, #tpu.memory_space<vmem>>, %arg15: memref<1x1x64x32xf32, #tpu.memory_space<vmem>>, %arg16: memref<1x1x1x32xf32, #tpu.memory_space<vmem>>, %arg17: memref<1x1x32xf32, #tpu.memory_space<vmem>>, %arg18: memref<1x64x32xf32, #tpu.memory_space<vmem>>, %arg19: memref<64x32xf32, #tpu.memory_space<vmem>>) attributes {dimension_semantics = [#tpu.dimension_semantics<parallel>, #tpu.dimension_semantics<arbitrary>], iteration_bounds = array<i64: 2, 2>, scalar_prefetch = 0 : i64, scratch_operands = 1 : i64, tpu.core_type = #tpu.core_type<tc>, window_params = [{transform_indices = @transform_0, window_bounds = array<i64: 1, 64, 32>}, {transform_indices = @transform_1, window_bounds = array<i64: 1, 2, 32, 32>}, {transform_indices = @transform_2, window_bounds = array<i64: 1, 1, 1, 32>}, {transform_indices = @transform_3, window_bounds = array<i64: 1, 1, 32, 96>}, {transform_indices = @transform_4, window_bounds = array<i64: 1, 1, 1, 96>}, {transform_indices = @transform_5, window_bounds = array<i64: 1, 1, 32, 32>}, {transform_indices = @transform_6, window_bounds = array<i64: 1, 1, 1, 32>}, {transform_indices = @transform_7, window_bounds = array<i64: 1, 1, 32, 96>}, {transform_indices = @transform_8, window_bounds = array<i64: 1, 1, 1, 96>}, {transform_indices = @transform_9, window_bounds = array<i64: 1, 1, 32, 32>}, {transform_indices = @transform_10, window_bounds = array<i64: 1, 1, 1, 32>}, {transform_indices = @transform_11, window_bounds = array<i64: 1, 1, 32, 64>}, {transform_indices = @transform_12, window_bounds = array<i64: 1, 1, 1, 64>}, {transform_indices = @transform_13, window_bounds = array<i64: 1, 1, 64, 32>}, {transform_indices = @transform_14, window_bounds = array<i64: 1, 1, 1, 32>}, {transform_indices = @transform_15, window_bounds = array<i64: 1, 1, 32>}, {transform_indices = @transform_16, window_bounds = array<i64: 1, 64, 32>}]} {
    %c1_i32 = arith.constant 1 : i32
    %0 = arith.cmpi eq, %arg0, %c1_i32 : i32
    %c0_i32 = arith.constant 0 : i32
    %1 = arith.cmpi eq, %arg1, %c0_i32 : i32
    %2 = arith.extui %1 : i1 to i32
    %c0_i32_0 = arith.constant 0 : i32
    %3 = arith.cmpi ne, %2, %c0_i32_0 : i32
    scf.if %3 {
      %c0_69 = arith.constant 0 : index
      %c0_70 = arith.constant 0 : index
      %c0_71 = arith.constant 0 : index
      %120 = vector.load %arg2[%c0_69, %c0_70, %c0_71] : memref<1x64x32xf32, #tpu.memory_space<vmem>>, vector<1x64x32xf32>
      %121 = vector.shape_cast %120 : vector<1x64x32xf32> to vector<64x32xf32>
      %c0_72 = arith.constant 0 : index
      %c0_73 = arith.constant 0 : index
      %122 = vector.load %arg19[%c0_72, %c0_73] : memref<64x32xf32, #tpu.memory_space<vmem>>, vector<64x32xf32>
      tpu.vector_store %arg19[%c0_72, %c0_73], %121 {strides = array<i32>} : memref<64x32xf32, #tpu.memory_space<vmem>>, vector<64x32xf32>,
    } else {
    }
    %c0 = arith.constant 0 : index
    %c0_1 = arith.constant 0 : index
    %c0_2 = arith.constant 0 : index
    %c0_3 = arith.constant 0 : index
    %4 = vector.load %arg4[%c0, %c0_1, %c0_2, %c0_3] : memref<1x1x1x32xf32, #tpu.memory_space<vmem>>, vector<1x1x1x32xf32>
    %5 = vector.shape_cast %4 : vector<1x1x1x32xf32> to vector<1x32xf32>
    %c0_4 = arith.constant 0 : index
    %c0_5 = arith.constant 0 : index
    %c0_6 = arith.constant 0 : index
    %c0_7 = arith.constant 0 : index
    %6 = vector.load %arg3[%c0_4, %c0_5, %c0_6, %c0_7] : memref<1x2x32x32xf32, #tpu.memory_space<vmem>>, vector<1x2x32x32xf32>
    %7 = vector.shape_cast %6 : vector<1x2x32x32xf32> to vector<2x32x32xf32>
    %c0_8 = arith.constant 0 : index
    %c0_9 = arith.constant 0 : index
    %8 = vector.load %arg19[%c0_8, %c0_9] : memref<64x32xf32, #tpu.memory_space<vmem>>, vector<64x32xf32>
    %9 = arith.mulf %8, %8 : vector<64x32xf32>
    %cst = arith.constant dense<0.000000e+00> : vector<64xf32>
    %10 = vector.multi_reduction <add>, %9, %cst [1] : vector<64x32xf32> to vector<64xf32>
    %11 = vector.shape_cast %10 : vector<64xf32> to vector<64x1xf32>
    %cst_10 = arith.constant 3.200000e+01 : f32
    %12 = vector.broadcast %cst_10 : f32 to vector<64x1xf32>
    %13 = arith.divf %11, %12 : vector<64x1xf32>
    %cst_11 = arith.constant 9.99999997E-7 : f32
    %14 = vector.broadcast %cst_11 : f32 to vector<64x1xf32>
    %15 = arith.addf %13, %14 : vector<64x1xf32>
    %16 = math.rsqrt %15 : vector<64x1xf32>
    %17 = vector.broadcast %16 : vector<64x1xf32> to vector<64x32xf32>
    %18 = arith.mulf %8, %17 : vector<64x32xf32>
    %19 = vector.broadcast %5 : vector<1x32xf32> to vector<64x32xf32>
    %20 = arith.mulf %19, %18 : vector<64x32xf32>
    %c0_12 = arith.constant 0 : index
    %c0_13 = arith.constant 0 : index
    %c0_14 = arith.constant 0 : index
    %c0_15 = arith.constant 0 : index
    %21 = vector.load %arg5[%c0_12, %c0_13, %c0_14, %c0_15] : memref<1x1x32x96xf32, #tpu.memory_space<vmem>>, vector<1x1x32x96xf32>
    %22 = vector.shape_cast %21 : vector<1x1x32x96xf32> to vector<32x96xf32>
    %c0_16 = arith.constant 0 : index
    %c0_17 = arith.constant 0 : index
    %c0_18 = arith.constant 0 : index
    %c0_19 = arith.constant 0 : index
    %23 = vector.load %arg6[%c0_16, %c0_17, %c0_18, %c0_19] : memref<1x1x1x96xf32, #tpu.memory_space<vmem>>, vector<1x1x1x96xf32>
    %24 = vector.shape_cast %23 : vector<1x1x1x96xf32> to vector<1x96xf32>
    %c0_20 = arith.constant 0 : index
    %c0_21 = arith.constant 0 : index
    %c0_22 = arith.constant 0 : index
    %c0_23 = arith.constant 0 : index
    %25 = vector.load %arg7[%c0_20, %c0_21, %c0_22, %c0_23] : memref<1x1x32x32xf32, #tpu.memory_space<vmem>>, vector<1x1x32x32xf32>
    %26 = vector.shape_cast %25 : vector<1x1x32x32xf32> to vector<32x32xf32>
    %c0_24 = arith.constant 0 : index
    %c0_25 = arith.constant 0 : index
    %c0_26 = arith.constant 0 : index
    %c0_27 = arith.constant 0 : index
    %27 = vector.load %arg8[%c0_24, %c0_25, %c0_26, %c0_27] : memref<1x1x1x32xf32, #tpu.memory_space<vmem>>, vector<1x1x1x32xf32>
    %28 = vector.shape_cast %27 : vector<1x1x1x32xf32> to vector<1x32xf32>
    %cst_28 = arith.constant dense<0.000000e+00> : vector<64x96xf32>
    %29 = tpu.matmul %20, %22, %cst_28 {dimension_numbers = #tpu.dot_dimension_numbers<[1], [0], [0], [1], [0, 0, 1, 1], [], []>} : vector<64x32xf32>, vector<32x96xf32>, vector<64x96xf32> -> vector<64x96xf32>
    %30 = vector.broadcast %24 : vector<1x96xf32> to vector<64x96xf32>
    %31 = arith.addf %29, %30 : vector<64x96xf32>
    %32 = vector.extract_strided_slice %31 {offsets = [0, 0], sizes = [64, 16], strides = [1, 1]} : vector<64x96xf32> to vector<64x16xf32>
    %33 = vector.shape_cast %32 : vector<64x16xf32> to vector<2x32x16xf32>
    %34 = vector.extract_strided_slice %31 {offsets = [0, 32], sizes = [64, 16], strides = [1, 1]} : vector<64x96xf32> to vector<64x16xf32>
    %35 = vector.shape_cast %34 : vector<64x16xf32> to vector<2x32x16xf32>
    %36 = vector.extract_strided_slice %31 {offsets = [0, 64], sizes = [64, 16], strides = [1, 1]} : vector<64x96xf32> to vector<64x16xf32>
    %37 = vector.shape_cast %36 : vector<64x16xf32> to vector<2x32x16xf32>
    "tpu.trace_start"() <{level = 10 : i32, message = "bqd,bkd->bqk"}> : () -> ()
    %cst_29 = arith.constant dense<0.000000e+00> : vector<2x32x32xf32>
    %38 = tpu.matmul %33, %35, %cst_29 {dimension_numbers = #tpu.dot_dimension_numbers<[2], [2], [1], [1], [0, 0, 0, 1, 1, 1], [0], [0]>} : vector<2x32x16xf32>, vector<2x32x16xf32>, vector<2x32x32xf32> -> vector<2x32x32xf32>
    "tpu.trace_stop"() : () -> ()
    %39 = vector.extract_strided_slice %7 {offsets = [0, 0, 0], sizes = [1, 32, 32], strides = [1, 1, 1]} : vector<2x32x32xf32> to vector<1x32x32xf32>
    %40 = vector.shape_cast %39 : vector<1x32x32xf32> to vector<32x32xf32>
    %41 = vector.shape_cast %40 : vector<32x32xf32> to vector<1x32x32xf32>
    %42 = vector.broadcast %41 : vector<1x32x32xf32> to vector<2x32x32xf32>
    %43 = arith.addf %38, %42 : vector<2x32x32xf32>
    %cst_30 = arith.constant dense<0xFF800000> : vector<2x32xf32>
    %44 = vector.multi_reduction <maximumf>, %43, %cst_30 [2] : vector<2x32x32xf32> to vector<2x32xf32>
    %45 = vector.shape_cast %44 : vector<2x32xf32> to vector<2x32x1xf32>
    %46 = vector.broadcast %45 : vector<2x32x1xf32> to vector<2x32x32xf32>
    %47 = arith.subf %43, %46 : vector<2x32x32xf32>
    %48 = math.exp %47 : vector<2x32x32xf32>
    %cst_31 = arith.constant dense<0.000000e+00> : vector<2x32xf32>
    %49 = vector.multi_reduction <add>, %48, %cst_31 [2] : vector<2x32x32xf32> to vector<2x32xf32>
    %50 = vector.shape_cast %49 : vector<2x32xf32> to vector<2x32x1xf32>
    %51 = vector.broadcast %50 : vector<2x32x1xf32> to vector<2x32x32xf32>
    %52 = arith.divf %48, %51 : vector<2x32x32xf32>
    "tpu.trace_start"() <{level = 10 : i32, message = "bqk,bkd->bqd"}> : () -> ()
    %cst_32 = arith.constant dense<0.000000e+00> : vector<2x32x16xf32>
    %53 = tpu.matmul %52, %37, %cst_32 {dimension_numbers = #tpu.dot_dimension_numbers<[2], [1], [1], [2], [0, 0, 0, 1, 1, 2], [0], [0]>} : vector<2x32x32xf32>, vector<2x32x16xf32>, vector<2x32x16xf32> -> vector<2x32x16xf32>
    "tpu.trace_stop"() : () -> ()
    %54 = vector.shape_cast %53 : vector<2x32x16xf32> to vector<64x16xf32>
    %55 = vector.extract_strided_slice %31 {offsets = [0, 16], sizes = [64, 16], strides = [1, 1]} : vector<64x96xf32> to vector<64x16xf32>
    %56 = vector.shape_cast %55 : vector<64x16xf32> to vector<2x32x16xf32>
    %57 = vector.extract_strided_slice %31 {offsets = [0, 48], sizes = [64, 16], strides = [1, 1]} : vector<64x96xf32> to vector<64x16xf32>
    %58 = vector.shape_cast %57 : vector<64x16xf32> to vector<2x32x16xf32>
    %59 = vector.extract_strided_slice %31 {offsets = [0, 80], sizes = [64, 16], strides = [1, 1]} : vector<64x96xf32> to vector<64x16xf32>
    %60 = vector.shape_cast %59 : vector<64x16xf32> to vector<2x32x16xf32>
    "tpu.trace_start"() <{level = 10 : i32, message = "bqd,bkd->bqk"}> : () -> ()
    %cst_33 = arith.constant dense<0.000000e+00> : vector<2x32x32xf32>
    %61 = tpu.matmul %56, %58, %cst_33 {dimension_numbers = #tpu.dot_dimension_numbers<[2], [2], [1], [1], [0, 0, 0, 1, 1, 1], [0], [0]>} : vector<2x32x16xf32>, vector<2x32x16xf32>, vector<2x32x32xf32> -> vector<2x32x32xf32>
    "tpu.trace_stop"() : () -> ()
    %62 = vector.extract_strided_slice %7 {offsets = [1, 0, 0], sizes = [1, 32, 32], strides = [1, 1, 1]} : vector<2x32x32xf32> to vector<1x32x32xf32>
    %63 = vector.shape_cast %62 : vector<1x32x32xf32> to vector<32x32xf32>
    %64 = vector.shape_cast %63 : vector<32x32xf32> to vector<1x32x32xf32>
    %65 = vector.broadcast %64 : vector<1x32x32xf32> to vector<2x32x32xf32>
    %66 = arith.addf %61, %65 : vector<2x32x32xf32>
    %cst_34 = arith.constant dense<0xFF800000> : vector<2x32xf32>
    %67 = vector.multi_reduction <maximumf>, %66, %cst_34 [2] : vector<2x32x32xf32> to vector<2x32xf32>
    %68 = vector.shape_cast %67 : vector<2x32xf32> to vector<2x32x1xf32>
    %69 = vector.broadcast %68 : vector<2x32x1xf32> to vector<2x32x32xf32>
    %70 = arith.subf %66, %69 : vector<2x32x32xf32>
    %71 = math.exp %70 : vector<2x32x32xf32>
    %cst_35 = arith.constant dense<0.000000e+00> : vector<2x32xf32>
    %72 = vector.multi_reduction <add>, %71, %cst_35 [2] : vector<2x32x32xf32> to vector<2x32xf32>
    %73 = vector.shape_cast %72 : vector<2x32xf32> to vector<2x32x1xf32>
    %74 = vector.broadcast %73 : vector<2x32x1xf32> to vector<2x32x32xf32>
    %75 = arith.divf %71, %74 : vector<2x32x32xf32>
    "tpu.trace_start"() <{level = 10 : i32, message = "bqk,bkd->bqd"}> : () -> ()
    %cst_36 = arith.constant dense<0.000000e+00> : vector<2x32x16xf32>
    %76 = tpu.matmul %75, %60, %cst_36 {dimension_numbers = #tpu.dot_dimension_numbers<[2], [1], [1], [2], [0, 0, 0, 1, 1, 2], [0], [0]>} : vector<2x32x32xf32>, vector<2x32x16xf32>, vector<2x32x16xf32> -> vector<2x32x16xf32>
    "tpu.trace_stop"() : () -> ()
    %77 = vector.shape_cast %76 : vector<2x32x16xf32> to vector<64x16xf32>
    %78 = tpu.concatenate %54, %77 in 1 : vector<64x16xf32>, vector<64x16xf32> -> vector<64x32xf32>
    %cst_37 = arith.constant dense<0.000000e+00> : vector<64x32xf32>
    %79 = tpu.matmul %78, %26, %cst_37 {dimension_numbers = #tpu.dot_dimension_numbers<[1], [0], [0], [1], [0, 0, 1, 1], [], []>} : vector<64x32xf32>, vector<32x32xf32>, vector<64x32xf32> -> vector<64x32xf32>
    %80 = vector.broadcast %28 : vector<1x32xf32> to vector<64x32xf32>
    %81 = arith.addf %79, %80 : vector<64x32xf32>
    %82 = arith.addf %8, %81 : vector<64x32xf32>
    %c0_38 = arith.constant 0 : index
    %c0_39 = arith.constant 0 : index
    %83 = vector.load %arg19[%c0_38, %c0_39] : memref<64x32xf32, #tpu.memory_space<vmem>>, vector<64x32xf32>
    tpu.vector_store %arg19[%c0_38, %c0_39], %82 {strides = array<i32>} : memref<64x32xf32, #tpu.memory_space<vmem>>, vector<64x32xf32>,
    %84 = arith.extui %0 : i1 to i32
    %c0_i32_40 = arith.constant 0 : i32
    %85 = arith.cmpi ne, %84, %c0_i32_40 : i32
    scf.if %85 {
      %c0_69 = arith.constant 0 : index
      %c0_70 = arith.constant 0 : index
      %120 = vector.load %arg19[%c0_69, %c0_70] : memref<64x32xf32, #tpu.memory_space<vmem>>, vector<64x32xf32>
      %121 = arith.mulf %120, %120 : vector<64x32xf32>
      %cst_71 = arith.constant dense<0.000000e+00> : vector<64xf32>
      %122 = vector.multi_reduction <add>, %121, %cst_71 [1] : vector<64x32xf32> to vector<64xf32>
      %123 = vector.shape_cast %122 : vector<64xf32> to vector<64x1xf32>
      %cst_72 = arith.constant 3.200000e+01 : f32
      %124 = vector.broadcast %cst_72 : f32 to vector<64x1xf32>
      %125 = arith.divf %123, %124 : vector<64x1xf32>
      %cst_73 = arith.constant 9.99999997E-7 : f32
      %126 = vector.broadcast %cst_73 : f32 to vector<64x1xf32>
      %127 = arith.addf %125, %126 : vector<64x1xf32>
      %128 = math.rsqrt %127 : vector<64x1xf32>
      %129 = vector.broadcast %128 : vector<64x1xf32> to vector<64x32xf32>
      %130 = arith.mulf %120, %129 : vector<64x32xf32>
      %131 = vector.broadcast %5 : vector<1x32xf32> to vector<64x32xf32>
      %132 = arith.mulf %131, %130 : vector<64x32xf32>
      %c0_74 = arith.constant 0 : index
      %c0_75 = arith.constant 0 : index
      %c0_76 = arith.constant 0 : index
      %c0_77 = arith.constant 0 : index
      %133 = vector.load %arg9[%c0_74, %c0_75, %c0_76, %c0_77] : memref<1x1x32x96xf32, #tpu.memory_space<vmem>>, vector<1x1x32x96xf32>
      %134 = vector.shape_cast %133 : vector<1x1x32x96xf32> to vector<32x96xf32>
      %c0_78 = arith.constant 0 : index
      %c0_79 = arith.constant 0 : index
      %c0_80 = arith.constant 0 : index
      %c0_81 = arith.constant 0 : index
      %135 = vector.load %arg10[%c0_78, %c0_79, %c0_80, %c0_81] : memref<1x1x1x96xf32, #tpu.memory_space<vmem>>, vector<1x1x1x96xf32>
      %136 = vector.shape_cast %135 : vector<1x1x1x96xf32> to vector<1x96xf32>
      %c0_82 = arith.constant 0 : index
      %c0_83 = arith.constant 0 : index
      %c0_84 = arith.constant 0 : index
      %c0_85 = arith.constant 0 : index
      %137 = vector.load %arg11[%c0_82, %c0_83, %c0_84, %c0_85] : memref<1x1x32x32xf32, #tpu.memory_space<vmem>>, vector<1x1x32x32xf32>
      %138 = vector.shape_cast %137 : vector<1x1x32x32xf32> to vector<32x32xf32>
      %c0_86 = arith.constant 0 : index
      %c0_87 = arith.constant 0 : index
      %c0_88 = arith.constant 0 : index
      %c0_89 = arith.constant 0 : index
      %139 = vector.load %arg12[%c0_86, %c0_87, %c0_88, %c0_89] : memref<1x1x1x32xf32, #tpu.memory_space<vmem>>, vector<1x1x1x32xf32>
      %140 = vector.shape_cast %139 : vector<1x1x1x32xf32> to vector<1x32xf32>
      %cst_90 = arith.constant dense<0.000000e+00> : vector<64x96xf32>
      %141 = tpu.matmul %132, %134, %cst_90 {dimension_numbers = #tpu.dot_dimension_numbers<[1], [0], [0], [1], [0, 0, 1, 1], [], []>} : vector<64x32xf32>, vector<32x96xf32>, vector<64x96xf32> -> vector<64x96xf32>
      %142 = vector.broadcast %136 : vector<1x96xf32> to vector<64x96xf32>
      %143 = arith.addf %141, %142 : vector<64x96xf32>
      %144 = vector.extract_strided_slice %143 {offsets = [0, 0], sizes = [64, 16], strides = [1, 1]} : vector<64x96xf32> to vector<64x16xf32>
      %145 = vector.shape_cast %144 : vector<64x16xf32> to vector<2x32x16xf32>
      %146 = vector.extract_strided_slice %143 {offsets = [0, 32], sizes = [64, 16], strides = [1, 1]} : vector<64x96xf32> to vector<64x16xf32>
      %147 = vector.shape_cast %146 : vector<64x16xf32> to vector<2x32x16xf32>
      %148 = vector.extract_strided_slice %143 {offsets = [0, 64], sizes = [64, 16], strides = [1, 1]} : vector<64x96xf32> to vector<64x16xf32>
      %149 = vector.shape_cast %148 : vector<64x16xf32> to vector<2x32x16xf32>
      "tpu.trace_start"() <{level = 10 : i32, message = "bqd,bkd->bqk"}> : () -> ()
      %cst_91 = arith.constant dense<0.000000e+00> : vector<2x32x32xf32>
      %150 = tpu.matmul %145, %147, %cst_91 {dimension_numbers = #tpu.dot_dimension_numbers<[2], [2], [1], [1], [0, 0, 0, 1, 1, 1], [0], [0]>} : vector<2x32x16xf32>, vector<2x32x16xf32>, vector<2x32x32xf32> -> vector<2x32x32xf32>
      "tpu.trace_stop"() : () -> ()
      %cst_92 = arith.constant dense<0xFF800000> : vector<2x32xf32>
      %151 = vector.multi_reduction <maximumf>, %150, %cst_92 [2] : vector<2x32x32xf32> to vector<2x32xf32>
      %152 = vector.shape_cast %151 : vector<2x32xf32> to vector<2x32x1xf32>
      %153 = vector.broadcast %152 : vector<2x32x1xf32> to vector<2x32x32xf32>
      %154 = arith.subf %150, %153 : vector<2x32x32xf32>
      %155 = math.exp %154 : vector<2x32x32xf32>
      %cst_93 = arith.constant dense<0.000000e+00> : vector<2x32xf32>
      %156 = vector.multi_reduction <add>, %155, %cst_93 [2] : vector<2x32x32xf32> to vector<2x32xf32>
      %157 = vector.shape_cast %156 : vector<2x32xf32> to vector<2x32x1xf32>
      %158 = vector.broadcast %157 : vector<2x32x1xf32> to vector<2x32x32xf32>
      %159 = arith.divf %155, %158 : vector<2x32x32xf32>
      "tpu.trace_start"() <{level = 10 : i32, message = "bqk,bkd->bqd"}> : () -> ()
      %cst_94 = arith.constant dense<0.000000e+00> : vector<2x32x16xf32>
      %160 = tpu.matmul %159, %149, %cst_94 {dimension_numbers = #tpu.dot_dimension_numbers<[2], [1], [1], [2], [0, 0, 0, 1, 1, 2], [0], [0]>} : vector<2x32x32xf32>, vector<2x32x16xf32>, vector<2x32x16xf32> -> vector<2x32x16xf32>
      "tpu.trace_stop"() : () -> ()
      %161 = vector.shape_cast %160 : vector<2x32x16xf32> to vector<64x16xf32>
      %162 = vector.extract_strided_slice %143 {offsets = [0, 16], sizes = [64, 16], strides = [1, 1]} : vector<64x96xf32> to vector<64x16xf32>
      %163 = vector.shape_cast %162 : vector<64x16xf32> to vector<2x32x16xf32>
      %164 = vector.extract_strided_slice %143 {offsets = [0, 48], sizes = [64, 16], strides = [1, 1]} : vector<64x96xf32> to vector<64x16xf32>
      %165 = vector.shape_cast %164 : vector<64x16xf32> to vector<2x32x16xf32>
      %166 = vector.extract_strided_slice %143 {offsets = [0, 80], sizes = [64, 16], strides = [1, 1]} : vector<64x96xf32> to vector<64x16xf32>
      %167 = vector.shape_cast %166 : vector<64x16xf32> to vector<2x32x16xf32>
      "tpu.trace_start"() <{level = 10 : i32, message = "bqd,bkd->bqk"}> : () -> ()
      %cst_95 = arith.constant dense<0.000000e+00> : vector<2x32x32xf32>
      %168 = tpu.matmul %163, %165, %cst_95 {dimension_numbers = #tpu.dot_dimension_numbers<[2], [2], [1], [1], [0, 0, 0, 1, 1, 1], [0], [0]>} : vector<2x32x16xf32>, vector<2x32x16xf32>, vector<2x32x32xf32> -> vector<2x32x32xf32>
      "tpu.trace_stop"() : () -> ()
      %cst_96 = arith.constant dense<0xFF800000> : vector<2x32xf32>
      %169 = vector.multi_reduction <maximumf>, %168, %cst_96 [2] : vector<2x32x32xf32> to vector<2x32xf32>
      %170 = vector.shape_cast %169 : vector<2x32xf32> to vector<2x32x1xf32>
      %171 = vector.broadcast %170 : vector<2x32x1xf32> to vector<2x32x32xf32>
      %172 = arith.subf %168, %171 : vector<2x32x32xf32>
      %173 = math.exp %172 : vector<2x32x32xf32>
      %cst_97 = arith.constant dense<0.000000e+00> : vector<2x32xf32>
      %174 = vector.multi_reduction <add>, %173, %cst_97 [2] : vector<2x32x32xf32> to vector<2x32xf32>
      %175 = vector.shape_cast %174 : vector<2x32xf32> to vector<2x32x1xf32>
      %176 = vector.broadcast %175 : vector<2x32x1xf32> to vector<2x32x32xf32>
      %177 = arith.divf %173, %176 : vector<2x32x32xf32>
      "tpu.trace_start"() <{level = 10 : i32, message = "bqk,bkd->bqd"}> : () -> ()
      %cst_98 = arith.constant dense<0.000000e+00> : vector<2x32x16xf32>
      %178 = tpu.matmul %177, %167, %cst_98 {dimension_numbers = #tpu.dot_dimension_numbers<[2], [1], [1], [2], [0, 0, 0, 1, 1, 2], [0], [0]>} : vector<2x32x32xf32>, vector<2x32x16xf32>, vector<2x32x16xf32> -> vector<2x32x16xf32>
      "tpu.trace_stop"() : () -> ()
      %179 = vector.shape_cast %178 : vector<2x32x16xf32> to vector<64x16xf32>
      %180 = tpu.concatenate %161, %179 in 1 : vector<64x16xf32>, vector<64x16xf32> -> vector<64x32xf32>
      %cst_99 = arith.constant dense<0.000000e+00> : vector<64x32xf32>
      %181 = tpu.matmul %180, %138, %cst_99 {dimension_numbers = #tpu.dot_dimension_numbers<[1], [0], [0], [1], [0, 0, 1, 1], [], []>} : vector<64x32xf32>, vector<32x32xf32>, vector<64x32xf32> -> vector<64x32xf32>
      %182 = vector.broadcast %140 : vector<1x32xf32> to vector<64x32xf32>
      %183 = arith.addf %181, %182 : vector<64x32xf32>
      %184 = arith.addf %120, %183 : vector<64x32xf32>
      %c0_100 = arith.constant 0 : index
      %c0_101 = arith.constant 0 : index
      %185 = vector.load %arg19[%c0_100, %c0_101] : memref<64x32xf32, #tpu.memory_space<vmem>>, vector<64x32xf32>
      tpu.vector_store %arg19[%c0_100, %c0_101], %184 {strides = array<i32>} : memref<64x32xf32, #tpu.memory_space<vmem>>, vector<64x32xf32>,
    } else {
    }
    %c0_41 = arith.constant 0 : index
    %c0_42 = arith.constant 0 : index
    %86 = vector.load %arg19[%c0_41, %c0_42] : memref<64x32xf32, #tpu.memory_space<vmem>>, vector<64x32xf32>
    %87 = arith.mulf %86, %86 : vector<64x32xf32>
    %cst_43 = arith.constant dense<0.000000e+00> : vector<64xf32>
    %88 = vector.multi_reduction <add>, %87, %cst_43 [1] : vector<64x32xf32> to vector<64xf32>
    %89 = vector.shape_cast %88 : vector<64xf32> to vector<64x1xf32>
    %cst_44 = arith.constant 3.200000e+01 : f32
    %90 = vector.broadcast %cst_44 : f32 to vector<64x1xf32>
    %91 = arith.divf %89, %90 : vector<64x1xf32>
    %cst_45 = arith.constant 9.99999997E-7 : f32
    %92 = vector.broadcast %cst_45 : f32 to vector<64x1xf32>
    %93 = arith.addf %91, %92 : vector<64x1xf32>
    %94 = math.rsqrt %93 : vector<64x1xf32>
    %95 = vector.broadcast %94 : vector<64x1xf32> to vector<64x32xf32>
    %96 = arith.mulf %86, %95 : vector<64x32xf32>
    %97 = vector.broadcast %5 : vector<1x32xf32> to vector<64x32xf32>
    %98 = arith.mulf %97, %96 : vector<64x32xf32>
    %c0_46 = arith.constant 0 : index
    %c0_47 = arith.constant 0 : index
    %c0_48 = arith.constant 0 : index
    %c0_49 = arith.constant 0 : index
    %99 = vector.load %arg13[%c0_46, %c0_47, %c0_48, %c0_49] : memref<1x1x32x64xf32, #tpu.memory_space<vmem>>, vector<1x1x32x64xf32>
    %100 = vector.shape_cast %99 : vector<1x1x32x64xf32> to vector<32x64xf32>
    %cst_50 = arith.constant dense<0.000000e+00> : vector<64x64xf32>
    %101 = tpu.matmul %98, %100, %cst_50 {dimension_numbers = #tpu.dot_dimension_numbers<[1], [0], [0], [1], [0, 0, 1, 1], [], []>} : vector<64x32xf32>, vector<32x64xf32>, vector<64x64xf32> -> vector<64x64xf32>
    %c0_51 = arith.constant 0 : index
    %c0_52 = arith.constant 0 : index
    %c0_53 = arith.constant 0 : index
    %c0_54 = arith.constant 0 : index
    %102 = vector.load %arg14[%c0_51, %c0_52, %c0_53, %c0_54] : memref<1x1x1x64xf32, #tpu.memory_space<vmem>>, vector<1x1x1x64xf32>
    %103 = vector.shape_cast %102 : vector<1x1x1x64xf32> to vector<1x64xf32>
    %104 = vector.broadcast %103 : vector<1x64xf32> to vector<64x64xf32>
    %105 = arith.addf %101, %104 : vector<64x64xf32>
    %cst_55 = arith.constant 0.000000e+00 : f32
    %106 = vector.broadcast %cst_55 : f32 to vector<64x64xf32>
    %107 = arith.maximumf %105, %106 : vector<64x64xf32>
    %c0_56 = arith.constant 0 : index
    %c0_57 = arith.constant 0 : index
    %c0_58 = arith.constant 0 : index
    %c0_59 = arith.constant 0 : index
    %108 = vector.load %arg15[%c0_56, %c0_57, %c0_58, %c0_59] : memref<1x1x64x32xf32, #tpu.memory_space<vmem>>, vector<1x1x64x32xf32>
    %109 = vector.shape_cast %108 : vector<1x1x64x32xf32> to vector<64x32xf32>
    %cst_60 = arith.constant dense<0.000000e+00> : vector<64x32xf32>
    %110 = tpu.matmul %107, %109, %cst_60 {dimension_numbers = #tpu.dot_dimension_numbers<[1], [0], [0], [1], [0, 0, 1, 1], [], []>} : vector<64x64xf32>, vector<64x32xf32>, vector<64x32xf32> -> vector<64x32xf32>
    %c0_61 = arith.constant 0 : index
    %c0_62 = arith.constant 0 : index
    %c0_63 = arith.constant 0 : index
    %c0_64 = arith.constant 0 : index
    %111 = vector.load %arg16[%c0_61, %c0_62, %c0_63, %c0_64] : memref<1x1x1x32xf32, #tpu.memory_space<vmem>>, vector<1x1x1x32xf32>
    %112 = vector.shape_cast %111 : vector<1x1x1x32xf32> to vector<1x32xf32>
    %113 = vector.broadcast %112 : vector<1x32xf32> to vector<64x32xf32>
    %114 = arith.addf %110, %113 : vector<64x32xf32>
    %115 = arith.addf %86, %114 : vector<64x32xf32>
    %c0_65 = arith.constant 0 : index
    %c0_66 = arith.constant 0 : index
    %116 = vector.load %arg19[%c0_65, %c0_66] : memref<64x32xf32, #tpu.memory_space<vmem>>, vector<64x32xf32>
    tpu.vector_store %arg19[%c0_65, %c0_66], %115 {strides = array<i32>} : memref<64x32xf32, #tpu.memory_space<vmem>>, vector<64x32xf32>,
    %c1_i32_67 = arith.constant 1 : i32
    %117 = arith.cmpi eq, %arg1, %c1_i32_67 : i32
    %118 = arith.extui %117 : i1 to i32
    %c0_i32_68 = arith.constant 0 : i32
    %119 = arith.cmpi ne, %118, %c0_i32_68 : i32
    scf.if %119 {
      %c0_69 = arith.constant 0 : index
      %c0_70 = arith.constant 0 : index
      %120 = vector.load %arg19[%c0_69, %c0_70] : memref<64x32xf32, #tpu.memory_space<vmem>>, vector<64x32xf32>
      %c0_71 = arith.constant 0 : index
      %c0_72 = arith.constant 0 : index
      %c0_73 = arith.constant 0 : index
      %121 = vector.load %arg17[%c0_71, %c0_72, %c0_73] : memref<1x1x32xf32, #tpu.memory_space<vmem>>, vector<1x1x32xf32>
      %122 = vector.shape_cast %121 : vector<1x1x32xf32> to vector<1x32xf32>
      %123 = arith.mulf %120, %120 : vector<64x32xf32>
      %cst_74 = arith.constant dense<0.000000e+00> : vector<64xf32>
      %124 = vector.multi_reduction <add>, %123, %cst_74 [1] : vector<64x32xf32> to vector<64xf32>
      %125 = vector.shape_cast %124 : vector<64xf32> to vector<64x1xf32>
      %cst_75 = arith.constant 3.200000e+01 : f32
      %126 = vector.broadcast %cst_75 : f32 to vector<64x1xf32>
      %127 = arith.divf %125, %126 : vector<64x1xf32>
      %cst_76 = arith.constant 9.99999997E-7 : f32
      %128 = vector.broadcast %cst_76 : f32 to vector<64x1xf32>
      %129 = arith.addf %127, %128 : vector<64x1xf32>
      %130 = math.rsqrt %129 : vector<64x1xf32>
      %131 = vector.broadcast %130 : vector<64x1xf32> to vector<64x32xf32>
      %132 = arith.mulf %120, %131 : vector<64x32xf32>
      %133 = vector.broadcast %122 : vector<1x32xf32> to vector<64x32xf32>
      %134 = arith.mulf %133, %132 : vector<64x32xf32>
      %c0_77 = arith.constant 0 : index
      %c0_78 = arith.constant 0 : index
      %c0_79 = arith.constant 0 : index
      %135 = vector.load %arg18[%c0_77, %c0_78, %c0_79] : memref<1x64x32xf32, #tpu.memory_space<vmem>>, vector<1x64x32xf32>
      %136 = vector.shape_cast %135 : vector<1x64x32xf32> to vector<64x32xf32>
      %137 = vector.shape_cast %134 : vector<64x32xf32> to vector<1x64x32xf32>
      tpu.vector_store %arg18[%c0_77, %c0_78, %c0_79], %137 {strides = array<i32>} : memref<1x64x32xf32, #tpu.memory_space<vmem>>, vector<1x64x32xf32>,
    } else {
    }
    return
  }
  func.func @transform_0(%arg0: i32, %arg1: i32) -> (i32, i32, i32) {
    %c0_i32 = arith.constant 0 : i32
    %c0_i32_0 = arith.constant 0 : i32
    %c0_i32_1 = arith.constant 0 : i32
    return %arg0, %c0_i32, %c0_i32_0 : i32, i32, i32
  }
  func.func @transform_1(%arg0: i32, %arg1: i32) -> (i32, i32, i32, i32) {
    %c0_i32 = arith.constant 0 : i32
    %c0_i32_0 = arith.constant 0 : i32
    %c0_i32_1 = arith.constant 0 : i32
    %c0_i32_2 = arith.constant 0 : i32
    return %arg0, %c0_i32, %c0_i32_0, %c0_i32_1 : i32, i32, i32, i32
  }
  func.func @transform_2(%arg0: i32, %arg1: i32) -> (i32, i32, i32, i32) {
    %c0_i32 = arith.constant 0 : i32
    %c0_i32_0 = arith.constant 0 : i32
    %c0_i32_1 = arith.constant 0 : i32
    return %arg0, %arg1, %c0_i32, %c0_i32_0 : i32, i32, i32, i32
  }
  func.func @transform_3(%arg0: i32, %arg1: i32) -> (i32, i32, i32, i32) {
    %c0_i32 = arith.constant 0 : i32
    %c0_i32_0 = arith.constant 0 : i32
    %c0_i32_1 = arith.constant 0 : i32
    return %arg0, %arg1, %c0_i32, %c0_i32_0 : i32, i32, i32, i32
  }
  func.func @transform_4(%arg0: i32, %arg1: i32) -> (i32, i32, i32, i32) {
    %c0_i32 = arith.constant 0 : i32
    %c0_i32_0 = arith.constant 0 : i32
    %c0_i32_1 = arith.constant 0 : i32
    return %arg0, %arg1, %c0_i32, %c0_i32_0 : i32, i32, i32, i32
  }
  func.func @transform_5(%arg0: i32, %arg1: i32) -> (i32, i32, i32, i32) {
    %c0_i32 = arith.constant 0 : i32
    %c0_i32_0 = arith.constant 0 : i32
    %c0_i32_1 = arith.constant 0 : i32
    return %arg0, %arg1, %c0_i32, %c0_i32_0 : i32, i32, i32, i32
  }
  func.func @transform_6(%arg0: i32, %arg1: i32) -> (i32, i32, i32, i32) {
    %c0_i32 = arith.constant 0 : i32
    %c0_i32_0 = arith.constant 0 : i32
    %c0_i32_1 = arith.constant 0 : i32
    return %arg0, %arg1, %c0_i32, %c0_i32_0 : i32, i32, i32, i32
  }
  func.func @transform_7(%arg0: i32, %arg1: i32) -> (i32, i32, i32, i32) {
    %c0_i32 = arith.constant 0 : i32
    %c0_i32_0 = arith.constant 0 : i32
    %c0_i32_1 = arith.constant 0 : i32
    return %arg0, %arg1, %c0_i32, %c0_i32_0 : i32, i32, i32, i32
  }
  func.func @transform_8(%arg0: i32, %arg1: i32) -> (i32, i32, i32, i32) {
    %c0_i32 = arith.constant 0 : i32
    %c0_i32_0 = arith.constant 0 : i32
    %c0_i32_1 = arith.constant 0 : i32
    return %arg0, %arg1, %c0_i32, %c0_i32_0 : i32, i32, i32, i32
  }
  func.func @transform_9(%arg0: i32, %arg1: i32) -> (i32, i32, i32, i32) {
    %c0_i32 = arith.constant 0 : i32
    %c0_i32_0 = arith.constant 0 : i32
    %c0_i32_1 = arith.constant 0 : i32
    return %arg0, %arg1, %c0_i32, %c0_i32_0 : i32, i32, i32, i32
  }
  func.func @transform_10(%arg0: i32, %arg1: i32) -> (i32, i32, i32, i32) {
    %c0_i32 = arith.constant 0 : i32
    %c0_i32_0 = arith.constant 0 : i32
    %c0_i32_1 = arith.constant 0 : i32
    return %arg0, %arg1, %c0_i32, %c0_i32_0 : i32, i32, i32, i32
  }
  func.func @transform_11(%arg0: i32, %arg1: i32) -> (i32, i32, i32, i32) {
    %c0_i32 = arith.constant 0 : i32
    %c0_i32_0 = arith.constant 0 : i32
    %c0_i32_1 = arith.constant 0 : i32
    return %arg0, %arg1, %c0_i32, %c0_i32_0 : i32, i32, i32, i32
  }
  func.func @transform_12(%arg0: i32, %arg1: i32) -> (i32, i32, i32, i32) {
    %c0_i32 = arith.constant 0 : i32
    %c0_i32_0 = arith.constant 0 : i32
    %c0_i32_1 = arith.constant 0 : i32
    return %arg0, %arg1, %c0_i32, %c0_i32_0 : i32, i32, i32, i32
  }
  func.func @transform_13(%arg0: i32, %arg1: i32) -> (i32, i32, i32, i32) {
    %c0_i32 = arith.constant 0 : i32
    %c0_i32_0 = arith.constant 0 : i32
    %c0_i32_1 = arith.constant 0 : i32
    return %arg0, %arg1, %c0_i32, %c0_i32_0 : i32, i32, i32, i32
  }
  func.func @transform_14(%arg0: i32, %arg1: i32) -> (i32, i32, i32, i32) {
    %c0_i32 = arith.constant 0 : i32
    %c0_i32_0 = arith.constant 0 : i32
    %c0_i32_1 = arith.constant 0 : i32
    return %arg0, %arg1, %c0_i32, %c0_i32_0 : i32, i32, i32, i32
  }
  func.func @transform_15(%arg0: i32, %arg1: i32) -> (i32, i32, i32) {
    %c0_i32 = arith.constant 0 : i32
    %c0_i32_0 = arith.constant 0 : i32
    %c0_i32_1 = arith.constant 0 : i32
    return %arg0, %c0_i32, %c0_i32_0 : i32, i32, i32
  }
  func.func @transform_16(%arg0: i32, %arg1: i32) -> (i32, i32, i32) {
    %c0_i32 = arith.constant 0 : i32
    %c0_i32_0 = arith.constant 0 : i32
    %c0_i32_1 = arith.constant 0 : i32
    return %arg0, %c0_i32, %c0_i32_0 : i32, i32, i32
  }
}

</mosaic_0001>

<llo_original>
// kernel: t5_forward.1
$region0: #{t5_forward.1}
  #allocation0 [shape = 'u32[]', space=smem, size = 0x4, offset = 0x4, fixed_abs, tag = 'smem constant byte address 0x4 - core index']
  #allocation1 [shape = 'u32[144,128]{1,0:T(1,128)}', space=vmem, size = 0x12000, scoped, tag = 'internal scratch']
  #allocation2 [shape = 'f32[64,32]{1,0:T(8,128)}', space=vmem, size = 0x8000, scoped, tag = 'scratch operand']
  %s0 = inlined_call_operand.vmem [shape: f32[2,64,32], index: 0, kind: input, shape index: {}]
  %s1 = inlined_call_operand.vmem [shape: f32[2,2,32,32], index: 1, kind: input, shape index: {}]
  %s2 = inlined_call_operand.vmem [shape: f32[2,2,1,32], index: 2, kind: input, shape index: {}]
  %s3 = inlined_call_operand.vmem [shape: f32[2,2,32,96], index: 3, kind: input, shape index: {}]
  %s4 = inlined_call_operand.vmem [shape: f32[2,2,1,96], index: 4, kind: input, shape index: {}]
  %s5 = inlined_call_operand.vmem [shape: f32[2,2,32,32], index: 5, kind: input, shape index: {}]
  %s6 = inlined_call_operand.vmem [shape: f32[2,2,1,32], index: 6, kind: input, shape index: {}]
  %s7 = inlined_call_operand.vmem [shape: f32[2,2,32,96], index: 7, kind: input, shape index: {}]
  %s8 = inlined_call_operand.vmem [shape: f32[2,2,1,96], index: 8, kind: input, shape index: {}]
  %s9 = inlined_call_operand.vmem [shape: f32[2,2,32,32], index: 9, kind: input, shape index: {}]
  %s10 = inlined_call_operand.vmem [shape: f32[2,2,1,32], index: 10, kind: input, shape index: {}]
  %s11 = inlined_call_operand.vmem [shape: f32[2,2,32,64], index: 11, kind: input, shape index: {}]
  %s12 = inlined_call_operand.vmem [shape: f32[2,2,1,64], index: 12, kind: input, shape index: {}]
  %s13 = inlined_call_operand.vmem [shape: f32[2,2,64,32], index: 13, kind: input, shape index: {}]
  %s14 = inlined_call_operand.vmem [shape: f32[2,2,1,32], index: 14, kind: input, shape index: {}]
  %s15 = inlined_call_operand.vmem [shape: f32[2,1,32], index: 15, kind: input, shape index: {}]
  %s16 = inlined_call_operand.vmem [shape: f32[2,64,32], index: 16, kind: output, shape index: {}]
  %s17 = sld [smem:[#allocation0]]
  $region109: #{t5_forward.1} parent=0
    _
  %s19 = ssub.s32 1, %s17
  %s20 = scalar_select 0, %s19, %s17
  loop: start=0, step=1, limit=6
  $region2: #{t5_forward.1} parent=0 // loop_pre_header
    _
  $region3: #{t5_forward.1} parent=0 // loop_header
    %s22 = sphi 0, %s26
    %p23 = scmp.ge.s32.totalorder %s22, 6
    %s29 = sphi 0, %s41
    %s30 = sphi 0, %s37
    %s31 = sphi 0, %s29
    %s32 = sphi 0, %s30
    %s33 = sphi 0, %s31
    %s34 = sphi 0, %s32
    %s44 = sphi 0, %s46
    %s47 = sphi 0, %s44
    %s48 = sphi 0, %s47
    %s64 = sphi 0, %s48
    %s70 = sphi 0, %s72
    %s73 = sphi 0, %s70
    %s74 = sphi 0, %s73
    %s90 = sphi 0, %s74
    %s98 = sphi 0, %s100
    %s101 = sphi 0, %s98
    %s102 = sphi 0, %s101
    %s118 = sphi 0, %s102
    %s126 = sphi 0, %s128
    %s129 = sphi 0, %s126
    %s130 = sphi 0, %s129
    %s146 = sphi 0, %s130
    %s154 = sphi 0, %s156
    %s157 = sphi 0, %s154
    %s158 = sphi 0, %s157
    %s174 = sphi 0, %s158
    %s182 = sphi 0, %s184
    %s185 = sphi 0, %s182
    %s186 = sphi 0, %s185
    %s202 = sphi 0, %s186
    %s210 = sphi 0, %s212
    %s213 = sphi 0, %s210
    %s214 = sphi 0, %s213
    %s230 = sphi 0, %s214
    %s238 = sphi 0, %s240
    %s241 = sphi 0, %s238
    %s242 = sphi 0, %s241
    %s258 = sphi 0, %s242
    %s266 = sphi 0, %s268
    %s269 = sphi 0, %s266
    %s270 = sphi 0, %s269
    %s286 = sphi 0, %s270
    %s294 = sphi 0, %s296
    %s297 = sphi 0, %s294
    %s298 = sphi 0, %s297
    %s314 = sphi 0, %s298
    %s322 = sphi 0, %s324
    %s325 = sphi 0, %s322
    %s326 = sphi 0, %s325
    %s342 = sphi 0, %s326
    %s350 = sphi 0, %s352
    %s353 = sphi 0, %s350
    %s354 = sphi 0, %s353
    %s370 = sphi 0, %s354
    %s378 = sphi 0, %s380
    %s381 = sphi 0, %s378
    %s382 = sphi 0, %s381
    %s398 = sphi 0, %s382
    %s406 = sphi 0, %s408
    %s409 = sphi 0, %s406
    %s410 = sphi 0, %s409
    %s426 = sphi 0, %s410
    %s434 = sphi 0, %s436
    %s437 = sphi 0, %s434
    %s438 = sphi 0, %s437
    %s454 = sphi 0, %s438
    %s460 = sphi 0, %s462
    %s463 = sphi 0, %s460
    %s464 = sphi 0, %s463
    %s480 = sphi 0, %s464
    %s486 = sphi 0, %s488
    %s489 = sphi 0, %s486
    %s490 = sphi 0, %s489
    %s506 = sphi 0, %s490
  $region4: #{t5_forward.1} parent=0 // loop_header_branch
    %25 = sbr.rel (%p23) target = $region8
  $region5: #{t5_forward.1} parent=0 // loop_body
    %s27 = ssub.s32 %s22, 1
    %s28 = ssub.s32 %s22, 2
    %s35 = sadd.s32 1, %s30
    %p36 = scmp.ge.s32.totalorder %s35, 2
    %s37 = scalar_select %p36, 0, %s35
    %s38 = sadd.s32 1, %s29
    %s39 = scalar_select %p36, %s38, %s29
    %p40 = scmp.ge.s32.totalorder %s39, 2
    %s41 = scalar_select %p40, 0, %s39
    %s42 = ssub.s32 %s29, %s41
    %p43 = scmp.eq.s32.totalorder %s42, 0
    %s45 = sadd.s32 %s44, 1
    %s46 = scalar_select %p43, %s44, %s45
    %p49 = pneg %p43
    %p50 = scmp.eq.s32.totalorder %s22, 3
    %p51 = por %p49, %p50
    %p52 = scmp.ne.s32.totalorder %s44, %s47
    %p53 = scmp.eq.s32.totalorder %s22, 0
    %p54 = por %p52, %p53
    %p55 = scmp.ne.s32.totalorder %s44, %s47
    %p56 = scmp.eq.s32.totalorder %s27, 3
    %p57 = por %p55, %p56
    %p58 = scmp.ne.s32.totalorder %s47, %s48
    %p59 = scmp.eq.s32.totalorder %s27, 0
    %p60 = por %p58, %p59
    %p61 = scmp.ne.s32.totalorder %s47, %s48
    %p62 = scmp.eq.s32.totalorder %s28, 3
    %p63 = por %p61, %p62
    %p65 = scmp.ne.s32.totalorder %s48, %s64
    %p66 = scmp.eq.s32.totalorder %s28, 0
    %p67 = por %p65, %p66
    %s68 = ssub.s32 %s29, %s41
    %p69 = scmp.eq.s32.totalorder %s68, 0
    %s71 = sadd.s32 %s70, 1
    %s72 = scalar_select %p69, %s70, %s71
    %p75 = pneg %p69
    %p76 = scmp.eq.s32.totalorder %s22, 3
    %p77 = por %p75, %p76
    %p78 = scmp.ne.s32.totalorder %s70, %s73
    %p79 = scmp.eq.s32.totalorder %s22, 0
    %p80 = por %p78, %p79
    %p81 = scmp.ne.s32.totalorder %s70, %s73
    %p82 = scmp.eq.s32.totalorder %s27, 3
    %p83 = por %p81, %p82
    %p84 = scmp.ne.s32.totalorder %s73, %s74
    %p85 = scmp.eq.s32.totalorder %s27, 0
    %p86 = por %p84, %p85
    %p87 = scmp.ne.s32.totalorder %s73, %s74
    %p88 = scmp.eq.s32.totalorder %s28, 3
    %p89 = por %p87, %p88
    %p91 = scmp.ne.s32.totalorder %s74, %s90
    %p92 = scmp.eq.s32.totalorder %s28, 0
    %p93 = por %p91, %p92
    %s94 = ssub.s32 %s29, %s41
    %s95 = ssub.s32 %s30, %s37
    %s96 = sor.u32 %s94, %s95
    %p97 = scmp.eq.s32.totalorder %s96, 0
    %s99 = sadd.s32 %s98, 1
    %s100 = scalar_select %p97, %s98, %s99
    %p103 = pneg %p97
    %p104 = scmp.eq.s32.totalorder %s22, 3
    %p105 = por %p103, %p104
    %p106 = scmp.ne.s32.totalorder %s98, %s101
    %p107 = scmp.eq.s32.totalorder %s22, 0
    %p108 = por %p106, %p107
    %p109 = scmp.ne.s32.totalorder %s98, %s101
    %p110 = scmp.eq.s32.totalorder %s27, 3
    %p111 = por %p109, %p110
    %p112 = scmp.ne.s32.totalorder %s101, %s102
    %p113 = scmp.eq.s32.totalorder %s27, 0
    %p114 = por %p112, %p113
    %p115 = scmp.ne.s32.totalorder %s101, %s102
    %p116 = scmp.eq.s32.totalorder %s28, 3
    %p117 = por %p115, %p116
    %p119 = scmp.ne.s32.totalorder %s102, %s118
    %p120 = scmp.eq.s32.totalorder %s28, 0
    %p121 = por %p119, %p120
    %s122 = ssub.s32 %s29, %s41
    %s123 = ssub.s32 %s30, %s37
    %s124 = sor.u32 %s122, %s123
    %p125 = scmp.eq.s32.totalorder %s124, 0
    %s127 = sadd.s32 %s126, 1
    %s128 = scalar_select %p125, %s126, %s127
    %p131 = pneg %p125
    %p132 = scmp.eq.s32.totalorder %s22, 3
    %p133 = por %p131, %p132
    %p134 = scmp.ne.s32.totalorder %s126, %s129
    %p135 = scmp.eq.s32.totalorder %s22, 0
    %p136 = por %p134, %p135
    %p137 = scmp.ne.s32.totalorder %s126, %s129
    %p138 = scmp.eq.s32.totalorder %s27, 3
    %p139 = por %p137, %p138
    %p140 = scmp.ne.s32.totalorder %s129, %s130
    %p141 = scmp.eq.s32.totalorder %s27, 0
    %p142 = por %p140, %p141
    %p143 = scmp.ne.s32.totalorder %s129, %s130
    %p144 = scmp.eq.s32.totalorder %s28, 3
    %p145 = por %p143, %p144
    %p147 = scmp.ne.s32.totalorder %s130, %s146
    %p148 = scmp.eq.s32.totalorder %s28, 0
    %p149 = por %p147, %p148
    %s150 = ssub.s32 %s29, %s41
    %s151 = ssub.s32 %s30, %s37
    %s152 = sor.u32 %s150, %s151
    %p153 = scmp.eq.s32.totalorder %s152, 0
    %s155 = sadd.s32 %s154, 1
    %s156 = scalar_select %p153, %s154, %s155
    %p159 = pneg %p153
    %p160 = scmp.eq.s32.totalorder %s22, 3
    %p161 = por %p159, %p160
    %p162 = scmp.ne.s32.totalorder %s154, %s157
    %p163 = scmp.eq.s32.totalorder %s22, 0
    %p164 = por %p162, %p163
    %p165 = scmp.ne.s32.totalorder %s154, %s157
    %p166 = scmp.eq.s32.totalorder %s27, 3
    %p167 = por %p165, %p166
    %p168 = scmp.ne.s32.totalorder %s157, %s158
    %p169 = scmp.eq.s32.totalorder %s27, 0
    %p170 = por %p168, %p169
    %p171 = scmp.ne.s32.totalorder %s157, %s158
    %p172 = scmp.eq.s32.totalorder %s28, 3
    %p173 = por %p171, %p172
    %p175 = scmp.ne.s32.totalorder %s158, %s174
    %p176 = scmp.eq.s32.totalorder %s28, 0
    %p177 = por %p175, %p176
    %s178 = ssub.s32 %s29, %s41
    %s179 = ssub.s32 %s30, %s37
    %s180 = sor.u32 %s178, %s179
    %p181 = scmp.eq.s32.totalorder %s180, 0
    %s183 = sadd.s32 %s182, 1
    %s184 = scalar_select %p181, %s182, %s183
    %p187 = pneg %p181
    %p188 = scmp.eq.s32.totalorder %s22, 3
    %p189 = por %p187, %p188
    %p190 = scmp.ne.s32.totalorder %s182, %s185
    %p191 = scmp.eq.s32.totalorder %s22, 0
    %p192 = por %p190, %p191
    %p193 = scmp.ne.s32.totalorder %s182, %s185
    %p194 = scmp.eq.s32.totalorder %s27, 3
    %p195 = por %p193, %p194
    %p196 = scmp.ne.s32.totalorder %s185, %s186
    %p197 = scmp.eq.s32.totalorder %s27, 0
    %p198 = por %p196, %p197
    %p199 = scmp.ne.s32.totalorder %s185, %s186
    %p200 = scmp.eq.s32.totalorder %s28, 3
    %p201 = por %p199, %p200
    %p203 = scmp.ne.s32.totalorder %s186, %s202
    %p204 = scmp.eq.s32.totalorder %s28, 0
    %p205 = por %p203, %p204
    %s206 = ssub.s32 %s29, %s41
    %s207 = ssub.s32 %s30, %s37
    %s208 = sor.u32 %s206, %s207
    %p209 = scmp.eq.s32.totalorder %s208, 0
    %s211 = sadd.s32 %s210, 1
    %s212 = scalar_select %p209, %s210, %s211
    %p215 = pneg %p209
    %p216 = scmp.eq.s32.totalorder %s22, 3
    %p217 = por %p215, %p216
    %p218 = scmp.ne.s32.totalorder %s210, %s213
    %p219 = scmp.eq.s32.totalorder %s22, 0
    %p220 = por %p218, %p219
    %p221 = scmp.ne.s32.totalorder %s210, %s213
    %p222 = scmp.eq.s32.totalorder %s27, 3
    %p223 = por %p221, %p222
    %p224 = scmp.ne.s32.totalorder %s213, %s214
    %p225 = scmp.eq.s32.totalorder %s27, 0
    %p226 = por %p224, %p225
    %p227 = scmp.ne.s32.totalorder %s213, %s214
    %p228 = scmp.eq.s32.totalorder %s28, 3
    %p229 = por %p227, %p228
    %p231 = scmp.ne.s32.totalorder %s214, %s230
    %p232 = scmp.eq.s32.totalorder %s28, 0
    %p233 = por %p231, %p232
    %s234 = ssub.s32 %s29, %s41
    %s235 = ssub.s32 %s30, %s37
    %s236 = sor.u32 %s234, %s235
    %p237 = scmp.eq.s32.totalorder %s236, 0
    %s239 = sadd.s32 %s238, 1
    %s240 = scalar_select %p237, %s238, %s239
    %p243 = pneg %p237
    %p244 = scmp.eq.s32.totalorder %s22, 3
    %p245 = por %p243, %p244
    %p246 = scmp.ne.s32.totalorder %s238, %s241
    %p247 = scmp.eq.s32.totalorder %s22, 0
    %p248 = por %p246, %p247
    %p249 = scmp.ne.s32.totalorder %s238, %s241
    %p250 = scmp.eq.s32.totalorder %s27, 3
    %p251 = por %p249, %p250
    %p252 = scmp.ne.s32.totalorder %s241, %s242
    %p253 = scmp.eq.s32.totalorder %s27, 0
    %p254 = por %p252, %p253
    %p255 = scmp.ne.s32.totalorder %s241, %s242
    %p256 = scmp.eq.s32.totalorder %s28, 3
    %p257 = por %p255, %p256
    %p259 = scmp.ne.s32.totalorder %s242, %s258
    %p260 = scmp.eq.s32.totalorder %s28, 0
    %p261 = por %p259, %p260
    %s262 = ssub.s32 %s29, %s41
    %s263 = ssub.s32 %s30, %s37
    %s264 = sor.u32 %s262, %s263
    %p265 = scmp.eq.s32.totalorder %s264, 0
    %s267 = sadd.s32 %s266, 1
    %s268 = scalar_select %p265, %s266, %s267
    %p271 = pneg %p265
    %p272 = scmp.eq.s32.totalorder %s22, 3
    %p273 = por %p271, %p272
    %p274 = scmp.ne.s32.totalorder %s266, %s269
    %p275 = scmp.eq.s32.totalorder %s22, 0
    %p276 = por %p274, %p275
    %p277 = scmp.ne.s32.totalorder %s266, %s269
    %p278 = scmp.eq.s32.totalorder %s27, 3
    %p279 = por %p277, %p278
    %p280 = scmp.ne.s32.totalorder %s269, %s270
    %p281 = scmp.eq.s32.totalorder %s27, 0
    %p282 = por %p280, %p281
    %p283 = scmp.ne.s32.totalorder %s269, %s270
    %p284 = scmp.eq.s32.totalorder %s28, 3
    %p285 = por %p283, %p284
    %p287 = scmp.ne.s32.totalorder %s270, %s286
    %p288 = scmp.eq.s32.totalorder %s28, 0
    %p289 = por %p287, %p288
    %s290 = ssub.s32 %s29, %s41
    %s291 = ssub.s32 %s30, %s37
    %s292 = sor.u32 %s290, %s291
    %p293 = scmp.eq.s32.totalorder %s292, 0
    %s295 = sadd.s32 %s294, 1
    %s296 = scalar_select %p293, %s294, %s295
    %p299 = pneg %p293
    %p300 = scmp.eq.s32.totalorder %s22, 3
    %p301 = por %p299, %p300
    %p302 = scmp.ne.s32.totalorder %s294, %s297
    %p303 = scmp.eq.s32.totalorder %s22, 0
    %p304 = por %p302, %p303
    %p305 = scmp.ne.s32.totalorder %s294, %s297
    %p306 = scmp.eq.s32.totalorder %s27, 3
    %p307 = por %p305, %p306
    %p308 = scmp.ne.s32.totalorder %s297, %s298
    %p309 = scmp.eq.s32.totalorder %s27, 0
    %p310 = por %p308, %p309
    %p311 = scmp.ne.s32.totalorder %s297, %s298
    %p312 = scmp.eq.s32.totalorder %s28, 3
    %p313 = por %p311, %p312
    %p315 = scmp.ne.s32.totalorder %s298, %s314
    %p316 = scmp.eq.s32.totalorder %s28, 0
    %p317 = por %p315, %p316
    %s318 = ssub.s32 %s29, %s41
    %s319 = ssub.s32 %s30, %s37
    %s320 = sor.u32 %s318, %s319
    %p321 = scmp.eq.s32.totalorder %s320, 0
    %s323 = sadd.s32 %s322, 1
    %s324 = scalar_select %p321, %s322, %s323
    %p327 = pneg %p321
    %p328 = scmp.eq.s32.totalorder %s22, 3
    %p329 = por %p327, %p328
    %p330 = scmp.ne.s32.totalorder %s322, %s325
    %p331 = scmp.eq.s32.totalorder %s22, 0
    %p332 = por %p330, %p331
    %p333 = scmp.ne.s32.totalorder %s322, %s325
    %p334 = scmp.eq.s32.totalorder %s27, 3
    %p335 = por %p333, %p334
    %p336 = scmp.ne.s32.totalorder %s325, %s326
    %p337 = scmp.eq.s32.totalorder %s27, 0
    %p338 = por %p336, %p337
    %p339 = scmp.ne.s32.totalorder %s325, %s326
    %p340 = scmp.eq.s32.totalorder %s28, 3
    %p341 = por %p339, %p340
    %p343 = scmp.ne.s32.totalorder %s326, %s342
    %p344 = scmp.eq.s32.totalorder %s28, 0
    %p345 = por %p343, %p344
    %s346 = ssub.s32 %s29, %s41
    %s347 = ssub.s32 %s30, %s37
    %s348 = sor.u32 %s346, %s347
    %p349 = scmp.eq.s32.totalorder %s348, 0
    %s351 = sadd.s32 %s350, 1
    %s352 = scalar_select %p349, %s350, %s351
    %p355 = pneg %p349
    %p356 = scmp.eq.s32.totalorder %s22, 3
    %p357 = por %p355, %p356
    %p358 = scmp.ne.s32.totalorder %s350, %s353
    %p359 = scmp.eq.s32.totalorder %s22, 0
    %p360 = por %p358, %p359
    %p361 = scmp.ne.s32.totalorder %s350, %s353
    %p362 = scmp.eq.s32.totalorder %s27, 3
    %p363 = por %p361, %p362
    %p364 = scmp.ne.s32.totalorder %s353, %s354
    %p365 = scmp.eq.s32.totalorder %s27, 0
    %p366 = por %p364, %p365
    %p367 = scmp.ne.s32.totalorder %s353, %s354
    %p368 = scmp.eq.s32.totalorder %s28, 3
    %p369 = por %p367, %p368
    %p371 = scmp.ne.s32.totalorder %s354, %s370
    %p372 = scmp.eq.s32.totalorder %s28, 0
    %p373 = por %p371, %p372
    %s374 = ssub.s32 %s29, %s41
    %s375 = ssub.s32 %s30, %s37
    %s376 = sor.u32 %s374, %s375
    %p377 = scmp.eq.s32.totalorder %s376, 0
    %s379 = sadd.s32 %s378, 1
    %s380 = scalar_select %p377, %s378, %s379
    %p383 = pneg %p377
    %p384 = scmp.eq.s32.totalorder %s22, 3
    %p385 = por %p383, %p384
    %p386 = scmp.ne.s32.totalorder %s378, %s381
    %p387 = scmp.eq.s32.totalorder %s22, 0
    %p388 = por %p386, %p387
    %p389 = scmp.ne.s32.totalorder %s378, %s381
    %p390 = scmp.eq.s32.totalorder %s27, 3
    %p391 = por %p389, %p390
    %p392 = scmp.ne.s32.totalorder %s381, %s382
    %p393 = scmp.eq.s32.totalorder %s27, 0
    %p394 = por %p392, %p393
    %p395 = scmp.ne.s32.totalorder %s381, %s382
    %p396 = scmp.eq.s32.totalorder %s28, 3
    %p397 = por %p395, %p396
    %p399 = scmp.ne.s32.totalorder %s382, %s398
    %p400 = scmp.eq.s32.totalorder %s28, 0
    %p401 = por %p399, %p400
    %s402 = ssub.s32 %s29, %s41
    %s403 = ssub.s32 %s30, %s37
    %s404 = sor.u32 %s402, %s403
    %p405 = scmp.eq.s32.totalorder %s404, 0
    %s407 = sadd.s32 %s406, 1
    %s408 = scalar_select %p405, %s406, %s407
    %p411 = pneg %p405
    %p412 = scmp.eq.s32.totalorder %s22, 3
    %p413 = por %p411, %p412
    %p414 = scmp.ne.s32.totalorder %s406, %s409
    %p415 = scmp.eq.s32.totalorder %s22, 0
    %p416 = por %p414, %p415
    %p417 = scmp.ne.s32.totalorder %s406, %s409
    %p418 = scmp.eq.s32.totalorder %s27, 3
    %p419 = por %p417, %p418
    %p420 = scmp.ne.s32.totalorder %s409, %s410
    %p421 = scmp.eq.s32.totalorder %s27, 0
    %p422 = por %p420, %p421
    %p423 = scmp.ne.s32.totalorder %s409, %s410
    %p424 = scmp.eq.s32.totalorder %s28, 3
    %p425 = por %p423, %p424
    %p427 = scmp.ne.s32.totalorder %s410, %s426
    %p428 = scmp.eq.s32.totalorder %s28, 0
    %p429 = por %p427, %p428
    %s430 = ssub.s32 %s29, %s41
    %s431 = ssub.s32 %s30, %s37
    %s432 = sor.u32 %s430, %s431
    %p433 = scmp.eq.s32.totalorder %s432, 0
    %s435 = sadd.s32 %s434, 1
    %s436 = scalar_select %p433, %s434, %s435
    %p439 = pneg %p433
    %p440 = scmp.eq.s32.totalorder %s22, 3
    %p441 = por %p439, %p440
    %p442 = scmp.ne.s32.totalorder %s434, %s437
    %p443 = scmp.eq.s32.totalorder %s22, 0
    %p444 = por %p442, %p443
    %p445 = scmp.ne.s32.totalorder %s434, %s437
    %p446 = scmp.eq.s32.totalorder %s27, 3
    %p447 = por %p445, %p446
    %p448 = scmp.ne.s32.totalorder %s437, %s438
    %p449 = scmp.eq.s32.totalorder %s27, 0
    %p450 = por %p448, %p449
    %p451 = scmp.ne.s32.totalorder %s437, %s438
    %p452 = scmp.eq.s32.totalorder %s28, 3
    %p453 = por %p451, %p452
    %p455 = scmp.ne.s32.totalorder %s438, %s454
    %p456 = scmp.eq.s32.totalorder %s28, 0
    %p457 = por %p455, %p456
    %s458 = ssub.s32 %s29, %s41
    %p459 = scmp.eq.s32.totalorder %s458, 0
    %s461 = sadd.s32 %s460, 1
    %s462 = scalar_select %p459, %s460, %s461
    %p465 = pneg %p459
    %p466 = scmp.eq.s32.totalorder %s22, 3
    %p467 = por %p465, %p466
    %p468 = scmp.ne.s32.totalorder %s460, %s463
    %p469 = scmp.eq.s32.totalorder %s22, 0
    %p470 = por %p468, %p469
    %p471 = scmp.ne.s32.totalorder %s460, %s463
    %p472 = scmp.eq.s32.totalorder %s27, 3
    %p473 = por %p471, %p472
    %p474 = scmp.ne.s32.totalorder %s463, %s464
    %p475 = scmp.eq.s32.totalorder %s27, 0
    %p476 = por %p474, %p475
    %p477 = scmp.ne.s32.totalorder %s463, %s464
    %p478 = scmp.eq.s32.totalorder %s28, 3
    %p479 = por %p477, %p478
    %p481 = scmp.ne.s32.totalorder %s464, %s480
    %p482 = scmp.eq.s32.totalorder %s28, 0
    %p483 = por %p481, %p482
    %s484 = ssub.s32 %s29, %s41
    %p485 = scmp.eq.s32.totalorder %s484, 0
    %s487 = sadd.s32 %s486, 1
    %s488 = scalar_select %p485, %s486, %s487
    %p491 = pneg %p485
    %p492 = scmp.eq.s32.totalorder %s22, 3
    %p493 = por %p491, %p492
    %p494 = scmp.ne.s32.totalorder %s486, %s489
    %p495 = scmp.eq.s32.totalorder %s22, 0
    %p496 = por %p494, %p495
    %p497 = scmp.ne.s32.totalorder %s486, %s489
    %p498 = scmp.eq.s32.totalorder %s27, 3
    %p499 = por %p497, %p498
    %p500 = scmp.ne.s32.totalorder %s489, %s490
    %p501 = scmp.eq.s32.totalorder %s27, 0
    %p502 = por %p500, %p501
    %p503 = scmp.ne.s32.totalorder %s489, %s490
    %p504 = scmp.eq.s32.totalorder %s28, 3
    %p505 = por %p503, %p504
    %p507 = scmp.ne.s32.totalorder %s490, %s506
    %p508 = scmp.eq.s32.totalorder %s28, 0
    %p509 = por %p507, %p508
    %p510 = scmp.le.s32.totalorder 1, %s22
    %p511 = scmp.lt.s32.totalorder %s22, 5
    %p512 = pnand %p510, %p511
    %p513 = pneg %p512
    // Predicated region
    $region9: #{t5_forward.1} parent=5 // pred_check
      _
    $region10: #{t5_forward.1} parent=5 // pred_check_branch
      %515 = sbr.rel (%p512) target = $region12
    $region11: #{t5_forward.1} parent=5 // pred_region
      %s516 = ssub.s32 %s22, 1
    $region12: #{t5_forward.1} parent=5 // pred_fallthru
      _
    %p517 = scmp.lt.s32.totalorder %s22, 4
    // Predicated region
    $region13: #{t5_forward.1} parent=5 // pred_check
      %p518 = pneg %p517
    $region14: #{t5_forward.1} parent=5 // pred_check_branch
      %520 = sbr.rel (%p518) target = $region16
    $region15: #{t5_forward.1} parent=5 // pred_region
      // Predicated region
      $region17: #{t5_forward.1} parent=15 // pred_check
        %p521 = pneg %p54
      $region18: #{t5_forward.1} parent=15 // pred_check_branch
        %523 = sbr.rel (%p521) target = $region20
      $region19: #{t5_forward.1} parent=15 // pred_region
        %p524 = scmp.lt.s32.totalorder %s29, 1
        %s525 = scalar_select %p524, %s29, 1
        %s526 = smul.addr %s525, 8
        %s527 = smul.addr %s526, 8
        %s528 = scalar_lea.vmem %s0, %s527
      $region20: #{t5_forward.1} parent=15 // pred_fallthru
        _
      // Predicated region
      $region21: #{t5_forward.1} parent=15 // pred_check
        %p529 = pneg %p80
      $region22: #{t5_forward.1} parent=15 // pred_check_branch
        %531 = sbr.rel (%p529) target = $region24
      $region23: #{t5_forward.1} parent=15 // pred_region
        %p532 = scmp.lt.s32.totalorder %s29, 1
        %s533 = scalar_select %p532, %s29, 1
        %s534 = smul.addr %s533, 8
        %s535 = smul.addr %s534, 8
        %s536 = scalar_lea.vmem %s1, %s535
      $region24: #{t5_forward.1} parent=15 // pred_fallthru
        _
      // Predicated region
      $region25: #{t5_forward.1} parent=15 // pred_check
        %p537 = pneg %p108
      $region26: #{t5_forward.1} parent=15 // pred_check_branch
        %539 = sbr.rel (%p537) target = $region28
      $region27: #{t5_forward.1} parent=15 // pred_region
        %p540 = scmp.lt.s32.totalorder %s29, 1
        %s541 = scalar_select %p540, %s29, 1
        %p542 = scmp.lt.s32.totalorder %s30, 1
        %s543 = scalar_select %p542, %s30, 1
        %s544 = smul.addr %s541, 2
        %s545 = sadd.s32 %s543, %s544
        %s546 = scalar_lea.vmem %s2, %s545
      $region28: #{t5_forward.1} parent=15 // pred_fallthru
        _
      // Predicated region
      $region29: #{t5_forward.1} parent=15 // pred_check
        %p547 = pneg %p136
      $region30: #{t5_forward.1} parent=15 // pred_check_branch
        %549 = sbr.rel (%p547) target = $region32
      $region31: #{t5_forward.1} parent=15 // pred_region
        %p550 = scmp.lt.s32.totalorder %s29, 1
        %s551 = scalar_select %p550, %s29, 1
        %p552 = scmp.lt.s32.totalorder %s30, 1
        %s553 = scalar_select %p552, %s30, 1
        %s554 = smul.addr %s553, 4
        %s555 = smul.addr %s551, 8
        %s556 = sadd.s32 %s554, %s555
        %s557 = smul.addr %s556, 8
        %s558 = scalar_lea.vmem %s3, %s557
      $region32: #{t5_forward.1} parent=15 // pred_fallthru
        _
      // Predicated region
      $region33: #{t5_forward.1} parent=15 // pred_check
        %p559 = pneg %p164
      $region34: #{t5_forward.1} parent=15 // pred_check_branch
        %561 = sbr.rel (%p559) target = $region36
      $region35: #{t5_forward.1} parent=15 // pred_region
        %p562 = scmp.lt.s32.totalorder %s29, 1
        %s563 = scalar_select %p562, %s29, 1
        %p564 = scmp.lt.s32.totalorder %s30, 1
        %s565 = scalar_select %p564, %s30, 1
        %s566 = smul.addr %s563, 2
        %s567 = sadd.s32 %s565, %s566
        %s568 = scalar_lea.vmem %s4, %s567
      $region36: #{t5_forward.1} parent=15 // pred_fallthru
        _
      // Predicated region
      $region37: #{t5_forward.1} parent=15 // pred_check
        %p569 = pneg %p192
      $region38: #{t5_forward.1} parent=15 // pred_check_branch
        %571 = sbr.rel (%p569) target = $region40
      $region39: #{t5_forward.1} parent=15 // pred_region
        %p572 = scmp.lt.s32.totalorder %s29, 1
        %s573 = scalar_select %p572, %s29, 1
        %p574 = scmp.lt.s32.totalorder %s30, 1
        %s575 = scalar_select %p574, %s30, 1
        %s576 = smul.addr %s575, 4
        %s577 = smul.addr %s573, 8
        %s578 = sadd.s32 %s576, %s577
        %s579 = smul.addr %s578, 8
        %s580 = scalar_lea.vmem %s5, %s579
      $region40: #{t5_forward.1} parent=15 // pred_fallthru
        _
      // Predicated region
      $region41: #{t5_forward.1} parent=15 // pred_check
        %p581 = pneg %p220
      $region42: #{t5_forward.1} parent=15 // pred_check_branch
        %583 = sbr.rel (%p581) target = $region44
      $region43: #{t5_forward.1} parent=15 // pred_region
        %p584 = scmp.lt.s32.totalorder %s29, 1
        %s585 = scalar_select %p584, %s29, 1
        %p586 = scmp.lt.s32.totalorder %s30, 1
        %s587 = scalar_select %p586, %s30, 1
        %s588 = smul.addr %s585, 2
        %s589 = sadd.s32 %s587, %s588
        %s590 = scalar_lea.vmem %s6, %s589
      $region44: #{t5_forward.1} parent=15 // pred_fallthru
        _
      // Predicated region
      $region45: #{t5_forward.1} parent=15 // pred_check
        %p591 = pneg %p248
      $region46: #{t5_forward.1} parent=15 // pred_check_branch
        %593 = sbr.rel (%p591) target = $region48
      $region47: #{t5_forward.1} parent=15 // pred_region
        %p594 = scmp.lt.s32.totalorder %s29, 1
        %s595 = scalar_select %p594, %s29, 1
        %p596 = scmp.lt.s32.totalorder %s30, 1
        %s597 = scalar_select %p596, %s30, 1
        %s598 = smul.addr %s597, 4
        %s599 = smul.addr %s595, 8
        %s600 = sadd.s32 %s598, %s599
        %s601 = smul.addr %s600, 8
        %s602 = scalar_lea.vmem %s7, %s601
      $region48: #{t5_forward.1} parent=15 // pred_fallthru
        _
      // Predicated region
      $region49: #{t5_forward.1} parent=15 // pred_check
        %p603 = pneg %p276
      $region50: #{t5_forward.1} parent=15 // pred_check_branch
        %605 = sbr.rel (%p603) target = $region52
      $region51: #{t5_forward.1} parent=15 // pred_region
        %p606 = scmp.lt.s32.totalorder %s29, 1
        %s607 = scalar_select %p606, %s29, 1
        %p608 = scmp.lt.s32.totalorder %s30, 1
        %s609 = scalar_select %p608, %s30, 1
        %s610 = smul.addr %s607, 2
        %s611 = sadd.s32 %s609, %s610
        %s612 = scalar_lea.vmem %s8, %s611
      $region52: #{t5_forward.1} parent=15 // pred_fallthru
        _
      // Predicated region
      $region53: #{t5_forward.1} parent=15 // pred_check
        %p613 = pneg %p304
      $region54: #{t5_forward.1} parent=15 // pred_check_branch
        %615 = sbr.rel (%p613) target = $region56
      $region55: #{t5_forward.1} parent=15 // pred_region
        %p616 = scmp.lt.s32.totalorder %s29, 1
        %s617 = scalar_select %p616, %s29, 1
        %p618 = scmp.lt.s32.totalorder %s30, 1
        %s619 = scalar_select %p618, %s30, 1
        %s620 = smul.addr %s619, 4
        %s621 = smul.addr %s617, 8
        %s622 = sadd.s32 %s620, %s621
        %s623 = smul.addr %s622, 8
        %s624 = scalar_lea.vmem %s9, %s623
      $region56: #{t5_forward.1} parent=15 // pred_fallthru
        _
      // Predicated region
      $region57: #{t5_forward.1} parent=15 // pred_check
        %p625 = pneg %p332
      $region58: #{t5_forward.1} parent=15 // pred_check_branch
        %627 = sbr.rel (%p625) target = $region60
      $region59: #{t5_forward.1} parent=15 // pred_region
        %p628 = scmp.lt.s32.totalorder %s29, 1
        %s629 = scalar_select %p628, %s29, 1
        %p630 = scmp.lt.s32.totalorder %s30, 1
        %s631 = scalar_select %p630, %s30, 1
        %s632 = smul.addr %s629, 2
        %s633 = sadd.s32 %s631, %s632
        %s634 = scalar_lea.vmem %s10, %s633
      $region60: #{t5_forward.1} parent=15 // pred_fallthru
        _
      // Predicated region
      $region61: #{t5_forward.1} parent=15 // pred_check
        %p635 = pneg %p360
      $region62: #{t5_forward.1} parent=15 // pred_check_branch
        %637 = sbr.rel (%p635) target = $region64
      $region63: #{t5_forward.1} parent=15 // pred_region
        %p638 = scmp.lt.s32.totalorder %s29, 1
        %s639 = scalar_select %p638, %s29, 1
        %p640 = scmp.lt.s32.totalorder %s30, 1
        %s641 = scalar_select %p640, %s30, 1
        %s642 = smul.addr %s641, 4
        %s643 = smul.addr %s639, 8
        %s644 = sadd.s32 %s642, %s643
        %s645 = smul.addr %s644, 8
        %s646 = scalar_lea.vmem %s11, %s645
      $region64: #{t5_forward.1} parent=15 // pred_fallthru
        _
      // Predicated region
      $region65: #{t5_forward.1} parent=15 // pred_check
        %p647 = pneg %p388
      $region66: #{t5_forward.1} parent=15 // pred_check_branch
        %649 = sbr.rel (%p647) target = $region68
      $region67: #{t5_forward.1} parent=15 // pred_region
        %p650 = scmp.lt.s32.totalorder %s29, 1
        %s651 = scalar_select %p650, %s29, 1
        %p652 = scmp.lt.s32.totalorder %s30, 1
        %s653 = scalar_select %p652, %s30, 1
        %s654 = smul.addr %s651, 2
        %s655 = sadd.s32 %s653, %s654
        %s656 = scalar_lea.vmem %s12, %s655
      $region68: #{t5_forward.1} parent=15 // pred_fallthru
        _
      // Predicated region
      $region69: #{t5_forward.1} parent=15 // pred_check
        %p657 = pneg %p416
      $region70: #{t5_forward.1} parent=15 // pred_check_branch
        %659 = sbr.rel (%p657) target = $region72
      $region71: #{t5_forward.1} parent=15 // pred_region
        %p660 = scmp.lt.s32.totalorder %s29, 1
        %s661 = scalar_select %p660, %s29, 1
        %p662 = scmp.lt.s32.totalorder %s30, 1
        %s663 = scalar_select %p662, %s30, 1
        %s664 = smul.addr %s663, 8
        %s665 = smul.addr %s661, 16
        %s666 = sadd.s32 %s664, %s665
        %s667 = smul.addr %s666, 8
        %s668 = scalar_lea.vmem %s13, %s667
      $region72: #{t5_forward.1} parent=15 // pred_fallthru
        _
      // Predicated region
      $region73: #{t5_forward.1} parent=15 // pred_check
        %p669 = pneg %p444
      $region74: #{t5_forward.1} parent=15 // pred_check_branch
        %671 = sbr.rel (%p669) target = $region76
      $region75: #{t5_forward.1} parent=15 // pred_region
        %p672 = scmp.lt.s32.totalorder %s29, 1
        %s673 = scalar_select %p672, %s29, 1
        %p674 = scmp.lt.s32.totalorder %s30, 1
        %s675 = scalar_select %p674, %s30, 1
        %s676 = smul.addr %s673, 2
        %s677 = sadd.s32 %s675, %s676
        %s678 = scalar_lea.vmem %s14, %s677
      $region76: #{t5_forward.1} parent=15 // pred_fallthru
        _
      // Predicated region
      $region77: #{t5_forward.1} parent=15 // pred_check
        %p679 = pneg %p470
      $region78: #{t5_forward.1} parent=15 // pred_check_branch
        %681 = sbr.rel (%p679) target = $region80
      $region79: #{t5_forward.1} parent=15 // pred_region
        %p682 = scmp.lt.s32.totalorder %s29, 1
        %s683 = scalar_select %p682, %s29, 1
        %s684 = scalar_lea.vmem %s15, %s683
      $region80: #{t5_forward.1} parent=15 // pred_fallthru
        _
    $region16: #{t5_forward.1} parent=5 // pred_fallthru
      _
    %p685 = scmp.le.s32.totalorder 1, %s22
    %p686 = scmp.lt.s32.totalorder %s22, 5
    %p687 = pnand %p685, %p686
    %p688 = pneg %p687
    // Predicated region
    $region81: #{t5_forward.1} parent=5 // pred_check
      _
    $region82: #{t5_forward.1} parent=5 // pred_check_branch
      %690 = sbr.rel (%p687) target = $region84
    $region83: #{t5_forward.1} parent=5 // pred_region
      %s691 = ssub.s32 %s22, 1
      %p692 = scmp.lt.s32.totalorder %s31, 1
      %s693 = scalar_select %p692, %s31, 1
      %s694 = smul.addr %s693, 8
      %s695 = smul.addr %s694, 8
      %s696 = scalar_lea.vmem %s0, %s695
      %p697 = pneg %p60
      %p698 = pneg %p57
      %p699 = scmp.lt.s32.totalorder %s31, 1
      %s700 = scalar_select %p699, %s31, 1
      %s701 = smul.addr %s700, 8
      %s702 = smul.addr %s701, 8
      %s703 = scalar_lea.vmem %s1, %s702
      %p704 = pneg %p86
      %p705 = pneg %p83
      %p706 = scmp.lt.s32.totalorder %s31, 1
      %s707 = scalar_select %p706, %s31, 1
      %p708 = scmp.lt.s32.totalorder %s32, 1
      %s709 = scalar_select %p708, %s32, 1
      %s710 = smul.addr %s707, 2
      %s711 = sadd.s32 %s709, %s710
      %s712 = scalar_lea.vmem %s2, %s711
      %p713 = pneg %p114
      %p714 = pneg %p111
      %p715 = scmp.lt.s32.totalorder %s31, 1
      %s716 = scalar_select %p715, %s31, 1
      %p717 = scmp.lt.s32.totalorder %s32, 1
      %s718 = scalar_select %p717, %s32, 1
      %s719 = smul.addr %s718, 4
      %s720 = smul.addr %s716, 8
      %s721 = sadd.s32 %s719, %s720
      %s722 = smul.addr %s721, 8
      %s723 = scalar_lea.vmem %s3, %s722
      %p724 = pneg %p142
      %p725 = pneg %p139
      %p726 = scmp.lt.s32.totalorder %s31, 1
      %s727 = scalar_select %p726, %s31, 1
      %p728 = scmp.lt.s32.totalorder %s32, 1
      %s729 = scalar_select %p728, %s32, 1
      %s730 = smul.addr %s727, 2
      %s731 = sadd.s32 %s729, %s730
      %s732 = scalar_lea.vmem %s4, %s731
      %p733 = pneg %p170
      %p734 = pneg %p167
      %p735 = scmp.lt.s32.totalorder %s31, 1
      %s736 = scalar_select %p735, %s31, 1
      %p737 = scmp.lt.s32.totalorder %s32, 1
      %s738 = scalar_select %p737, %s32, 1
      %s739 = smul.addr %s738, 4
      %s740 = smul.addr %s736, 8
      %s741 = sadd.s32 %s739, %s740
      %s742 = smul.addr %s741, 8
      %s743 = scalar_lea.vmem %s5, %s742
      %p744 = pneg %p198
      %p745 = pneg %p195
      %p746 = scmp.lt.s32.totalorder %s31, 1
      %s747 = scalar_select %p746, %s31, 1
      %p748 = scmp.lt.s32.totalorder %s32, 1
      %s749 = scalar_select %p748, %s32, 1
      %s750 = smul.addr %s747, 2
      %s751 = sadd.s32 %s749, %s750
      %s752 = scalar_lea.vmem %s6, %s751
      %p753 = pneg %p226
      %p754 = pneg %p223
      %p755 = scmp.lt.s32.totalorder %s31, 1
      %s756 = scalar_select %p755, %s31, 1
      %p757 = scmp.lt.s32.totalorder %s32, 1
      %s758 = scalar_select %p757, %s32, 1
      %s759 = smul.addr %s758, 4
      %s760 = smul.addr %s756, 8
      %s761 = sadd.s32 %s759, %s760
      %s762 = smul.addr %s761, 8
      %s763 = scalar_lea.vmem %s7, %s762
      %p764 = pneg %p254
      %p765 = pneg %p251
      %p766 = scmp.lt.s32.totalorder %s31, 1
      %s767 = scalar_select %p766, %s31, 1
      %p768 = scmp.lt.s32.totalorder %s32, 1
      %s769 = scalar_select %p768, %s32, 1
      %s770 = smul.addr %s767, 2
      %s771 = sadd.s32 %s769, %s770
      %s772 = scalar_lea.vmem %s8, %s771
      %p773 = pneg %p282
      %p774 = pneg %p279
      %p775 = scmp.lt.s32.totalorder %s31, 1
      %s776 = scalar_select %p775, %s31, 1
      %p777 = scmp.lt.s32.totalorder %s32, 1
      %s778 = scalar_select %p777, %s32, 1
      %s779 = smul.addr %s778, 4
      %s780 = smul.addr %s776, 8
      %s781 = sadd.s32 %s779, %s780
      %s782 = smul.addr %s781, 8
      %s783 = scalar_lea.vmem %s9, %s782
      %p784 = pneg %p310
      %p785 = pneg %p307
      %p786 = scmp.lt.s32.totalorder %s31, 1
      %s787 = scalar_select %p786, %s31, 1
      %p788 = scmp.lt.s32.totalorder %s32, 1
      %s789 = scalar_select %p788, %s32, 1
      %s790 = smul.addr %s787, 2
      %s791 = sadd.s32 %s789, %s790
      %s792 = scalar_lea.vmem %s10, %s791
      %p793 = pneg %p338
      %p794 = pneg %p335
      %p795 = scmp.lt.s32.totalorder %s31, 1
      %s796 = scalar_select %p795, %s31, 1
      %p797 = scmp.lt.s32.totalorder %s32, 1
      %s798 = scalar_select %p797, %s32, 1
      %s799 = smul.addr %s798, 4
      %s800 = smul.addr %s796, 8
      %s801 = sadd.s32 %s799, %s800
      %s802 = smul.addr %s801, 8
      %s803 = scalar_lea.vmem %s11, %s802
      %p804 = pneg %p366
      %p805 = pneg %p363
      %p806 = scmp.lt.s32.totalorder %s31, 1
      %s807 = scalar_select %p806, %s31, 1
      %p808 = scmp.lt.s32.totalorder %s32, 1
      %s809 = scalar_select %p808, %s32, 1
      %s810 = smul.addr %s807, 2
      %s811 = sadd.s32 %s809, %s810
      %s812 = scalar_lea.vmem %s12, %s811
      %p813 = pneg %p394
      %p814 = pneg %p391
      %p815 = scmp.lt.s32.totalorder %s31, 1
      %s816 = scalar_select %p815, %s31, 1
      %p817 = scmp.lt.s32.totalorder %s32, 1
      %s818 = scalar_select %p817, %s32, 1
      %s819 = smul.addr %s818, 8
      %s820 = smul.addr %s816, 16
      %s821 = sadd.s32 %s819, %s820
      %s822 = smul.addr %s821, 8
      %s823 = scalar_lea.vmem %s13, %s822
      %p824 = pneg %p422
      %p825 = pneg %p419
      %p826 = scmp.lt.s32.totalorder %s31, 1
      %s827 = scalar_select %p826, %s31, 1
      %p828 = scmp.lt.s32.totalorder %s32, 1
      %s829 = scalar_select %p828, %s32, 1
      %s830 = smul.addr %s827, 2
      %s831 = sadd.s32 %s829, %s830
      %s832 = scalar_lea.vmem %s14, %s831
      %p833 = pneg %p450
      %p834 = pneg %p447
      %p835 = scmp.lt.s32.totalorder %s31, 1
      %s836 = scalar_select %p835, %s31, 1
      %s837 = scalar_lea.vmem %s15, %s836
      %p838 = pneg %p476
      %p839 = pneg %p473
      %p840 = pneg %p502
      %p841 = pneg %p499
      %p842 = scmp.lt.s32.totalorder %s31, 1
      %s843 = scalar_select %p842, %s31, 1
      %s844 = smul.addr %s843, 8
      %s845 = smul.addr %s844, 8
      %s846 = scalar_lea.vmem %s16, %s845
      %p847 = scmp.lt.s32.totalorder %s31, 1
      %s848 = scalar_select %p847, %s31, 1
      %s849 = smul.addr %s848, 8
      %s850 = smul.addr %s849, 8
      %s851 = scalar_lea.vmem %s0, %s850
      %p852 = scmp.lt.s32.totalorder %s31, 1
      %s853 = scalar_select %p852, %s31, 1
      %s854 = smul.addr %s853, 8
      %s855 = smul.addr %s854, 8
      %s856 = scalar_lea.vmem %s1, %s855
      %p857 = scmp.lt.s32.totalorder %s31, 1
      %s858 = scalar_select %p857, %s31, 1
      %p859 = scmp.lt.s32.totalorder %s32, 1
      %s860 = scalar_select %p859, %s32, 1
      %s861 = smul.addr %s858, 2
      %s862 = sadd.s32 %s860, %s861
      %s863 = scalar_lea.vmem %s2, %s862
      %p864 = scmp.lt.s32.totalorder %s31, 1
      %s865 = scalar_select %p864, %s31, 1
      %p866 = scmp.lt.s32.totalorder %s32, 1
      %s867 = scalar_select %p866, %s32, 1
      %s868 = smul.addr %s867, 4
      %s869 = smul.addr %s865, 8
      %s870 = sadd.s32 %s868, %s869
      %s871 = smul.addr %s870, 8
      %s872 = scalar_lea.vmem %s3, %s871
      %p873 = scmp.lt.s32.totalorder %s31, 1
      %s874 = scalar_select %p873, %s31, 1
      %p875 = scmp.lt.s32.totalorder %s32, 1
      %s876 = scalar_select %p875, %s32, 1
      %s877 = smul.addr %s874, 2
      %s878 = sadd.s32 %s876, %s877
      %s879 = scalar_lea.vmem %s4, %s878
      %p880 = scmp.lt.s32.totalorder %s31, 1
      %s881 = scalar_select %p880, %s31, 1
      %p882 = scmp.lt.s32.totalorder %s32, 1
      %s883 = scalar_select %p882, %s32, 1
      %s884 = smul.addr %s883, 4
      %s885 = smul.addr %s881, 8
      %s886 = sadd.s32 %s884, %s885
      %s887 = smul.addr %s886, 8
      %s888 = scalar_lea.vmem %s5, %s887
      %p889 = scmp.lt.s32.totalorder %s31, 1
      %s890 = scalar_select %p889, %s31, 1
      %p891 = scmp.lt.s32.totalorder %s32, 1
      %s892 = scalar_select %p891, %s32, 1
      %s893 = smul.addr %s890, 2
      %s894 = sadd.s32 %s892, %s893
      %s895 = scalar_lea.vmem %s6, %s894
      %p896 = scmp.lt.s32.totalorder %s31, 1
      %s897 = scalar_select %p896, %s31, 1
      %p898 = scmp.lt.s32.totalorder %s32, 1
      %s899 = scalar_select %p898, %s32, 1
      %s900 = smul.addr %s899, 4
      %s901 = smul.addr %s897, 8
      %s902 = sadd.s32 %s900, %s901
      %s903 = smul.addr %s902, 8
      %s904 = scalar_lea.vmem %s7, %s903
      %p905 = scmp.lt.s32.totalorder %s31, 1
      %s906 = scalar_select %p905, %s31, 1
      %p907 = scmp.lt.s32.totalorder %s32, 1
      %s908 = scalar_select %p907, %s32, 1
      %s909 = smul.addr %s906, 2
      %s910 = sadd.s32 %s908, %s909
      %s911 = scalar_lea.vmem %s8, %s910
      %p912 = scmp.lt.s32.totalorder %s31, 1
      %s913 = scalar_select %p912, %s31, 1
      %p914 = scmp.lt.s32.totalorder %s32, 1
      %s915 = scalar_select %p914, %s32, 1
      %s916 = smul.addr %s915, 4
      %s917 = smul.addr %s913, 8
      %s918 = sadd.s32 %s916, %s917
      %s919 = smul.addr %s918, 8
      %s920 = scalar_lea.vmem %s9, %s919
      %p921 = scmp.lt.s32.totalorder %s31, 1
      %s922 = scalar_select %p921, %s31, 1
      %p923 = scmp.lt.s32.totalorder %s32, 1
      %s924 = scalar_select %p923, %s32, 1
      %s925 = smul.addr %s922, 2
      %s926 = sadd.s32 %s924, %s925
      %s927 = scalar_lea.vmem %s10, %s926
      %p928 = scmp.lt.s32.totalorder %s31, 1
      %s929 = scalar_select %p928, %s31, 1
      %p930 = scmp.lt.s32.totalorder %s32, 1
      %s931 = scalar_select %p930, %s32, 1
      %s932 = smul.addr %s931, 4
      %s933 = smul.addr %s929, 8
      %s934 = sadd.s32 %s932, %s933
      %s935 = smul.addr %s934, 8
      %s936 = scalar_lea.vmem %s11, %s935
      %p937 = scmp.lt.s32.totalorder %s31, 1
      %s938 = scalar_select %p937, %s31, 1
      %p939 = scmp.lt.s32.totalorder %s32, 1
      %s940 = scalar_select %p939, %s32, 1
      %s941 = smul.addr %s938, 2
      %s942 = sadd.s32 %s940, %s941
      %s943 = scalar_lea.vmem %s12, %s942
      %p944 = scmp.lt.s32.totalorder %s31, 1
      %s945 = scalar_select %p944, %s31, 1
      %p946 = scmp.lt.s32.totalorder %s32, 1
      %s947 = scalar_select %p946, %s32, 1
      %s948 = smul.addr %s947, 8
      %s949 = smul.addr %s945, 16
      %s950 = sadd.s32 %s948, %s949
      %s951 = smul.addr %s950, 8
      %s952 = scalar_lea.vmem %s13, %s951
      %p953 = scmp.lt.s32.totalorder %s31, 1
      %s954 = scalar_select %p953, %s31, 1
      %p955 = scmp.lt.s32.totalorder %s32, 1
      %s956 = scalar_select %p955, %s32, 1
      %s957 = smul.addr %s954, 2
      %s958 = sadd.s32 %s956, %s957
      %s959 = scalar_lea.vmem %s14, %s958
      %p960 = scmp.lt.s32.totalorder %s31, 1
      %s961 = scalar_select %p960, %s31, 1
      %s962 = scalar_lea.vmem %s15, %s961
      %p963 = scmp.lt.s32.totalorder %s31, 1
      %s964 = scalar_select %p963, %s31, 1
      %s965 = smul.addr %s964, 8
      %s966 = smul.addr %s965, 8
      %s967 = scalar_lea.vmem %s16, %s966
      %p968 = scmp.eq.s32.totalorder %s31, 1
      %p969 = scmp.eq.s32.totalorder %s32, 0
      // Predicated region
      $region85: #{t5_forward.1} parent=83 // pred_check
        %p970 = pneg %p969
      $region86: #{t5_forward.1} parent=83 // pred_check_branch
        %972 = sbr.rel (%p970) target = $region88
      $region87: #{t5_forward.1} parent=83 // pred_region
        %v973 = vld [vmem:[%s851] sm:$0xff]
        %v974 = vld [vmem:[%s851 + $0x8] sm:$0xff]
        %v975 = vld [vmem:[%s851 + $0x10] sm:$0xff]
        %v976 = vld [vmem:[%s851 + $0x18] sm:$0xff]
        %v977 = vld [vmem:[%s851 + $0x20] sm:$0xff]
        %v978 = vld [vmem:[%s851 + $0x28] sm:$0xff]
        %v979 = vld [vmem:[%s851 + $0x30] sm:$0xff]
        %v980 = vld [vmem:[%s851 + $0x38] sm:$0xff]
        %vm981 = vcmask 261120
        %982 = vst.msk [vmem:[#allocation2] sm:$0xff] %vm981, %v973
        %983 = vst.msk [vmem:[#allocation2 + $0x8] sm:$0xff] %vm981, %v974
        %984 = vst.msk [vmem:[#allocation2 + $0x10] sm:$0xff] %vm981, %v975
        %985 = vst.msk [vmem:[#allocation2 + $0x18] sm:$0xff] %vm981, %v976
        %986 = vst.msk [vmem:[#allocation2 + $0x20] sm:$0xff] %vm981, %v977
        %987 = vst.msk [vmem:[#allocation2 + $0x28] sm:$0xff] %vm981, %v978
        %988 = vst.msk [vmem:[#allocation2 + $0x30] sm:$0xff] %vm981, %v979
        %989 = vst.msk [vmem:[#allocation2 + $0x38] sm:$0xff] %vm981, %v980
      $region88: #{t5_forward.1} parent=83 // pred_fallthru
        _
      %v990 = vld [vmem:[%s863] sm:$0x1]
      %v991 = vld [vmem:[%s856] sm:$0xff]
      %v992 = vld [vmem:[%s856 + $0x8] sm:$0xff]
      %v993 = vld [vmem:[%s856 + $0x10] sm:$0xff]
      %v994 = vld [vmem:[%s856 + $0x18] sm:$0xff]
      %v995 = vld [vmem:[%s856 + $0x20] sm:$0xff]
      %v996 = vld [vmem:[%s856 + $0x28] sm:$0xff]
      %v997 = vld [vmem:[%s856 + $0x30] sm:$0xff]
      %v998 = vld [vmem:[%s856 + $0x38] sm:$0xff]
      %v999 = vld [vmem:[#allocation2] sm:$0xff]
      %v1000 = vld [vmem:[#allocation2 + $0x8] sm:$0xff]
      %v1001 = vld [vmem:[#allocation2 + $0x10] sm:$0xff]
      %v1002 = vld [vmem:[#allocation2 + $0x18] sm:$0xff]
      %v1003 = vld [vmem:[#allocation2 + $0x20] sm:$0xff]
      %v1004 = vld [vmem:[#allocation2 + $0x28] sm:$0xff]
      %v1005 = vld [vmem:[#allocation2 + $0x30] sm:$0xff]
      %v1006 = vld [vmem:[#allocation2 + $0x38] sm:$0xff]
      %v1007 = vmul.f32 %v999, %v999
      %v1008 = vmul.f32 %v1000, %v1000
      %v1009 = vmul.f32 %v1001, %v1001
      %v1010 = vmul.f32 %v1002, %v1002
      %v1011 = vmul.f32 %v1003, %v1003
      %v1012 = vmul.f32 %v1004, %v1004
      %v1013 = vmul.f32 %v1005, %v1005
      %v1014 = vmul.f32 %v1006, %v1006
      %vm1015 = vcmask 261120
      %v1016 = vsel %vm1015, %v1007, 0.0
      %1017 = vadd.xlane.f32.xlu0 %v1016
      %v1018 = vpop.xlane.xlu0 %1017
      %v1019 = vsel %vm1015, %v1008, 0.0
      %1020 = vadd.xlane.f32.xlu0 %v1019
      %v1021 = vpop.xlane.xlu0 %1020
      %v1022 = vsel %vm1015, %v1009, 0.0
      %1023 = vadd.xlane.f32.xlu0 %v1022
      %v1024 = vpop.xlane.xlu0 %1023
      %v1025 = vsel %vm1015, %v1010, 0.0
      %1026 = vadd.xlane.f32.xlu0 %v1025
      %v1027 = vpop.xlane.xlu0 %1026
      %v1028 = vsel %vm1015, %v1011, 0.0
      %1029 = vadd.xlane.f32.xlu0 %v1028
      %v1030 = vpop.xlane.xlu0 %1029
      %v1031 = vsel %vm1015, %v1012, 0.0
      %1032 = vadd.xlane.f32.xlu0 %v1031
      %v1033 = vpop.xlane.xlu0 %1032
      %v1034 = vsel %vm1015, %v1013, 0.0
      %1035 = vadd.xlane.f32.xlu0 %v1034
      %v1036 = vpop.xlane.xlu0 %1035
      %v1037 = vsel %vm1015, %v1014, 0.0
      %1038 = vadd.xlane.f32.xlu0 %v1037
      %v1039 = vpop.xlane.xlu0 %1038
      %v1040 = vrcp.pop 32.0
      %v1041 = vmul.f32 %v1018, %v1040
      %v1042 = vmul.f32 %v1021, %v1040
      %v1043 = vmul.f32 %v1024, %v1040
      %v1044 = vmul.f32 %v1027, %v1040
      %v1045 = vmul.f32 %v1030, %v1040
      %v1046 = vmul.f32 %v1033, %v1040
      %v1047 = vmul.f32 %v1036, %v1040
      %v1048 = vmul.f32 %v1039, %v1040
      %v1049 = vadd.f32 %v1041, 1e-06
      %v1050 = vadd.f32 %v1042, 1e-06
      %v1051 = vadd.f32 %v1043, 1e-06
      %v1052 = vadd.f32 %v1044, 1e-06
      %v1053 = vadd.f32 %v1045, 1e-06
      %v1054 = vadd.f32 %v1046, 1e-06
      %v1055 = vadd.f32 %v1047, 1e-06
      %v1056 = vadd.f32 %v1048, 1e-06
      %v1057 = vrsqrt.pop %v1049
      %v1058 = vrsqrt.pop %v1050
      %v1059 = vrsqrt.pop %v1051
      %v1060 = vrsqrt.pop %v1052
      %v1061 = vrsqrt.pop %v1053
      %v1062 = vrsqrt.pop %v1054
      %v1063 = vrsqrt.pop %v1055
      %v1064 = vrsqrt.pop %v1056
      %v1065 = vmul.f32 %v999, %v1057
      %v1066 = vmul.f32 %v1000, %v1058
      %v1067 = vmul.f32 %v1001, %v1059
      %v1068 = vmul.f32 %v1002, %v1060
      %v1069 = vmul.f32 %v1003, %v1061
      %v1070 = vmul.f32 %v1004, %v1062
      %v1071 = vmul.f32 %v1005, %v1063
      %v1072 = vmul.f32 %v1006, %v1064
      %v1074 = vlaneseq
      %v1075 = vshrl.u32 %v1074, 7
      %v1076 = vsub.s32 0, %v1075
      %v1077 = vrot.slane %v990, %v1076
      %v1079 = vmul.f32 %v1077, %v1065
      %v1080 = vmul.f32 %v1077, %v1066
      %v1081 = vmul.f32 %v1077, %v1067
      %v1082 = vmul.f32 %v1077, %v1068
      %v1083 = vmul.f32 %v1077, %v1069
      %v1084 = vmul.f32 %v1077, %v1070
      %v1085 = vmul.f32 %v1077, %v1071
      %v1086 = vmul.f32 %v1077, %v1072
      %v1087 = vld [vmem:[%s872] sm:$0xff]
      %v1088 = vld [vmem:[%s872 + $0x8] sm:$0xff]
      %v1089 = vld [vmem:[%s872 + $0x10] sm:$0xff]
      %v1090 = vld [vmem:[%s872 + $0x18] sm:$0xff]
      %v1091 = vld [vmem:[%s879] sm:$0x1]
      %v1092 = vld [vmem:[%s888] sm:$0xff]
      %v1093 = vld [vmem:[%s888 + $0x8] sm:$0xff]
      %v1094 = vld [vmem:[%s888 + $0x10] sm:$0xff]
      %v1095 = vld [vmem:[%s888 + $0x18] sm:$0xff]
      %v1096 = vld [vmem:[%s895] sm:$0x1]
      %v1098 = vlaneseq
      %v1099 = vshrl.u32 %v1098, 7
      %v1100 = vsub.s32 0, %v1099
      %v1101 = vrot.slane %v1091, %v1100
      %v1104 = vsel %vm1015, %v1079, 0
      %v1107 = vsel %vm1015, %v1080, 0
      %v1110 = vsel %vm1015, %v1081, 0
      %v1113 = vsel %vm1015, %v1082, 0
      %v1116 = vsel %vm1015, %v1083, 0
      %v1119 = vsel %vm1015, %v1084, 0
      %v1122 = vsel %vm1015, %v1085, 0
      %v1125 = vsel %vm1015, %v1086, 0
      %1127 = vmatprep.subr.mxu0 0.0
      %1128 = vmatpush1.msra.mxu0 %v1087
      %1129 = vmatprep.subr.mxu0 0.0
      %1130 = vmatpush1.msra.mxu0 %v1088
      %1131 = vmatprep.subr.mxu0 0.0
      %1132 = vmatpush1.msra.mxu0 %v1089
      %1133 = vmatprep.subr.mxu0 0.0
      %1134 = vmatpush1.msra.mxu0 %v1090
      %1135 = vmatprep.subr.mxu0 0.0
      %1136 = vmatpush1.msra.mxu0 0.0
      %1137 = vmatprep.subr.mxu0 0.0
      %1138 = vmatpush1.msra.mxu0 0.0
      %1139 = vmatprep.subr.mxu0 0.0
      %1140 = vmatpush1.msra.mxu0 0.0
      %1141 = vmatprep.subr.mxu0 0.0
      %1142 = vmatpush1.msra.mxu0 0.0
      %1143 = vmatprep.subr.mxu0 0.0
      %1144 = vmatpush1.msra.mxu0 0.0
      %1145 = vmatprep.subr.mxu0 0.0
      %1146 = vmatpush1.msra.mxu0 0.0
      %1147 = vmatprep.subr.mxu0 0.0
      %1148 = vmatpush1.msra.mxu0 0.0
      %1149 = vmatprep.subr.mxu0 0.0
      %1150 = vmatpush1.msra.mxu0 0.0
      %1151 = vmatprep.subr.mxu0 0.0
      %1152 = vmatpush1.msra.mxu0 0.0
      %1153 = vmatprep.subr.mxu0 0.0
      %1154 = vmatpush1.msra.mxu0 0.0
      %1155 = vmatprep.subr.mxu0 0.0
      %1156 = vmatpush1.msra.mxu0 0.0
      %1157 = vmatprep.subr.mxu0 0.0
      %1158 = vmatpush1.msra.mxu0 0.0
      %1159 = vmatprep.subr.mxu0 0.0
      %1160 = vmatpush1.msra.mxu0 0.0
      %1161 = vmatprep.subr.mxu0 0.0
      %1162 = vmatpush1.msra.mxu0 0.0
      %1163 = vmatprep.subr.mxu0 0.0
      %1164 = vmatpush1.msra.mxu0 0.0
      %1165 = vmatprep.subr.mxu0 0.0
      %1166 = vmatpush1.msra.mxu0 0.0
      %1167 = vmatprep.subr.mxu0 0.0
      %1168 = vmatpush1.msra.mxu0 0.0
      %1169 = vmatprep.subr.mxu0 0.0
      %1170 = vmatpush1.msra.mxu0 0.0
      %1171 = vmatprep.subr.mxu0 0.0
      %1172 = vmatpush1.msra.mxu0 0.0
      %1173 = vmatprep.subr.mxu0 0.0
      %1174 = vmatpush1.msra.mxu0 0.0
      %1175 = vmatprep.subr.mxu0 0.0
      %1176 = vmatpush1.msra.mxu0 0.0
      %1177 = vmatprep.subr.mxu0 0.0
      %1178 = vmatpush1.msra.mxu0 0.0
      %1179 = vmatprep.subr.mxu0 0.0
      %1180 = vmatpush1.msra.mxu0 0.0
      %1181 = vmatprep.subr.mxu0 0.0
      %1182 = vmatpush1.msra.mxu0 0.0
      %1183 = vmatprep.subr.mxu0 0.0
      %1184 = vmatpush1.msra.mxu0 0.0
      %1185 = vmatprep.subr.mxu0 0.0
      %1186 = vmatpush1.msra.mxu0 0.0
      %1187 = vmatprep.subr.mxu0 0.0
      %1188 = vmatpush1.msra.mxu0 0.0
      %1189 = vmatprep.subr.mxu0 0.0
      %1190 = vmatpush1.msra.mxu0 0.0
      %1191 = vmatprep.mubr.f32.mxu0 0.0
      %1192 = vmatmul.mubr.f32.gmra.mrb[0].mxu0 %v1104
      %v1193 = vpop.f32.mrb[0].mxu0
      %v1194 = vadd.f32 %v1101, %v1193
      %v1195 = vpop.f32.mrb[0].mxu0
      %1196 = vmatprep.mubr.f32.mxu0 0.0
      %1197 = vmatmul.mubr.f32.gmra.mrb[0].mxu0 %v1107
      %v1198 = vpop.f32.mrb[0].mxu0
      %v1199 = vadd.f32 %v1101, %v1198
      %v1200 = vpop.f32.mrb[0].mxu0
      %1201 = vmatprep.mubr.f32.mxu0 0.0
      %1202 = vmatmul.mubr.f32.gmra.mrb[0].mxu0 %v1110
      %v1203 = vpop.f32.mrb[0].mxu0
      %v1204 = vadd.f32 %v1101, %v1203
      %v1205 = vpop.f32.mrb[0].mxu0
      %1206 = vmatprep.mubr.f32.mxu0 0.0
      %1207 = vmatmul.mubr.f32.gmra.mrb[0].mxu0 %v1113
      %v1208 = vpop.f32.mrb[0].mxu0
      %v1209 = vadd.f32 %v1101, %v1208
      %v1210 = vpop.f32.mrb[0].mxu0
      %1211 = vmatprep.mubr.f32.mxu0 0.0
      %1212 = vmatmul.mubr.f32.gmra.mrb[0].mxu0 %v1116
      %v1213 = vpop.f32.mrb[0].mxu0
      %v1214 = vadd.f32 %v1101, %v1213
      %v1215 = vpop.f32.mrb[0].mxu0
      %1216 = vmatprep.mubr.f32.mxu0 0.0
      %1217 = vmatmul.mubr.f32.gmra.mrb[0].mxu0 %v1119
      %v1218 = vpop.f32.mrb[0].mxu0
      %v1219 = vadd.f32 %v1101, %v1218
      %v1220 = vpop.f32.mrb[0].mxu0
      %1221 = vmatprep.mubr.f32.mxu0 0.0
      %1222 = vmatmul.mubr.f32.gmra.mrb[0].mxu0 %v1122
      %v1223 = vpop.f32.mrb[0].mxu0
      %v1224 = vadd.f32 %v1101, %v1223
      %v1225 = vpop.f32.mrb[0].mxu0
      %1226 = vmatprep.mubr.f32.mxu0 0.0
      %1227 = vmatmul.mubr.f32.gmra.mrb[0].mxu0 %v1125
      %v1228 = vpop.f32.mrb[0].mxu0
      %v1229 = vadd.f32 %v1101, %v1228
      %v1230 = vpop.f32.mrb[0].mxu0
      %1231 = vdwg.mxu0
      %1236 = vrot.lane.b32.xlu0 %v1194, 96
      %v1237 = vpop.permute.xlu0 %1236
      %1238 = vrot.lane.b32.xlu0 %v1199, 96
      %v1239 = vpop.permute.xlu0 %1238
      %1240 = vrot.lane.b32.xlu0 %v1204, 96
      %v1241 = vpop.permute.xlu0 %1240
      %1242 = vrot.lane.b32.xlu0 %v1209, 96
      %v1243 = vpop.permute.xlu0 %1242
      %vm1244 = vcmask 130048
      %v1245 = vsel %vm1244, %v1194, 0
      %v1247 = vsel %vm1244, %v1199, 0
      %v1249 = vsel %vm1244, %v1204, 0
      %v1251 = vsel %vm1244, %v1209, 0
      %v1253 = vsel %vm1244, %v1237, 0
      %v1255 = vsel %vm1244, %v1239, 0
      %v1257 = vsel %vm1244, %v1241, 0
      %v1259 = vsel %vm1244, %v1243, 0
      %1261 = vmatprep.subr.mxu0 0.0
      %1262 = vmatpush1.xpose.msra.mxu0 %v1253
      %1263 = vmatprep.subr.mxu0 0.0
      %1264 = vmatpush1.xpose.msra.mxu0 %v1255
      %1265 = vmatprep.subr.mxu0 0.0
      %1266 = vmatpush1.xpose.msra.mxu0 %v1257
      %1267 = vmatprep.subr.mxu0 0.0
      %1268 = vmatpush1.xpose.msra.mxu0 %v1259
      %1269 = vmatprep.subr.mxu0 0.0
      %1270 = vmatpush1.xpose.msra.mxu0 0.0
      %1271 = vmatprep.subr.mxu0 0.0
      %1272 = vmatpush1.xpose.msra.mxu0 0.0
      %1273 = vmatprep.subr.mxu0 0.0
      %1274 = vmatpush1.xpose.msra.mxu0 0.0
      %1275 = vmatprep.subr.mxu0 0.0
      %1276 = vmatpush1.xpose.msra.mxu0 0.0
      %1277 = vmatprep.subr.mxu0 0.0
      %1278 = vmatpush1.xpose.msra.mxu0 0.0
      %1279 = vmatprep.subr.mxu0 0.0
      %1280 = vmatpush1.xpose.msra.mxu0 0.0
      %1281 = vmatprep.subr.mxu0 0.0
      %1282 = vmatpush1.xpose.msra.mxu0 0.0
      %1283 = vmatprep.subr.mxu0 0.0
      %1284 = vmatpush1.xpose.msra.mxu0 0.0
      %1285 = vmatprep.subr.mxu0 0.0
      %1286 = vmatpush1.xpose.msra.mxu0 0.0
      %1287 = vmatprep.subr.mxu0 0.0
      %1288 = vmatpush1.xpose.msra.mxu0 0.0
      %1289 = vmatprep.subr.mxu0 0.0
      %1290 = vmatpush1.xpose.msra.mxu0 0.0
      %1291 = vmatprep.subr.mxu0 0.0
      %1292 = vmatpush1.xpose.msra.mxu0 0.0
      %1293 = vmatprep.subr.mxu0 0.0
      %1294 = vmatpush1.xpose.msra.mxu0 0.0
      %1295 = vmatprep.subr.mxu0 0.0
      %1296 = vmatpush1.xpose.msra.mxu0 0.0
      %1297 = vmatprep.subr.mxu0 0.0
      %1298 = vmatpush1.xpose.msra.mxu0 0.0
      %1299 = vmatprep.subr.mxu0 0.0
      %1300 = vmatpush1.xpose.msra.mxu0 0.0
      %1301 = vmatprep.subr.mxu0 0.0
      %1302 = vmatpush1.xpose.msra.mxu0 0.0
      %1303 = vmatprep.subr.mxu0 0.0
      %1304 = vmatpush1.xpose.msra.mxu0 0.0
      %1305 = vmatprep.subr.mxu0 0.0
      %1306 = vmatpush1.xpose.msra.mxu0 0.0
      %1307 = vmatprep.subr.mxu0 0.0
      %1308 = vmatpush1.xpose.msra.mxu0 0.0
      %1309 = vmatprep.subr.mxu0 0.0
      %1310 = vmatpush1.xpose.msra.mxu0 0.0
      %1311 = vmatprep.subr.mxu0 0.0
      %1312 = vmatpush1.xpose.msra.mxu0 0.0
      %1313 = vmatprep.subr.mxu0 0.0
      %1314 = vmatpush1.xpose.msra.mxu0 0.0
      %1315 = vmatprep.subr.mxu0 0.0
      %1316 = vmatpush1.xpose.msra.mxu0 0.0
      %1317 = vmatprep.subr.mxu0 0.0
      %1318 = vmatpush1.xpose.msra.mxu0 0.0
      %1319 = vmatprep.subr.mxu0 0.0
      %1320 = vmatpush1.xpose.msra.mxu0 0.0
      %1321 = vmatprep.subr.mxu0 0.0
      %1322 = vmatpush1.xpose.msra.mxu0 0.0
      %1323 = vmatprep.subr.mxu0 0.0
      %1324 = vmatpush1.xpose.msra.mxu0 0.0
      %1325 = vmatprep.mubr.f32.mxu0 0.0
      %1326 = vmatmul.mubr.f32.gmra.mrb[0].mxu0 %v1245
      %v1327 = vpop.f32.mrb[0].mxu0
      %v1328 = vadd.f32 %v991, %v1327
      %v1329 = vpop.f32.mrb[0].mxu0
      %1330 = vmatprep.mubr.f32.mxu0 0.0
      %1331 = vmatmul.mubr.f32.gmra.mrb[0].mxu0 %v1247
      %v1332 = vpop.f32.mrb[0].mxu0
      %v1333 = vadd.f32 %v992, %v1332
      %v1334 = vpop.f32.mrb[0].mxu0
      %1335 = vmatprep.mubr.f32.mxu0 0.0
      %1336 = vmatmul.mubr.f32.gmra.mrb[0].mxu0 %v1249
      %v1337 = vpop.f32.mrb[0].mxu0
      %v1338 = vadd.f32 %v993, %v1337
      %v1339 = vpop.f32.mrb[0].mxu0
      %1340 = vmatprep.mubr.f32.mxu0 0.0
      %1341 = vmatmul.mubr.f32.gmra.mrb[0].mxu0 %v1251
      %v1342 = vpop.f32.mrb[0].mxu0
      %v1343 = vadd.f32 %v994, %v1342
      %v1344 = vpop.f32.mrb[0].mxu0
      %1345 = vdwg.mxu0
      %1350 = vrot.lane.b32.xlu0 %v1214, 96
      %v1351 = vpop.permute.xlu0 %1350
      %1352 = vrot.lane.b32.xlu0 %v1219, 96
      %v1353 = vpop.permute.xlu0 %1352
      %1354 = vrot.lane.b32.xlu0 %v1224, 96
      %v1355 = vpop.permute.xlu0 %1354
      %1356 = vrot.lane.b32.xlu0 %v1229, 96
      %v1357 = vpop.permute.xlu0 %1356
      %v1358 = vsel %vm1244, %v1214, 0
      %v1360 = vsel %vm1244, %v1219, 0
      %v1362 = vsel %vm1244, %v1224, 0
      %v1364 = vsel %vm1244, %v1229, 0
      %v1366 = vsel %vm1244, %v1351, 0
      %v1368 = vsel %vm1244, %v1353, 0
      %v1370 = vsel %vm1244, %v1355, 0
      %v1372 = vsel %vm1244, %v1357, 0
      %1374 = vmatprep.subr.mxu0 0.0
      %1375 = vmatpush1.xpose.msra.mxu0 %v1366
      %1376 = vmatprep.subr.mxu0 0.0
      %1377 = vmatpush1.xpose.msra.mxu0 %v1368
      %1378 = vmatprep.subr.mxu0 0.0
      %1379 = vmatpush1.xpose.msra.mxu0 %v1370
      %1380 = vmatprep.subr.mxu0 0.0
      %1381 = vmatpush1.xpose.msra.mxu0 %v1372
      %1382 = vmatprep.subr.mxu0 0.0
      %1383 = vmatpush1.xpose.msra.mxu0 0.0
      %1384 = vmatprep.subr.mxu0 0.0
      %1385 = vmatpush1.xpose.msra.mxu0 0.0
      %1386 = vmatprep.subr.mxu0 0.0
      %1387 = vmatpush1.xpose.msra.mxu0 0.0
      %1388 = vmatprep.subr.mxu0 0.0
      %1389 = vmatpush1.xpose.msra.mxu0 0.0
      %1390 = vmatprep.subr.mxu0 0.0
      %1391 = vmatpush1.xpose.msra.mxu0 0.0
      %1392 = vmatprep.subr.mxu0 0.0
      %1393 = vmatpush1.xpose.msra.mxu0 0.0
      %1394 = vmatprep.subr.mxu0 0.0
      %1395 = vmatpush1.xpose.msra.mxu0 0.0
      %1396 = vmatprep.subr.mxu0 0.0
      %1397 = vmatpush1.xpose.msra.mxu0 0.0
      %1398 = vmatprep.subr.mxu0 0.0
      %1399 = vmatpush1.xpose.msra.mxu0 0.0
      %1400 = vmatprep.subr.mxu0 0.0
      %1401 = vmatpush1.xpose.msra.mxu0 0.0
      %1402 = vmatprep.subr.mxu0 0.0
      %1403 = vmatpush1.xpose.msra.mxu0 0.0
      %1404 = vmatprep.subr.mxu0 0.0
      %1405 = vmatpush1.xpose.msra.mxu0 0.0
      %1406 = vmatprep.subr.mxu0 0.0
      %1407 = vmatpush1.xpose.msra.mxu0 0.0
      %1408 = vmatprep.subr.mxu0 0.0
      %1409 = vmatpush1.xpose.msra.mxu0 0.0
      %1410 = vmatprep.subr.mxu0 0.0
      %1411 = vmatpush1.xpose.msra.mxu0 0.0
      %1412 = vmatprep.subr.mxu0 0.0
      %1413 = vmatpush1.xpose.msra.mxu0 0.0
      %1414 = vmatprep.subr.mxu0 0.0
      %1415 = vmatpush1.xpose.msra.mxu0 0.0
      %1416 = vmatprep.subr.mxu0 0.0
      %1417 = vmatpush1.xpose.msra.mxu0 0.0
      %1418 = vmatprep.subr.mxu0 0.0
      %1419 = vmatpush1.xpose.msra.mxu0 0.0
      %1420 = vmatprep.subr.mxu0 0.0
      %1421 = vmatpush1.xpose.msra.mxu0 0.0
      %1422 = vmatprep.subr.mxu0 0.0
      %1423 = vmatpush1.xpose.msra.mxu0 0.0
      %1424 = vmatprep.subr.mxu0 0.0
      %1425 = vmatpush1.xpose.msra.mxu0 0.0
      %1426 = vmatprep.subr.mxu0 0.0
      %1427 = vmatpush1.xpose.msra.mxu0 0.0
      %1428 = vmatprep.subr.mxu0 0.0
      %1429 = vmatpush1.xpose.msra.mxu0 0.0
      %1430 = vmatprep.subr.mxu0 0.0
      %1431 = vmatpush1.xpose.msra.mxu0 0.0
      %1432 = vmatprep.subr.mxu0 0.0
      %1433 = vmatpush1.xpose.msra.mxu0 0.0
      %1434 = vmatprep.subr.mxu0 0.0
      %1435 = vmatpush1.xpose.msra.mxu0 0.0
      %1436 = vmatprep.subr.mxu0 0.0
      %1437 = vmatpush1.xpose.msra.mxu0 0.0
      %1438 = vmatprep.mubr.f32.mxu0 0.0
      %1439 = vmatmul.mubr.f32.gmra.mrb[0].mxu0 %v1358
      %v1440 = vpop.f32.mrb[0].mxu0
      %v1441 = vadd.f32 %v991, %v1440
      %v1442 = vpop.f32.mrb[0].mxu0
      %1443 = vmatprep.mubr.f32.mxu0 0.0
      %1444 = vmatmul.mubr.f32.gmra.mrb[0].mxu0 %v1360
      %v1445 = vpop.f32.mrb[0].mxu0
      %v1446 = vadd.f32 %v992, %v1445
      %v1447 = vpop.f32.mrb[0].mxu0
      %1448 = vmatprep.mubr.f32.mxu0 0.0
      %1449 = vmatmul.mubr.f32.gmra.mrb[0].mxu0 %v1362
      %v1450 = vpop.f32.mrb[0].mxu0
      %v1451 = vadd.f32 %v993, %v1450
      %v1452 = vpop.f32.mrb[0].mxu0
      %1453 = vmatprep.mubr.f32.mxu0 0.0
      %1454 = vmatmul.mubr.f32.gmra.mrb[0].mxu0 %v1364
      %v1455 = vpop.f32.mrb[0].mxu0
      %v1456 = vadd.f32 %v994, %v1455
      %v1457 = vpop.f32.mrb[0].mxu0
      %1458 = vdwg.mxu0
      %v1459 = vsel %vm1015, %v1328, -inf
      %1460 = vmax.xlane.f32.xlu0 %v1459
      %v1461 = vpop.xlane.xlu0 %1460
      %v1462 = vsel %vm1015, %v1333, -inf
      %1463 = vmax.xlane.f32.xlu0 %v1462
      %v1464 = vpop.xlane.xlu0 %1463
      %v1465 = vsel %vm1015, %v1338, -inf
      %1466 = vmax.xlane.f32.xlu0 %v1465
      %v1467 = vpop.xlane.xlu0 %1466
      %v1468 = vsel %vm1015, %v1343, -inf
      %1469 = vmax.xlane.f32.xlu0 %v1468
      %v1470 = vpop.xlane.xlu0 %1469
      %v1471 = vsel %vm1015, %v1441, -inf
      %1472 = vmax.xlane.f32.xlu0 %v1471
      %v1473 = vpop.xlane.xlu0 %1472
      %v1474 = vsel %vm1015, %v1446, -inf
      %1475 = vmax.xlane.f32.xlu0 %v1474
      %v1476 = vpop.xlane.xlu0 %1475
      %v1477 = vsel %vm1015, %v1451, -inf
      %1478 = vmax.xlane.f32.xlu0 %v1477
      %v1479 = vpop.xlane.xlu0 %1478
      %v1480 = vsel %vm1015, %v1456, -inf
      %1481 = vmax.xlane.f32.xlu0 %v1480
      %v1482 = vpop.xlane.xlu0 %1481
      %v1483 = vsub.f32 %v1328, %v1461
      %v1484 = vsub.f32 %v1333, %v1464
      %v1485 = vsub.f32 %v1338, %v1467
      %v1486 = vsub.f32 %v1343, %v1470
      %v1487 = vsub.f32 %v1441, %v1473
      %v1488 = vsub.f32 %v1446, %v1476
      %v1489 = vsub.f32 %v1451, %v1479
      %v1490 = vsub.f32 %v1456, %v1482
      %v1491 = vmul.f32 %v1483, 1.442695
      %v1492 = vpow.pop %v1491
      %v1493 = vmul.f32 %v1484, 1.442695
      %v1494 = vpow.pop %v1493
      %v1495 = vmul.f32 %v1485, 1.442695
      %v1496 = vpow.pop %v1495
      %v1497 = vmul.f32 %v1486, 1.442695
      %v1498 = vpow.pop %v1497
      %v1499 = vmul.f32 %v1487, 1.442695
      %v1500 = vpow.pop %v1499
      %v1501 = vmul.f32 %v1488, 1.442695
      %v1502 = vpow.pop %v1501
      %v1503 = vmul.f32 %v1489, 1.442695
      %v1504 = vpow.pop %v1503
      %v1505 = vmul.f32 %v1490, 1.442695
      %v1506 = vpow.pop %v1505
      %v1507 = vsel %vm1015, %v1492, 0.0
      %1508 = vadd.xlane.f32.xlu0 %v1507
      %v1509 = vpop.xlane.xlu0 %1508
      %v1510 = vsel %vm1015, %v1494, 0.0
      %1511 = vadd.xlane.f32.xlu0 %v1510
      %v1512 = vpop.xlane.xlu0 %1511
      %v1513 = vsel %vm1015, %v1496, 0.0
      %1514 = vadd.xlane.f32.xlu0 %v1513
      %v1515 = vpop.xlane.xlu0 %1514
      %v1516 = vsel %vm1015, %v1498, 0.0
      %1517 = vadd.xlane.f32.xlu0 %v1516
      %v1518 = vpop.xlane.xlu0 %1517
      %v1519 = vsel %vm1015, %v1500, 0.0
      %1520 = vadd.xlane.f32.xlu0 %v1519
      %v1521 = vpop.xlane.xlu0 %1520
      %v1522 = vsel %vm1015, %v1502, 0.0
      %1523 = vadd.xlane.f32.xlu0 %v1522
      %v1524 = vpop.xlane.xlu0 %1523
      %v1525 = vsel %vm1015, %v1504, 0.0
      %1526 = vadd.xlane.f32.xlu0 %v1525
      %v1527 = vpop.xlane.xlu0 %1526
      %v1528 = vsel %vm1015, %v1506, 0.0
      %1529 = vadd.xlane.f32.xlu0 %v1528
      %v1530 = vpop.xlane.xlu0 %1529
      %v1531 = vrcp.pop %v1509
      %v1532 = vmul.f32 %v1492, %v1531
      %v1533 = vrcp.pop %v1512
      %v1534 = vmul.f32 %v1494, %v1533
      %v1535 = vrcp.pop %v1515
      %v1536 = vmul.f32 %v1496, %v1535
      %v1537 = vrcp.pop %v1518
      %v1538 = vmul.f32 %v1498, %v1537
      %v1539 = vrcp.pop %v1521
      %v1540 = vmul.f32 %v1500, %v1539
      %v1541 = vrcp.pop %v1524
      %v1542 = vmul.f32 %v1502, %v1541
      %v1543 = vrcp.pop %v1527
      %v1544 = vmul.f32 %v1504, %v1543
      %v1545 = vrcp.pop %v1530
      %v1546 = vmul.f32 %v1506, %v1545
      %1547 = vrot.lane.b32.xlu0 %v1194, 64
      %v1548 = vpop.permute.xlu0 %1547
      %1549 = vrot.lane.b32.xlu0 %v1199, 64
      %v1550 = vpop.permute.xlu0 %1549
      %1551 = vrot.lane.b32.xlu0 %v1204, 64
      %v1552 = vpop.permute.xlu0 %1551
      %1553 = vrot.lane.b32.xlu0 %v1209, 64
      %v1554 = vpop.permute.xlu0 %1553
      %v1560 = vsel %vm1015, %v1532, 0
      %v1563 = vsel %vm1015, %v1534, 0
      %v1566 = vsel %vm1015, %v1536, 0
      %v1569 = vsel %vm1015, %v1538, 0
      %1571 = vmatprep.subr.mxu0 0.0
      %1572 = vmatpush1.msra.mxu0 %v1548
      %1573 = vmatprep.subr.mxu0 0.0
      %1574 = vmatpush1.msra.mxu0 %v1550
      %1575 = vmatprep.subr.mxu0 0.0
      %1576 = vmatpush1.msra.mxu0 %v1552
      %1577 = vmatprep.subr.mxu0 0.0
      %1578 = vmatpush1.msra.mxu0 %v1554
      %1579 = vmatprep.subr.mxu0 0.0
      %1580 = vmatpush1.msra.mxu0 0.0
      %1581 = vmatprep.subr.mxu0 0.0
      %1582 = vmatpush1.msra.mxu0 0.0
      %1583 = vmatprep.subr.mxu0 0.0
      %1584 = vmatpush1.msra.mxu0 0.0
      %1585 = vmatprep.subr.mxu0 0.0
      %1586 = vmatpush1.msra.mxu0 0.0
      %1587 = vmatprep.subr.mxu0 0.0
      %1588 = vmatpush1.msra.mxu0 0.0
      %1589 = vmatprep.subr.mxu0 0.0
      %1590 = vmatpush1.msra.mxu0 0.0
      %1591 = vmatprep.subr.mxu0 0.0
      %1592 = vmatpush1.msra.mxu0 0.0
      %1593 = vmatprep.subr.mxu0 0.0
      %1594 = vmatpush1.msra.mxu0 0.0
      %1595 = vmatprep.subr.mxu0 0.0
      %1596 = vmatpush1.msra.mxu0 0.0
      %1597 = vmatprep.subr.mxu0 0.0
      %1598 = vmatpush1.msra.mxu0 0.0
      %1599 = vmatprep.subr.mxu0 0.0
      %1600 = vmatpush1.msra.mxu0 0.0
      %1601 = vmatprep.subr.mxu0 0.0
      %1602 = vmatpush1.msra.mxu0 0.0
      %1603 = vmatprep.subr.mxu0 0.0
      %1604 = vmatpush1.msra.mxu0 0.0
      %1605 = vmatprep.subr.mxu0 0.0
      %1606 = vmatpush1.msra.mxu0 0.0
      %1607 = vmatprep.subr.mxu0 0.0
      %1608 = vmatpush1.msra.mxu0 0.0
      %1609 = vmatprep.subr.mxu0 0.0
      %1610 = vmatpush1.msra.mxu0 0.0
      %1611 = vmatprep.subr.mxu0 0.0
      %1612 = vmatpush1.msra.mxu0 0.0
      %1613 = vmatprep.subr.mxu0 0.0
      %1614 = vmatpush1.msra.mxu0 0.0
      %1615 = vmatprep.subr.mxu0 0.0
      %1616 = vmatpush1.msra.mxu0 0.0
      %1617 = vmatprep.subr.mxu0 0.0
      %1618 = vmatpush1.msra.mxu0 0.0
      %1619 = vmatprep.subr.mxu0 0.0
      %1620 = vmatpush1.msra.mxu0 0.0
      %1621 = vmatprep.subr.mxu0 0.0
      %1622 = vmatpush1.msra.mxu0 0.0
      %1623 = vmatprep.subr.mxu0 0.0
      %1624 = vmatpush1.msra.mxu0 0.0
      %1625 = vmatprep.subr.mxu0 0.0
      %1626 = vmatpush1.msra.mxu0 0.0
      %1627 = vmatprep.subr.mxu0 0.0
      %1628 = vmatpush1.msra.mxu0 0.0
      %1629 = vmatprep.subr.mxu0 0.0
      %1630 = vmatpush1.msra.mxu0 0.0
      %1631 = vmatprep.subr.mxu0 0.0
      %1632 = vmatpush1.msra.mxu0 0.0
      %1633 = vmatprep.subr.mxu0 0.0
      %1634 = vmatpush1.msra.mxu0 0.0
      %1635 = vmatprep.mubr.f32.mxu0 0.0
      %1636 = vmatmul.mubr.f32.gmra.mrb[0].mxu0 %v1560
      %v1637 = vpop.f32.mrb[0].mxu0
      %v1638 = vadd.f32 0.0, %v1637
      %v1639 = vpop.f32.mrb[0].mxu0
      %1640 = vmatprep.mubr.f32.mxu0 0.0
      %1641 = vmatmul.mubr.f32.gmra.mrb[0].mxu0 %v1563
      %v1642 = vpop.f32.mrb[0].mxu0
      %v1643 = vadd.f32 0.0, %v1642
      %v1644 = vpop.f32.mrb[0].mxu0
      %1645 = vmatprep.mubr.f32.mxu0 0.0
      %1646 = vmatmul.mubr.f32.gmra.mrb[0].mxu0 %v1566
      %v1647 = vpop.f32.mrb[0].mxu0
      %v1648 = vadd.f32 0.0, %v1647
      %v1649 = vpop.f32.mrb[0].mxu0
      %1650 = vmatprep.mubr.f32.mxu0 0.0
      %1651 = vmatmul.mubr.f32.gmra.mrb[0].mxu0 %v1569
      %v1652 = vpop.f32.mrb[0].mxu0
      %v1653 = vadd.f32 0.0, %v1652
      %v1654 = vpop.f32.mrb[0].mxu0
      %1655 = vdwg.mxu0
      %1656 = vrot.lane.b32.xlu0 %v1214, 64
      %v1657 = vpop.permute.xlu0 %1656
      %1658 = vrot.lane.b32.xlu0 %v1219, 64
      %v1659 = vpop.permute.xlu0 %1658
      %1660 = vrot.lane.b32.xlu0 %v1224, 64
      %v1661 = vpop.permute.xlu0 %1660
      %1662 = vrot.lane.b32.xlu0 %v1229, 64
      %v1663 = vpop.permute.xlu0 %1662
      %v1669 = vsel %vm1015, %v1540, 0
      %v1672 = vsel %vm1015, %v1542, 0
      %v1675 = vsel %vm1015, %v1544, 0
      %v1678 = vsel %vm1015, %v1546, 0
      %1680 = vmatprep.subr.mxu0 0.0
      %1681 = vmatpush1.msra.mxu0 %v1657
      %1682 = vmatprep.subr.mxu0 0.0
      %1683 = vmatpush1.msra.mxu0 %v1659
      %1684 = vmatprep.subr.mxu0 0.0
      %1685 = vmatpush1.msra.mxu0 %v1661
      %1686 = vmatprep.subr.mxu0 0.0
      %1687 = vmatpush1.msra.mxu0 %v1663
      %1688 = vmatprep.subr.mxu0 0.0
      %1689 = vmatpush1.msra.mxu0 0.0
      %1690 = vmatprep.subr.mxu0 0.0
      %1691 = vmatpush1.msra.mxu0 0.0
      %1692 = vmatprep.subr.mxu0 0.0
      %1693 = vmatpush1.msra.mxu0 0.0
      %1694 = vmatprep.subr.mxu0 0.0
      %1695 = vmatpush1.msra.mxu0 0.0
      %1696 = vmatprep.subr.mxu0 0.0
      %1697 = vmatpush1.msra.mxu0 0.0
      %1698 = vmatprep.subr.mxu0 0.0
      %1699 = vmatpush1.msra.mxu0 0.0
      %1700 = vmatprep.subr.mxu0 0.0
      %1701 = vmatpush1.msra.mxu0 0.0
      %1702 = vmatprep.subr.mxu0 0.0
      %1703 = vmatpush1.msra.mxu0 0.0
      %1704 = vmatprep.subr.mxu0 0.0
      %1705 = vmatpush1.msra.mxu0 0.0
      %1706 = vmatprep.subr.mxu0 0.0
      %1707 = vmatpush1.msra.mxu0 0.0
      %1708 = vmatprep.subr.mxu0 0.0
      %1709 = vmatpush1.msra.mxu0 0.0
      %1710 = vmatprep.subr.mxu0 0.0
      %1711 = vmatpush1.msra.mxu0 0.0
      %1712 = vmatprep.subr.mxu0 0.0
      %1713 = vmatpush1.msra.mxu0 0.0
      %1714 = vmatprep.subr.mxu0 0.0
      %1715 = vmatpush1.msra.mxu0 0.0
      %1716 = vmatprep.subr.mxu0 0.0
      %1717 = vmatpush1.msra.mxu0 0.0
      %1718 = vmatprep.subr.mxu0 0.0
      %1719 = vmatpush1.msra.mxu0 0.0
      %1720 = vmatprep.subr.mxu0 0.0
      %1721 = vmatpush1.msra.mxu0 0.0
      %1722 = vmatprep.subr.mxu0 0.0
      %1723 = vmatpush1.msra.mxu0 0.0
      %1724 = vmatprep.subr.mxu0 0.0
      %1725 = vmatpush1.msra.mxu0 0.0
      %1726 = vmatprep.subr.mxu0 0.0
      %1727 = vmatpush1.msra.mxu0 0.0
      %1728 = vmatprep.subr.mxu0 0.0
      %1729 = vmatpush1.msra.mxu0 0.0
      %1730 = vmatprep.subr.mxu0 0.0
      %1731 = vmatpush1.msra.mxu0 0.0
      %1732 = vmatprep.subr.mxu0 0.0
      %1733 = vmatpush1.msra.mxu0 0.0
      %1734 = vmatprep.subr.mxu0 0.0
      %1735 = vmatpush1.msra.mxu0 0.0
      %1736 = vmatprep.subr.mxu0 0.0
      %1737 = vmatpush1.msra.mxu0 0.0
      %1738 = vmatprep.subr.mxu0 0.0
      %1739 = vmatpush1.msra.mxu0 0.0
      %1740 = vmatprep.subr.mxu0 0.0
      %1741 = vmatpush1.msra.mxu0 0.0
      %1742 = vmatprep.subr.mxu0 0.0
      %1743 = vmatpush1.msra.mxu0 0.0
      %1744 = vmatprep.mubr.f32.mxu0 0.0
      %1745 = vmatmul.mubr.f32.gmra.mrb[0].mxu0 %v1669
      %v1746 = vpop.f32.mrb[0].mxu0
      %v1747 = vadd.f32 0.0, %v1746
      %v1748 = vpop.f32.mrb[0].mxu0
      %1749 = vmatprep.mubr.f32.mxu0 0.0
      %1750 = vmatmul.mubr.f32.gmra.mrb[0].mxu0 %v1672
      %v1751 = vpop.f32.mrb[0].mxu0
      %v1752 = vadd.f32 0.0, %v1751
      %v1753 = vpop.f32.mrb[0].mxu0
      %1754 = vmatprep.mubr.f32.mxu0 0.0
      %1755 = vmatmul.mubr.f32.gmra.mrb[0].mxu0 %v1675
      %v1756 = vpop.f32.mrb[0].mxu0
      %v1757 = vadd.f32 0.0, %v1756
      %v1758 = vpop.f32.mrb[0].mxu0
      %1759 = vmatprep.mubr.f32.mxu0 0.0
      %1760 = vmatmul.mubr.f32.gmra.mrb[0].mxu0 %v1678
      %v1761 = vpop.f32.mrb[0].mxu0
      %v1762 = vadd.f32 0.0, %v1761
      %v1763 = vpop.f32.mrb[0].mxu0
      %1764 = vdwg.mxu0
      %1765 = vrot.lane.b32.xlu0 %v1194, 112
      %v1766 = vpop.permute.xlu0 %1765
      %1767 = vrot.lane.b32.xlu0 %v1199, 112
      %v1768 = vpop.permute.xlu0 %1767
      %1769 = vrot.lane.b32.xlu0 %v1204, 112
      %v1770 = vpop.permute.xlu0 %1769
      %1771 = vrot.lane.b32.xlu0 %v1209, 112
      %v1772 = vpop.permute.xlu0 %1771
      %1773 = vrot.lane.b32.xlu0 %v1194, 80
      %v1774 = vpop.permute.xlu0 %1773
      %1775 = vrot.lane.b32.xlu0 %v1199, 80
      %v1776 = vpop.permute.xlu0 %1775
      %1777 = vrot.lane.b32.xlu0 %v1204, 80
      %v1778 = vpop.permute.xlu0 %1777
      %1779 = vrot.lane.b32.xlu0 %v1209, 80
      %v1780 = vpop.permute.xlu0 %1779
      %v1781 = vsel %vm1244, %v1766, 0
      %v1783 = vsel %vm1244, %v1768, 0
      %v1785 = vsel %vm1244, %v1770, 0
      %v1787 = vsel %vm1244, %v1772, 0
      %v1789 = vsel %vm1244, %v1774, 0
      %v1791 = vsel %vm1244, %v1776, 0
      %v1793 = vsel %vm1244, %v1778, 0
      %v1795 = vsel %vm1244, %v1780, 0
      %1797 = vmatprep.subr.mxu0 0.0
      %1798 = vmatpush1.xpose.msra.mxu0 %v1789
      %1799 = vmatprep.subr.mxu0 0.0
      %1800 = vmatpush1.xpose.msra.mxu0 %v1791
      %1801 = vmatprep.subr.mxu0 0.0
      %1802 = vmatpush1.xpose.msra.mxu0 %v1793
      %1803 = vmatprep.subr.mxu0 0.0
      %1804 = vmatpush1.xpose.msra.mxu0 %v1795
      %1805 = vmatprep.subr.mxu0 0.0
      %1806 = vmatpush1.xpose.msra.mxu0 0.0
      %1807 = vmatprep.subr.mxu0 0.0
      %1808 = vmatpush1.xpose.msra.mxu0 0.0
      %1809 = vmatprep.subr.mxu0 0.0
      %1810 = vmatpush1.xpose.msra.mxu0 0.0
      %1811 = vmatprep.subr.mxu0 0.0
      %1812 = vmatpush1.xpose.msra.mxu0 0.0
      %1813 = vmatprep.subr.mxu0 0.0
      %1814 = vmatpush1.xpose.msra.mxu0 0.0
      %1815 = vmatprep.subr.mxu0 0.0
      %1816 = vmatpush1.xpose.msra.mxu0 0.0
      %1817 = vmatprep.subr.mxu0 0.0
      %1818 = vmatpush1.xpose.msra.mxu0 0.0
      %1819 = vmatprep.subr.mxu0 0.0
      %1820 = vmatpush1.xpose.msra.mxu0 0.0
      %1821 = vmatprep.subr.mxu0 0.0
      %1822 = vmatpush1.xpose.msra.mxu0 0.0
      %1823 = vmatprep.subr.mxu0 0.0
      %1824 = vmatpush1.xpose.msra.mxu0 0.0
      %1825 = vmatprep.subr.mxu0 0.0
      %1826 = vmatpush1.xpose.msra.mxu0 0.0
      %1827 = vmatprep.subr.mxu0 0.0
      %1828 = vmatpush1.xpose.msra.mxu0 0.0
      %1829 = vmatprep.subr.mxu0 0.0
      %1830 = vmatpush1.xpose.msra.mxu0 0.0
      %1831 = vmatprep.subr.mxu0 0.0
      %1832 = vmatpush1.xpose.msra.mxu0 0.0
      %1833 = vmatprep.subr.mxu0 0.0
      %1834 = vmatpush1.xpose.msra.mxu0 0.0
      %1835 = vmatprep.subr.mxu0 0.0
      %1836 = vmatpush1.xpose.msra.mxu0 0.0
      %1837 = vmatprep.subr.mxu0 0.0
      %1838 = vmatpush1.xpose.msra.mxu0 0.0
      %1839 = vmatprep.subr.mxu0 0.0
      %1840 = vmatpush1.xpose.msra.mxu0 0.0
      %1841 = vmatprep.subr.mxu0 0.0
      %1842 = vmatpush1.xpose.msra.mxu0 0.0
      %1843 = vmatprep.subr.mxu0 0.0
      %1844 = vmatpush1.xpose.msra.mxu0 0.0
      %1845 = vmatprep.subr.mxu0 0.0
      %1846 = vmatpush1.xpose.msra.mxu0 0.0
      %1847 = vmatprep.subr.mxu0 0.0
      %1848 = vmatpush1.xpose.msra.mxu0 0.0
      %1849 = vmatprep.subr.mxu0 0.0
      %1850 = vmatpush1.xpose.msra.mxu0 0.0
      %1851 = vmatprep.subr.mxu0 0.0
      %1852 = vmatpush1.xpose.msra.mxu0 0.0
      %1853 = vmatprep.subr.mxu0 0.0
      %1854 = vmatpush1.xpose.msra.mxu0 0.0
      %1855 = vmatprep.subr.mxu0 0.0
      %1856 = vmatpush1.xpose.msra.mxu0 0.0
      %1857 = vmatprep.subr.mxu0 0.0
      %1858 = vmatpush1.xpose.msra.mxu0 0.0
      %1859 = vmatprep.subr.mxu0 0.0
      %1860 = vmatpush1.xpose.msra.mxu0 0.0
      %1861 = vmatprep.mubr.f32.mxu0 0.0
      %1862 = vmatmul.mubr.f32.gmra.mrb[0].mxu0 %v1781
      %v1863 = vpop.f32.mrb[0].mxu0
      %v1864 = vadd.f32 %v995, %v1863
      %v1865 = vpop.f32.mrb[0].mxu0
      %1866 = vmatprep.mubr.f32.mxu0 0.0
      %1867 = vmatmul.mubr.f32.gmra.mrb[0].mxu0 %v1783
      %v1868 = vpop.f32.mrb[0].mxu0
      %v1869 = vadd.f32 %v996, %v1868
      %v1870 = vpop.f32.mrb[0].mxu0
      %1871 = vmatprep.mubr.f32.mxu0 0.0
      %1872 = vmatmul.mubr.f32.gmra.mrb[0].mxu0 %v1785
      %v1873 = vpop.f32.mrb[0].mxu0
      %v1874 = vadd.f32 %v997, %v1873
      %v1875 = vpop.f32.mrb[0].mxu0
      %1876 = vmatprep.mubr.f32.mxu0 0.0
      %1877 = vmatmul.mubr.f32.gmra.mrb[0].mxu0 %v1787
      %v1878 = vpop.f32.mrb[0].mxu0
      %v1879 = vadd.f32 %v998, %v1878
      %v1880 = vpop.f32.mrb[0].mxu0
      %1881 = vdwg.mxu0
      %1882 = vrot.lane.b32.xlu0 %v1214, 112
      %v1883 = vpop.permute.xlu0 %1882
      %1884 = vrot.lane.b32.xlu0 %v1219, 112
      %v1885 = vpop.permute.xlu0 %1884
      %1886 = vrot.lane.b32.xlu0 %v1224, 112
      %v1887 = vpop.permute.xlu0 %1886
      %1888 = vrot.lane.b32.xlu0 %v1229, 112
      %v1889 = vpop.permute.xlu0 %1888
      %1890 = vrot.lane.b32.xlu0 %v1214, 80
      %v1891 = vpop.permute.xlu0 %1890
      %1892 = vrot.lane.b32.xlu0 %v1219, 80
      %v1893 = vpop.permute.xlu0 %1892
      %1894 = vrot.lane.b32.xlu0 %v1224, 80
      %v1895 = vpop.permute.xlu0 %1894
      %1896 = vrot.lane.b32.xlu0 %v1229, 80
      %v1897 = vpop.permute.xlu0 %1896
      %v1898 = vsel %vm1244, %v1883, 0
      %v1900 = vsel %vm1244, %v1885, 0
      %v1902 = vsel %vm1244, %v1887, 0
      %v1904 = vsel %vm1244, %v1889, 0
      %v1906 = vsel %vm1244, %v1891, 0
      %v1908 = vsel %vm1244, %v1893, 0
      %v1910 = vsel %vm1244, %v1895, 0
      %v1912 = vsel %vm1244, %v1897, 0
      %1914 = vmatprep.subr.mxu0 0.0
      %1915 = vmatpush1.xpose.msra.mxu0 %v1906
      %1916 = vmatprep.subr.mxu0 0.0
      %1917 = vmatpush1.xpose.msra.mxu0 %v1908
      %1918 = vmatprep.subr.mxu0 0.0
      %1919 = vmatpush1.xpose.msra.mxu0 %v1910
      %1920 = vmatprep.subr.mxu0 0.0
      %1921 = vmatpush1.xpose.msra.mxu0 %v1912
      %1922 = vmatprep.subr.mxu0 0.0
      %1923 = vmatpush1.xpose.msra.mxu0 0.0
      %1924 = vmatprep.subr.mxu0 0.0
      %1925 = vmatpush1.xpose.msra.mxu0 0.0
      %1926 = vmatprep.subr.mxu0 0.0
      %1927 = vmatpush1.xpose.msra.mxu0 0.0
      %1928 = vmatprep.subr.mxu0 0.0
      %1929 = vmatpush1.xpose.msra.mxu0 0.0
      %1930 = vmatprep.subr.mxu0 0.0
      %1931 = vmatpush1.xpose.msra.mxu0 0.0
      %1932 = vmatprep.subr.mxu0 0.0
      %1933 = vmatpush1.xpose.msra.mxu0 0.0
      %1934 = vmatprep.subr.mxu0 0.0
      %1935 = vmatpush1.xpose.msra.mxu0 0.0
      %1936 = vmatprep.subr.mxu0 0.0
      %1937 = vmatpush1.xpose.msra.mxu0 0.0
      %1938 = vmatprep.subr.mxu0 0.0
      %1939 = vmatpush1.xpose.msra.mxu0 0.0
      %1940 = vmatprep.subr.mxu0 0.0
      %1941 = vmatpush1.xpose.msra.mxu0 0.0
      %1942 = vmatprep.subr.mxu0 0.0
      %1943 = vmatpush1.xpose.msra.mxu0 0.0
      %1944 = vmatprep.subr.mxu0 0.0
      %1945 = vmatpush1.xpose.msra.mxu0 0.0
      %1946 = vmatprep.subr.mxu0 0.0
      %1947 = vmatpush1.xpose.msra.mxu0 0.0
      %1948 = vmatprep.subr.mxu0 0.0
      %1949 = vmatpush1.xpose.msra.mxu0 0.0
      %1950 = vmatprep.subr.mxu0 0.0
      %1951 = vmatpush1.xpose.msra.mxu0 0.0
      %1952 = vmatprep.subr.mxu0 0.0
      %1953 = vmatpush1.xpose.msra.mxu0 0.0
      %1954 = vmatprep.subr.mxu0 0.0
      %1955 = vmatpush1.xpose.msra.mxu0 0.0
      %1956 = vmatprep.subr.mxu0 0.0
      %1957 = vmatpush1.xpose.msra.mxu0 0.0
      %1958 = vmatprep.subr.mxu0 0.0
      %1959 = vmatpush1.xpose.msra.mxu0 0.0
      %1960 = vmatprep.subr.mxu0 0.0
      %1961 = vmatpush1.xpose.msra.mxu0 0.0
      %1962 = vmatprep.subr.mxu0 0.0
      %1963 = vmatpush1.xpose.msra.mxu0 0.0
      %1964 = vmatprep.subr.mxu0 0.0
      %1965 = vmatpush1.xpose.msra.mxu0 0.0
      %1966 = vmatprep.subr.mxu0 0.0
      %1967 = vmatpush1.xpose.msra.mxu0 0.0
      %1968 = vmatprep.subr.mxu0 0.0
      %1969 = vmatpush1.xpose.msra.mxu0 0.0
      %1970 = vmatprep.subr.mxu0 0.0
      %1971 = vmatpush1.xpose.msra.mxu0 0.0
      %1972 = vmatprep.subr.mxu0 0.0
      %1973 = vmatpush1.xpose.msra.mxu0 0.0
      %1974 = vmatprep.subr.mxu0 0.0
      %1975 = vmatpush1.xpose.msra.mxu0 0.0
      %1976 = vmatprep.subr.mxu0 0.0
      %1977 = vmatpush1.xpose.msra.mxu0 0.0
      %1978 = vmatprep.mubr.f32.mxu0 0.0
      %1979 = vmatmul.mubr.f32.gmra.mrb[0].mxu0 %v1898
      %v1980 = vpop.f32.mrb[0].mxu0
      %v1981 = vadd.f32 %v995, %v1980
      %v1982 = vpop.f32.mrb[0].mxu0
      %1983 = vmatprep.mubr.f32.mxu0 0.0
      %1984 = vmatmul.mubr.f32.gmra.mrb[0].mxu0 %v1900
      %v1985 = vpop.f32.mrb[0].mxu0
      %v1986 = vadd.f32 %v996, %v1985
      %v1987 = vpop.f32.mrb[0].mxu0
      %1988 = vmatprep.mubr.f32.mxu0 0.0
      %1989 = vmatmul.mubr.f32.gmra.mrb[0].mxu0 %v1902
      %v1990 = vpop.f32.mrb[0].mxu0
      %v1991 = vadd.f32 %v997, %v1990
      %v1992 = vpop.f32.mrb[0].mxu0
      %1993 = vmatprep.mubr.f32.mxu0 0.0
      %1994 = vmatmul.mubr.f32.gmra.mrb[0].mxu0 %v1904
      %v1995 = vpop.f32.mrb[0].mxu0
      %v1996 = vadd.f32 %v998, %v1995
      %v1997 = vpop.f32.mrb[0].mxu0
      %1998 = vdwg.mxu0
      %v1999 = vsel %vm1015, %v1864, -inf
      %2000 = vmax.xlane.f32.xlu0 %v1999
      %v2001 = vpop.xlane.xlu0 %2000
      %v2002 = vsel %vm1015, %v1869, -inf
      %2003 = vmax.xlane.f32.xlu0 %v2002
      %v2004 = vpop.xlane.xlu0 %2003
      %v2005 = vsel %vm1015, %v1874, -inf
      %2006 = vmax.xlane.f32.xlu0 %v2005
      %v2007 = vpop.xlane.xlu0 %2006
      %v2008 = vsel %vm1015, %v1879, -inf
      %2009 = vmax.xlane.f32.xlu0 %v2008
      %v2010 = vpop.xlane.xlu0 %2009
      %v2011 = vsel %vm1015, %v1981, -inf
      %2012 = vmax.xlane.f32.xlu0 %v2011
      %v2013 = vpop.xlane.xlu0 %2012
      %v2014 = vsel %vm1015, %v1986, -inf
      %2015 = vmax.xlane.f32.xlu0 %v2014
      %v2016 = vpop.xlane.xlu0 %2015
      %v2017 = vsel %vm1015, %v1991, -inf
      %2018 = vmax.xlane.f32.xlu0 %v2017
      %v2019 = vpop.xlane.xlu0 %2018
      %v2020 = vsel %vm1015, %v1996, -inf
      %2021 = vmax.xlane.f32.xlu0 %v2020
      %v2022 = vpop.xlane.xlu0 %2021
      %v2023 = vsub.f32 %v1864, %v2001
      %v2024 = vsub.f32 %v1869, %v2004
      %v2025 = vsub.f32 %v1874, %v2007
      %v2026 = vsub.f32 %v1879, %v2010
      %v2027 = vsub.f32 %v1981, %v2013
      %v2028 = vsub.f32 %v1986, %v2016
      %v2029 = vsub.f32 %v1991, %v2019
      %v2030 = vsub.f32 %v1996, %v2022
      %v2031 = vmul.f32 %v2023, 1.442695
      %v2032 = vpow.pop %v2031
      %v2033 = vmul.f32 %v2024, 1.442695
      %v2034 = vpow.pop %v2033
      %v2035 = vmul.f32 %v2025, 1.442695
      %v2036 = vpow.pop %v2035
      %v2037 = vmul.f32 %v2026, 1.442695
      %v2038 = vpow.pop %v2037
      %v2039 = vmul.f32 %v2027, 1.442695
      %v2040 = vpow.pop %v2039
      %v2041 = vmul.f32 %v2028, 1.442695
      %v2042 = vpow.pop %v2041
      %v2043 = vmul.f32 %v2029, 1.442695
      %v2044 = vpow.pop %v2043
      %v2045 = vmul.f32 %v2030, 1.442695
      %v2046 = vpow.pop %v2045
      %v2047 = vsel %vm1015, %v2032, 0.0
      %2048 = vadd.xlane.f32.xlu0 %v2047
      %v2049 = vpop.xlane.xlu0 %2048
      %v2050 = vsel %vm1015, %v2034, 0.0
      %2051 = vadd.xlane.f32.xlu0 %v2050
      %v2052 = vpop.xlane.xlu0 %2051
      %v2053 = vsel %vm1015, %v2036, 0.0
      %2054 = vadd.xlane.f32.xlu0 %v2053
      %v2055 = vpop.xlane.xlu0 %2054
      %v2056 = vsel %vm1015, %v2038, 0.0
      %2057 = vadd.xlane.f32.xlu0 %v2056
      %v2058 = vpop.xlane.xlu0 %2057
      %v2059 = vsel %vm1015, %v2040, 0.0
      %2060 = vadd.xlane.f32.xlu0 %v2059
      %v2061 = vpop.xlane.xlu0 %2060
      %v2062 = vsel %vm1015, %v2042, 0.0
      %2063 = vadd.xlane.f32.xlu0 %v2062
      %v2064 = vpop.xlane.xlu0 %2063
      %v2065 = vsel %vm1015, %v2044, 0.0
      %2066 = vadd.xlane.f32.xlu0 %v2065
      %v2067 = vpop.xlane.xlu0 %2066
      %v2068 = vsel %vm1015, %v2046, 0.0
      %2069 = vadd.xlane.f32.xlu0 %v2068
      %v2070 = vpop.xlane.xlu0 %2069
      %v2071 = vrcp.pop %v2049
      %v2072 = vmul.f32 %v2032, %v2071
      %v2073 = vrcp.pop %v2052
      %v2074 = vmul.f32 %v2034, %v2073
      %v2075 = vrcp.pop %v2055
      %v2076 = vmul.f32 %v2036, %v2075
      %v2077 = vrcp.pop %v2058
      %v2078 = vmul.f32 %v2038, %v2077
      %v2079 = vrcp.pop %v2061
      %v2080 = vmul.f32 %v2040, %v2079
      %v2081 = vrcp.pop %v2064
      %v2082 = vmul.f32 %v2042, %v2081
      %v2083 = vrcp.pop %v2067
      %v2084 = vmul.f32 %v2044, %v2083
      %v2085 = vrcp.pop %v2070
      %v2086 = vmul.f32 %v2046, %v2085
      %2087 = vrot.lane.b32.xlu0 %v1194, 48
      %v2088 = vpop.permute.xlu0 %2087
      %2089 = vrot.lane.b32.xlu0 %v1199, 48
      %v2090 = vpop.permute.xlu0 %2089
      %2091 = vrot.lane.b32.xlu0 %v1204, 48
      %v2092 = vpop.permute.xlu0 %2091
      %2093 = vrot.lane.b32.xlu0 %v1209, 48
      %v2094 = vpop.permute.xlu0 %2093
      %v2100 = vsel %vm1015, %v2072, 0
      %v2103 = vsel %vm1015, %v2074, 0
      %v2106 = vsel %vm1015, %v2076, 0
      %v2109 = vsel %vm1015, %v2078, 0
      %2111 = vmatprep.subr.mxu0 0.0
      %2112 = vmatpush1.msra.mxu0 %v2088
      %2113 = vmatprep.subr.mxu0 0.0
      %2114 = vmatpush1.msra.mxu0 %v2090
      %2115 = vmatprep.subr.mxu0 0.0
      %2116 = vmatpush1.msra.mxu0 %v2092
      %2117 = vmatprep.subr.mxu0 0.0
      %2118 = vmatpush1.msra.mxu0 %v2094
      %2119 = vmatprep.subr.mxu0 0.0
      %2120 = vmatpush1.msra.mxu0 0.0
      %2121 = vmatprep.subr.mxu0 0.0
      %2122 = vmatpush1.msra.mxu0 0.0
      %2123 = vmatprep.subr.mxu0 0.0
      %2124 = vmatpush1.msra.mxu0 0.0
      %2125 = vmatprep.subr.mxu0 0.0
      %2126 = vmatpush1.msra.mxu0 0.0
      %2127 = vmatprep.subr.mxu0 0.0
      %2128 = vmatpush1.msra.mxu0 0.0
      %2129 = vmatprep.subr.mxu0 0.0
      %2130 = vmatpush1.msra.mxu0 0.0
      %2131 = vmatprep.subr.mxu0 0.0
      %2132 = vmatpush1.msra.mxu0 0.0
      %2133 = vmatprep.subr.mxu0 0.0
      %2134 = vmatpush1.msra.mxu0 0.0
      %2135 = vmatprep.subr.mxu0 0.0
      %2136 = vmatpush1.msra.mxu0 0.0
      %2137 = vmatprep.subr.mxu0 0.0
      %2138 = vmatpush1.msra.mxu0 0.0
      %2139 = vmatprep.subr.mxu0 0.0
      %2140 = vmatpush1.msra.mxu0 0.0
      %2141 = vmatprep.subr.mxu0 0.0
      %2142 = vmatpush1.msra.mxu0 0.0
      %2143 = vmatprep.subr.mxu0 0.0
      %2144 = vmatpush1.msra.mxu0 0.0
      %2145 = vmatprep.subr.mxu0 0.0
      %2146 = vmatpush1.msra.mxu0 0.0
      %2147 = vmatprep.subr.mxu0 0.0
      %2148 = vmatpush1.msra.mxu0 0.0
      %2149 = vmatprep.subr.mxu0 0.0
      %2150 = vmatpush1.msra.mxu0 0.0
      %2151 = vmatprep.subr.mxu0 0.0
      %2152 = vmatpush1.msra.mxu0 0.0
      %2153 = vmatprep.subr.mxu0 0.0
      %2154 = vmatpush1.msra.mxu0 0.0
      %2155 = vmatprep.subr.mxu0 0.0
      %2156 = vmatpush1.msra.mxu0 0.0
      %2157 = vmatprep.subr.mxu0 0.0
      %2158 = vmatpush1.msra.mxu0 0.0
      %2159 = vmatprep.subr.mxu0 0.0
      %2160 = vmatpush1.msra.mxu0 0.0
      %2161 = vmatprep.subr.mxu0 0.0
      %2162 = vmatpush1.msra.mxu0 0.0
      %2163 = vmatprep.subr.mxu0 0.0
      %2164 = vmatpush1.msra.mxu0 0.0
      %2165 = vmatprep.subr.mxu0 0.0
      %2166 = vmatpush1.msra.mxu0 0.0
      %2167 = vmatprep.subr.mxu0 0.0
      %2168 = vmatpush1.msra.mxu0 0.0
      %2169 = vmatprep.subr.mxu0 0.0
      %2170 = vmatpush1.msra.mxu0 0.0
      %2171 = vmatprep.subr.mxu0 0.0
      %2172 = vmatpush1.msra.mxu0 0.0
      %2173 = vmatprep.subr.mxu0 0.0
      %2174 = vmatpush1.msra.mxu0 0.0
      %2175 = vmatprep.mubr.f32.mxu0 0.0
      %2176 = vmatmul.mubr.f32.gmra.mrb[0].mxu0 %v2100
      %v2177 = vpop.f32.mrb[0].mxu0
      %v2178 = vadd.f32 0.0, %v2177
      %v2179 = vpop.f32.mrb[0].mxu0
      %2180 = vmatprep.mubr.f32.mxu0 0.0
      %2181 = vmatmul.mubr.f32.gmra.mrb[0].mxu0 %v2103
      %v2182 = vpop.f32.mrb[0].mxu0
      %v2183 = vadd.f32 0.0, %v2182
      %v2184 = vpop.f32.mrb[0].mxu0
      %2185 = vmatprep.mubr.f32.mxu0 0.0
      %2186 = vmatmul.mubr.f32.gmra.mrb[0].mxu0 %v2106
      %v2187 = vpop.f32.mrb[0].mxu0
      %v2188 = vadd.f32 0.0, %v2187
      %v2189 = vpop.f32.mrb[0].mxu0
      %2190 = vmatprep.mubr.f32.mxu0 0.0
      %2191 = vmatmul.mubr.f32.gmra.mrb[0].mxu0 %v2109
      %v2192 = vpop.f32.mrb[0].mxu0
      %v2193 = vadd.f32 0.0, %v2192
      %v2194 = vpop.f32.mrb[0].mxu0
      %2195 = vdwg.mxu0
      %2196 = vrot.lane.b32.xlu0 %v1214, 48
      %v2197 = vpop.permute.xlu0 %2196
      %2198 = vrot.lane.b32.xlu0 %v1219, 48
      %v2199 = vpop.permute.xlu0 %2198
      %2200 = vrot.lane.b32.xlu0 %v1224, 48
      %v2201 = vpop.permute.xlu0 %2200
      %2202 = vrot.lane.b32.xlu0 %v1229, 48
      %v2203 = vpop.permute.xlu0 %2202
      %v2209 = vsel %vm1015, %v2080, 0
      %v2212 = vsel %vm1015, %v2082, 0
      %v2215 = vsel %vm1015, %v2084, 0
      %v2218 = vsel %vm1015, %v2086, 0
      %2220 = vmatprep.subr.mxu0 0.0
      %2221 = vmatpush1.msra.mxu0 %v2197
      %2222 = vmatprep.subr.mxu0 0.0
      %2223 = vmatpush1.msra.mxu0 %v2199
      %2224 = vmatprep.subr.mxu0 0.0
      %2225 = vmatpush1.msra.mxu0 %v2201
      %2226 = vmatprep.subr.mxu0 0.0
      %2227 = vmatpush1.msra.mxu0 %v2203
      %2228 = vmatprep.subr.mxu0 0.0
      %2229 = vmatpush1.msra.mxu0 0.0
      %2230 = vmatprep.subr.mxu0 0.0
      %2231 = vmatpush1.msra.mxu0 0.0
      %2232 = vmatprep.subr.mxu0 0.0
      %2233 = vmatpush1.msra.mxu0 0.0
      %2234 = vmatprep.subr.mxu0 0.0
      %2235 = vmatpush1.msra.mxu0 0.0
      %2236 = vmatprep.subr.mxu0 0.0
      %2237 = vmatpush1.msra.mxu0 0.0
      %2238 = vmatprep.subr.mxu0 0.0
      %2239 = vmatpush1.msra.mxu0 0.0
      %2240 = vmatprep.subr.mxu0 0.0
      %2241 = vmatpush1.msra.mxu0 0.0
      %2242 = vmatprep.subr.mxu0 0.0
      %2243 = vmatpush1.msra.mxu0 0.0
      %2244 = vmatprep.subr.mxu0 0.0
      %2245 = vmatpush1.msra.mxu0 0.0
      %2246 = vmatprep.subr.mxu0 0.0
      %2247 = vmatpush1.msra.mxu0 0.0
      %2248 = vmatprep.subr.mxu0 0.0
      %2249 = vmatpush1.msra.mxu0 0.0
      %2250 = vmatprep.subr.mxu0 0.0
      %2251 = vmatpush1.msra.mxu0 0.0
      %2252 = vmatprep.subr.mxu0 0.0
      %2253 = vmatpush1.msra.mxu0 0.0
      %2254 = vmatprep.subr.mxu0 0.0
      %2255 = vmatpush1.msra.mxu0 0.0
      %2256 = vmatprep.subr.mxu0 0.0
      %2257 = vmatpush1.msra.mxu0 0.0
      %2258 = vmatprep.subr.mxu0 0.0
      %2259 = vmatpush1.msra.mxu0 0.0
      %2260 = vmatprep.subr.mxu0 0.0
      %2261 = vmatpush1.msra.mxu0 0.0
      %2262 = vmatprep.subr.mxu0 0.0
      %2263 = vmatpush1.msra.mxu0 0.0
      %2264 = vmatprep.subr.mxu0 0.0
      %2265 = vmatpush1.msra.mxu0 0.0
      %2266 = vmatprep.subr.mxu0 0.0
      %2267 = vmatpush1.msra.mxu0 0.0
      %2268 = vmatprep.subr.mxu0 0.0
      %2269 = vmatpush1.msra.mxu0 0.0
      %2270 = vmatprep.subr.mxu0 0.0
      %2271 = vmatpush1.msra.mxu0 0.0
      %2272 = vmatprep.subr.mxu0 0.0
      %2273 = vmatpush1.msra.mxu0 0.0
      %2274 = vmatprep.subr.mxu0 0.0
      %2275 = vmatpush1.msra.mxu0 0.0
      %2276 = vmatprep.subr.mxu0 0.0
      %2277 = vmatpush1.msra.mxu0 0.0
      %2278 = vmatprep.subr.mxu0 0.0
      %2279 = vmatpush1.msra.mxu0 0.0
      %2280 = vmatprep.subr.mxu0 0.0
      %2281 = vmatpush1.msra.mxu0 0.0
      %2282 = vmatprep.subr.mxu0 0.0
      %2283 = vmatpush1.msra.mxu0 0.0
      %2284 = vmatprep.mubr.f32.mxu0 0.0
      %2285 = vmatmul.mubr.f32.gmra.mrb[0].mxu0 %v2209
      %v2286 = vpop.f32.mrb[0].mxu0
      %v2287 = vadd.f32 0.0, %v2286
      %v2288 = vpop.f32.mrb[0].mxu0
      %2289 = vmatprep.mubr.f32.mxu0 0.0
      %2290 = vmatmul.mubr.f32.gmra.mrb[0].mxu0 %v2212
      %v2291 = vpop.f32.mrb[0].mxu0
      %v2292 = vadd.f32 0.0, %v2291
      %v2293 = vpop.f32.mrb[0].mxu0
      %2294 = vmatprep.mubr.f32.mxu0 0.0
      %2295 = vmatmul.mubr.f32.gmra.mrb[0].mxu0 %v2215
      %v2296 = vpop.f32.mrb[0].mxu0
      %v2297 = vadd.f32 0.0, %v2296
      %v2298 = vpop.f32.mrb[0].mxu0
      %2299 = vmatprep.mubr.f32.mxu0 0.0
      %2300 = vmatmul.mubr.f32.gmra.mrb[0].mxu0 %v2218
      %v2301 = vpop.f32.mrb[0].mxu0
      %v2302 = vadd.f32 0.0, %v2301
      %v2303 = vpop.f32.mrb[0].mxu0
      %2304 = vdwg.mxu0
      %2313 = vrot.lane.b32.xlu0 %v2178, 16
      %v2314 = vpop.permute.xlu0 %2313
      %2315 = vrot.lane.b32.xlu0 %v2183, 16
      %v2316 = vpop.permute.xlu0 %2315
      %2317 = vrot.lane.b32.xlu0 %v2188, 16
      %v2318 = vpop.permute.xlu0 %2317
      %2319 = vrot.lane.b32.xlu0 %v2193, 16
      %v2320 = vpop.permute.xlu0 %2319
      %2321 = vrot.lane.b32.xlu0 %v2287, 16
      %v2322 = vpop.permute.xlu0 %2321
      %2323 = vrot.lane.b32.xlu0 %v2292, 16
      %v2324 = vpop.permute.xlu0 %2323
      %2325 = vrot.lane.b32.xlu0 %v2297, 16
      %v2326 = vpop.permute.xlu0 %2325
      %2327 = vrot.lane.b32.xlu0 %v2302, 16
      %v2328 = vpop.permute.xlu0 %2327
      %v2337 = vsel %vm1244, %v1638, %v2314
      %v2338 = vsel %vm1244, %v1643, %v2316
      %v2339 = vsel %vm1244, %v1648, %v2318
      %v2340 = vsel %vm1244, %v1653, %v2320
      %v2341 = vsel %vm1244, %v1747, %v2322
      %v2342 = vsel %vm1244, %v1752, %v2324
      %v2343 = vsel %vm1244, %v1757, %v2326
      %v2344 = vsel %vm1244, %v1762, %v2328
      %v2346 = vlaneseq
      %v2347 = vshrl.u32 %v2346, 7
      %v2348 = vsub.s32 0, %v2347
      %v2349 = vrot.slane %v1096, %v2348
      %v2352 = vsel %vm1015, %v2337, 0
      %v2355 = vsel %vm1015, %v2338, 0
      %v2358 = vsel %vm1015, %v2339, 0
      %v2361 = vsel %vm1015, %v2340, 0
      %v2364 = vsel %vm1015, %v2341, 0
      %v2367 = vsel %vm1015, %v2342, 0
      %v2370 = vsel %vm1015, %v2343, 0
      %v2373 = vsel %vm1015, %v2344, 0
      %2375 = vmatprep.subr.mxu0 0.0
      %2376 = vmatpush1.msra.mxu0 %v1092
      %2377 = vmatprep.subr.mxu0 0.0
      %2378 = vmatpush1.msra.mxu0 %v1093
      %2379 = vmatprep.subr.mxu0 0.0
      %2380 = vmatpush1.msra.mxu0 %v1094
      %2381 = vmatprep.subr.mxu0 0.0
      %2382 = vmatpush1.msra.mxu0 %v1095
      %2383 = vmatprep.subr.mxu0 0.0
      %2384 = vmatpush1.msra.mxu0 0.0
      %2385 = vmatprep.subr.mxu0 0.0
      %2386 = vmatpush1.msra.mxu0 0.0
      %2387 = vmatprep.subr.mxu0 0.0
      %2388 = vmatpush1.msra.mxu0 0.0
      %2389 = vmatprep.subr.mxu0 0.0
      %2390 = vmatpush1.msra.mxu0 0.0
      %2391 = vmatprep.subr.mxu0 0.0
      %2392 = vmatpush1.msra.mxu0 0.0
      %2393 = vmatprep.subr.mxu0 0.0
      %2394 = vmatpush1.msra.mxu0 0.0
      %2395 = vmatprep.subr.mxu0 0.0
      %2396 = vmatpush1.msra.mxu0 0.0
      %2397 = vmatprep.subr.mxu0 0.0
      %2398 = vmatpush1.msra.mxu0 0.0
      %2399 = vmatprep.subr.mxu0 0.0
      %2400 = vmatpush1.msra.mxu0 0.0
      %2401 = vmatprep.subr.mxu0 0.0
      %2402 = vmatpush1.msra.mxu0 0.0
      %2403 = vmatprep.subr.mxu0 0.0
      %2404 = vmatpush1.msra.mxu0 0.0
      %2405 = vmatprep.subr.mxu0 0.0
      %2406 = vmatpush1.msra.mxu0 0.0
      %2407 = vmatprep.subr.mxu0 0.0
      %2408 = vmatpush1.msra.mxu0 0.0
      %2409 = vmatprep.subr.mxu0 0.0
      %2410 = vmatpush1.msra.mxu0 0.0
      %2411 = vmatprep.subr.mxu0 0.0
      %2412 = vmatpush1.msra.mxu0 0.0
      %2413 = vmatprep.subr.mxu0 0.0
      %2414 = vmatpush1.msra.mxu0 0.0
      %2415 = vmatprep.subr.mxu0 0.0
      %2416 = vmatpush1.msra.mxu0 0.0
      %2417 = vmatprep.subr.mxu0 0.0
      %2418 = vmatpush1.msra.mxu0 0.0
      %2419 = vmatprep.subr.mxu0 0.0
      %2420 = vmatpush1.msra.mxu0 0.0
      %2421 = vmatprep.subr.mxu0 0.0
      %2422 = vmatpush1.msra.mxu0 0.0
      %2423 = vmatprep.subr.mxu0 0.0
      %2424 = vmatpush1.msra.mxu0 0.0
      %2425 = vmatprep.subr.mxu0 0.0
      %2426 = vmatpush1.msra.mxu0 0.0
      %2427 = vmatprep.subr.mxu0 0.0
      %2428 = vmatpush1.msra.mxu0 0.0
      %2429 = vmatprep.subr.mxu0 0.0
      %2430 = vmatpush1.msra.mxu0 0.0
      %2431 = vmatprep.subr.mxu0 0.0
      %2432 = vmatpush1.msra.mxu0 0.0
      %2433 = vmatprep.subr.mxu0 0.0
      %2434 = vmatpush1.msra.mxu0 0.0
      %2435 = vmatprep.subr.mxu0 0.0
      %2436 = vmatpush1.msra.mxu0 0.0
      %2437 = vmatprep.subr.mxu0 0.0
      %2438 = vmatpush1.msra.mxu0 0.0
      %2439 = vmatprep.mubr.f32.mxu0 0.0
      %2440 = vmatmul.mubr.f32.gmra.mrb[0].mxu0 %v2352
      %v2441 = vpop.f32.mrb[0].mxu0
      %v2442 = vadd.f32 %v2349, %v2441
      %v2443 = vpop.f32.mrb[0].mxu0
      %2444 = vmatprep.mubr.f32.mxu0 0.0
      %2445 = vmatmul.mubr.f32.gmra.mrb[0].mxu0 %v2355
      %v2446 = vpop.f32.mrb[0].mxu0
      %v2447 = vadd.f32 %v2349, %v2446
      %v2448 = vpop.f32.mrb[0].mxu0
      %2449 = vmatprep.mubr.f32.mxu0 0.0
      %2450 = vmatmul.mubr.f32.gmra.mrb[0].mxu0 %v2358
      %v2451 = vpop.f32.mrb[0].mxu0
      %v2452 = vadd.f32 %v2349, %v2451
      %v2453 = vpop.f32.mrb[0].mxu0
      %2454 = vmatprep.mubr.f32.mxu0 0.0
      %2455 = vmatmul.mubr.f32.gmra.mrb[0].mxu0 %v2361
      %v2456 = vpop.f32.mrb[0].mxu0
      %v2457 = vadd.f32 %v2349, %v2456
      %v2458 = vpop.f32.mrb[0].mxu0
      %2459 = vmatprep.mubr.f32.mxu0 0.0
      %2460 = vmatmul.mubr.f32.gmra.mrb[0].mxu0 %v2364
      %v2461 = vpop.f32.mrb[0].mxu0
      %v2462 = vadd.f32 %v2349, %v2461
      %v2463 = vpop.f32.mrb[0].mxu0
      %2464 = vmatprep.mubr.f32.mxu0 0.0
      %2465 = vmatmul.mubr.f32.gmra.mrb[0].mxu0 %v2367
      %v2466 = vpop.f32.mrb[0].mxu0
      %v2467 = vadd.f32 %v2349, %v2466
      %v2468 = vpop.f32.mrb[0].mxu0
      %2469 = vmatprep.mubr.f32.mxu0 0.0
      %2470 = vmatmul.mubr.f32.gmra.mrb[0].mxu0 %v2370
      %v2471 = vpop.f32.mrb[0].mxu0
      %v2472 = vadd.f32 %v2349, %v2471
      %v2473 = vpop.f32.mrb[0].mxu0
      %2474 = vmatprep.mubr.f32.mxu0 0.0
      %2475 = vmatmul.mubr.f32.gmra.mrb[0].mxu0 %v2373
      %v2476 = vpop.f32.mrb[0].mxu0
      %v2477 = vadd.f32 %v2349, %v2476
      %v2478 = vpop.f32.mrb[0].mxu0
      %2479 = vdwg.mxu0
      %v2480 = vadd.f32 %v999, %v2442
      %v2481 = vadd.f32 %v1000, %v2447
      %v2482 = vadd.f32 %v1001, %v2452
      %v2483 = vadd.f32 %v1002, %v2457
      %v2484 = vadd.f32 %v1003, %v2462
      %v2485 = vadd.f32 %v1004, %v2467
      %v2486 = vadd.f32 %v1005, %v2472
      %v2487 = vadd.f32 %v1006, %v2477
      %2488 = vst.msk [vmem:[#allocation2] sm:$0xff] %vm1015, %v2480
      %2489 = vst.msk [vmem:[#allocation2 + $0x8] sm:$0xff] %vm1015, %v2481
      %2490 = vst.msk [vmem:[#allocation2 + $0x10] sm:$0xff] %vm1015, %v2482
      %2491 = vst.msk [vmem:[#allocation2 + $0x18] sm:$0xff] %vm1015, %v2483
      %2492 = vst.msk [vmem:[#allocation2 + $0x20] sm:$0xff] %vm1015, %v2484
      %2493 = vst.msk [vmem:[#allocation2 + $0x28] sm:$0xff] %vm1015, %v2485
      %2494 = vst.msk [vmem:[#allocation2 + $0x30] sm:$0xff] %vm1015, %v2486
      %2495 = vst.msk [vmem:[#allocation2 + $0x38] sm:$0xff] %vm1015, %v2487
      // Predicated region
      $region89: #{t5_forward.1} parent=83 // pred_check
        %p2496 = pneg %p968
      $region90: #{t5_forward.1} parent=83 // pred_check_branch
        %2498 = sbr.rel (%p2496) target = $region92
      $region91: #{t5_forward.1} parent=83 // pred_region
        %v2499 = vld [vmem:[#allocation2] sm:$0xff]
        %v2500 = vld [vmem:[#allocation2 + $0x8] sm:$0xff]
        %v2501 = vld [vmem:[#allocation2 + $0x10] sm:$0xff]
        %v2502 = vld [vmem:[#allocation2 + $0x18] sm:$0xff]
        %v2503 = vld [vmem:[#allocation2 + $0x20] sm:$0xff]
        %v2504 = vld [vmem:[#allocation2 + $0x28] sm:$0xff]
        %v2505 = vld [vmem:[#allocation2 + $0x30] sm:$0xff]
        %v2506 = vld [vmem:[#allocation2 + $0x38] sm:$0xff]
        %v2507 = vmul.f32 %v2499, %v2499
        %v2508 = vmul.f32 %v2500, %v2500
        %v2509 = vmul.f32 %v2501, %v2501
        %v2510 = vmul.f32 %v2502, %v2502
        %v2511 = vmul.f32 %v2503, %v2503
        %v2512 = vmul.f32 %v2504, %v2504
        %v2513 = vmul.f32 %v2505, %v2505
        %v2514 = vmul.f32 %v2506, %v2506
        %v2515 = vsel %vm1015, %v2507, 0.0
        %2516 = vadd.xlane.f32.xlu0 %v2515
        %v2517 = vpop.xlane.xlu0 %2516
        %v2518 = vsel %vm1015, %v2508, 0.0
        %2519 = vadd.xlane.f32.xlu0 %v2518
        %v2520 = vpop.xlane.xlu0 %2519
        %v2521 = vsel %vm1015, %v2509, 0.0
        %2522 = vadd.xlane.f32.xlu0 %v2521
        %v2523 = vpop.xlane.xlu0 %2522
        %v2524 = vsel %vm1015, %v2510, 0.0
        %2525 = vadd.xlane.f32.xlu0 %v2524
        %v2526 = vpop.xlane.xlu0 %2525
        %v2527 = vsel %vm1015, %v2511, 0.0
        %2528 = vadd.xlane.f32.xlu0 %v2527
        %v2529 = vpop.xlane.xlu0 %2528
        %v2530 = vsel %vm1015, %v2512, 0.0
        %2531 = vadd.xlane.f32.xlu0 %v2530
        %v2532 = vpop.xlane.xlu0 %2531
        %v2533 = vsel %vm1015, %v2513, 0.0
        %2534 = vadd.xlane.f32.xlu0 %v2533
        %v2535 = vpop.xlane.xlu0 %2534
        %v2536 = vsel %vm1015, %v2514, 0.0
        %2537 = vadd.xlane.f32.xlu0 %v2536
        %v2538 = vpop.xlane.xlu0 %2537
        %v2539 = vmul.f32 %v2517, %v1040
        %v2540 = vmul.f32 %v2520, %v1040
        %v2541 = vmul.f32 %v2523, %v1040
        %v2542 = vmul.f32 %v2526, %v1040
        %v2543 = vmul.f32 %v2529, %v1040
        %v2544 = vmul.f32 %v2532, %v1040
        %v2545 = vmul.f32 %v2535, %v1040
        %v2546 = vmul.f32 %v2538, %v1040
        %v2547 = vadd.f32 %v2539, 1e-06
        %v2548 = vadd.f32 %v2540, 1e-06
        %v2549 = vadd.f32 %v2541, 1e-06
        %v2550 = vadd.f32 %v2542, 1e-06
        %v2551 = vadd.f32 %v2543, 1e-06
        %v2552 = vadd.f32 %v2544, 1e-06
        %v2553 = vadd.f32 %v2545, 1e-06
        %v2554 = vadd.f32 %v2546, 1e-06
        %v2555 = vrsqrt.pop %v2547
        %v2556 = vrsqrt.pop %v2548
        %v2557 = vrsqrt.pop %v2549
        %v2558 = vrsqrt.pop %v2550
        %v2559 = vrsqrt.pop %v2551
        %v2560 = vrsqrt.pop %v2552
        %v2561 = vrsqrt.pop %v2553
        %v2562 = vrsqrt.pop %v2554
        %v2563 = vmul.f32 %v2499, %v2555
        %v2564 = vmul.f32 %v2500, %v2556
        %v2565 = vmul.f32 %v2501, %v2557
        %v2566 = vmul.f32 %v2502, %v2558
        %v2567 = vmul.f32 %v2503, %v2559
        %v2568 = vmul.f32 %v2504, %v2560
        %v2569 = vmul.f32 %v2505, %v2561
        %v2570 = vmul.f32 %v2506, %v2562
        %v2571 = vmul.f32 %v1077, %v2563
        %v2572 = vmul.f32 %v1077, %v2564
        %v2573 = vmul.f32 %v1077, %v2565
        %v2574 = vmul.f32 %v1077, %v2566
        %v2575 = vmul.f32 %v1077, %v2567
        %v2576 = vmul.f32 %v1077, %v2568
        %v2577 = vmul.f32 %v1077, %v2569
        %v2578 = vmul.f32 %v1077, %v2570
        %v2579 = vld [vmem:[%s904] sm:$0xff]
        %v2580 = vld [vmem:[%s904 + $0x8] sm:$0xff]
        %v2581 = vld [vmem:[%s904 + $0x10] sm:$0xff]
        %v2582 = vld [vmem:[%s904 + $0x18] sm:$0xff]
        %v2583 = vld [vmem:[%s911] sm:$0x1]
        %v2584 = vld [vmem:[%s920] sm:$0xff]
        %v2585 = vld [vmem:[%s920 + $0x8] sm:$0xff]
        %v2586 = vld [vmem:[%s920 + $0x10] sm:$0xff]
        %v2587 = vld [vmem:[%s920 + $0x18] sm:$0xff]
        %v2588 = vld [vmem:[%s927] sm:$0x1]
        %v2590 = vlaneseq
        %v2591 = vshrl.u32 %v2590, 7
        %v2592 = vsub.s32 0, %v2591
        %v2593 = vrot.slane %v2583, %v2592
        %v2596 = vsel %vm1015, %v2571, 0
        %v2599 = vsel %vm1015, %v2572, 0
        %v2602 = vsel %vm1015, %v2573, 0
        %v2605 = vsel %vm1015, %v2574, 0
        %v2608 = vsel %vm1015, %v2575, 0
        %v2611 = vsel %vm1015, %v2576, 0
        %v2614 = vsel %vm1015, %v2577, 0
        %v2617 = vsel %vm1015, %v2578, 0
        %2619 = vmatprep.subr.mxu0 0.0
        %2620 = vmatpush1.msra.mxu0 %v2579
        %2621 = vmatprep.subr.mxu0 0.0
        %2622 = vmatpush1.msra.mxu0 %v2580
        %2623 = vmatprep.subr.mxu0 0.0
        %2624 = vmatpush1.msra.mxu0 %v2581
        %2625 = vmatprep.subr.mxu0 0.0
        %2626 = vmatpush1.msra.mxu0 %v2582
        %2627 = vmatprep.subr.mxu0 0.0
        %2628 = vmatpush1.msra.mxu0 0.0
        %2629 = vmatprep.subr.mxu0 0.0
        %2630 = vmatpush1.msra.mxu0 0.0
        %2631 = vmatprep.subr.mxu0 0.0
        %2632 = vmatpush1.msra.mxu0 0.0
        %2633 = vmatprep.subr.mxu0 0.0
        %2634 = vmatpush1.msra.mxu0 0.0
        %2635 = vmatprep.subr.mxu0 0.0
        %2636 = vmatpush1.msra.mxu0 0.0
        %2637 = vmatprep.subr.mxu0 0.0
        %2638 = vmatpush1.msra.mxu0 0.0
        %2639 = vmatprep.subr.mxu0 0.0
        %2640 = vmatpush1.msra.mxu0 0.0
        %2641 = vmatprep.subr.mxu0 0.0
        %2642 = vmatpush1.msra.mxu0 0.0
        %2643 = vmatprep.subr.mxu0 0.0
        %2644 = vmatpush1.msra.mxu0 0.0
        %2645 = vmatprep.subr.mxu0 0.0
        %2646 = vmatpush1.msra.mxu0 0.0
        %2647 = vmatprep.subr.mxu0 0.0
        %2648 = vmatpush1.msra.mxu0 0.0
        %2649 = vmatprep.subr.mxu0 0.0
        %2650 = vmatpush1.msra.mxu0 0.0
        %2651 = vmatprep.subr.mxu0 0.0
        %2652 = vmatpush1.msra.mxu0 0.0
        %2653 = vmatprep.subr.mxu0 0.0
        %2654 = vmatpush1.msra.mxu0 0.0
        %2655 = vmatprep.subr.mxu0 0.0
        %2656 = vmatpush1.msra.mxu0 0.0
        %2657 = vmatprep.subr.mxu0 0.0
        %2658 = vmatpush1.msra.mxu0 0.0
        %2659 = vmatprep.subr.mxu0 0.0
        %2660 = vmatpush1.msra.mxu0 0.0
        %2661 = vmatprep.subr.mxu0 0.0
        %2662 = vmatpush1.msra.mxu0 0.0
        %2663 = vmatprep.subr.mxu0 0.0
        %2664 = vmatpush1.msra.mxu0 0.0
        %2665 = vmatprep.subr.mxu0 0.0
        %2666 = vmatpush1.msra.mxu0 0.0
        %2667 = vmatprep.subr.mxu0 0.0
        %2668 = vmatpush1.msra.mxu0 0.0
        %2669 = vmatprep.subr.mxu0 0.0
        %2670 = vmatpush1.msra.mxu0 0.0
        %2671 = vmatprep.subr.mxu0 0.0
        %2672 = vmatpush1.msra.mxu0 0.0
        %2673 = vmatprep.subr.mxu0 0.0
        %2674 = vmatpush1.msra.mxu0 0.0
        %2675 = vmatprep.subr.mxu0 0.0
        %2676 = vmatpush1.msra.mxu0 0.0
        %2677 = vmatprep.subr.mxu0 0.0
        %2678 = vmatpush1.msra.mxu0 0.0
        %2679 = vmatprep.subr.mxu0 0.0
        %2680 = vmatpush1.msra.mxu0 0.0
        %2681 = vmatprep.subr.mxu0 0.0
        %2682 = vmatpush1.msra.mxu0 0.0
        %2683 = vmatprep.mubr.f32.mxu0 0.0
        %2684 = vmatmul.mubr.f32.gmra.mrb[0].mxu0 %v2596
        %v2685 = vpop.f32.mrb[0].mxu0
        %v2686 = vadd.f32 %v2593, %v2685
        %v2687 = vpop.f32.mrb[0].mxu0
        %2688 = vmatprep.mubr.f32.mxu0 0.0
        %2689 = vmatmul.mubr.f32.gmra.mrb[0].mxu0 %v2599
        %v2690 = vpop.f32.mrb[0].mxu0
        %v2691 = vadd.f32 %v2593, %v2690
        %v2692 = vpop.f32.mrb[0].mxu0
        %2693 = vmatprep.mubr.f32.mxu0 0.0
        %2694 = vmatmul.mubr.f32.gmra.mrb[0].mxu0 %v2602
        %v2695 = vpop.f32.mrb[0].mxu0
        %v2696 = vadd.f32 %v2593, %v2695
        %v2697 = vpop.f32.mrb[0].mxu0
        %2698 = vmatprep.mubr.f32.mxu0 0.0
        %2699 = vmatmul.mubr.f32.gmra.mrb[0].mxu0 %v2605
        %v2700 = vpop.f32.mrb[0].mxu0
        %v2701 = vadd.f32 %v2593, %v2700
        %v2702 = vpop.f32.mrb[0].mxu0
        %2703 = vmatprep.mubr.f32.mxu0 0.0
        %2704 = vmatmul.mubr.f32.gmra.mrb[0].mxu0 %v2608
        %v2705 = vpop.f32.mrb[0].mxu0
        %v2706 = vadd.f32 %v2593, %v2705
        %v2707 = vpop.f32.mrb[0].mxu0
        %2708 = vmatprep.mubr.f32.mxu0 0.0
        %2709 = vmatmul.mubr.f32.gmra.mrb[0].mxu0 %v2611
        %v2710 = vpop.f32.mrb[0].mxu0
        %v2711 = vadd.f32 %v2593, %v2710
        %v2712 = vpop.f32.mrb[0].mxu0
        %2713 = vmatprep.mubr.f32.mxu0 0.0
        %2714 = vmatmul.mubr.f32.gmra.mrb[0].mxu0 %v2614
        %v2715 = vpop.f32.mrb[0].mxu0
        %v2716 = vadd.f32 %v2593, %v2715
        %v2717 = vpop.f32.mrb[0].mxu0
        %2718 = vmatprep.mubr.f32.mxu0 0.0
        %2719 = vmatmul.mubr.f32.gmra.mrb[0].mxu0 %v2617
        %v2720 = vpop.f32.mrb[0].mxu0
        %v2721 = vadd.f32 %v2593, %v2720
        %v2722 = vpop.f32.mrb[0].mxu0
        %2723 = vdwg.mxu0
        %2728 = vrot.lane.b32.xlu0 %v2686, 96
        %v2729 = vpop.permute.xlu0 %2728
        %2730 = vrot.lane.b32.xlu0 %v2691, 96
        %v2731 = vpop.permute.xlu0 %2730
        %2732 = vrot.lane.b32.xlu0 %v2696, 96
        %v2733 = vpop.permute.xlu0 %2732
        %2734 = vrot.lane.b32.xlu0 %v2701, 96
        %v2735 = vpop.permute.xlu0 %2734
        %v2736 = vsel %vm1244, %v2686, 0
        %v2738 = vsel %vm1244, %v2691, 0
        %v2740 = vsel %vm1244, %v2696, 0
        %v2742 = vsel %vm1244, %v2701, 0
        %v2744 = vsel %vm1244, %v2729, 0
        %v2746 = vsel %vm1244, %v2731, 0
        %v2748 = vsel %vm1244, %v2733, 0
        %v2750 = vsel %vm1244, %v2735, 0
        %2752 = vmatprep.subr.mxu0 0.0
        %2753 = vmatpush1.xpose.msra.mxu0 %v2744
        %2754 = vmatprep.subr.mxu0 0.0
        %2755 = vmatpush1.xpose.msra.mxu0 %v2746
        %2756 = vmatprep.subr.mxu0 0.0
        %2757 = vmatpush1.xpose.msra.mxu0 %v2748
        %2758 = vmatprep.subr.mxu0 0.0
        %2759 = vmatpush1.xpose.msra.mxu0 %v2750
        %2760 = vmatprep.subr.mxu0 0.0
        %2761 = vmatpush1.xpose.msra.mxu0 0.0
        %2762 = vmatprep.subr.mxu0 0.0
        %2763 = vmatpush1.xpose.msra.mxu0 0.0
        %2764 = vmatprep.subr.mxu0 0.0
        %2765 = vmatpush1.xpose.msra.mxu0 0.0
        %2766 = vmatprep.subr.mxu0 0.0
        %2767 = vmatpush1.xpose.msra.mxu0 0.0
        %2768 = vmatprep.subr.mxu0 0.0
        %2769 = vmatpush1.xpose.msra.mxu0 0.0
        %2770 = vmatprep.subr.mxu0 0.0
        %2771 = vmatpush1.xpose.msra.mxu0 0.0
        %2772 = vmatprep.subr.mxu0 0.0
        %2773 = vmatpush1.xpose.msra.mxu0 0.0
        %2774 = vmatprep.subr.mxu0 0.0
        %2775 = vmatpush1.xpose.msra.mxu0 0.0
        %2776 = vmatprep.subr.mxu0 0.0
        %2777 = vmatpush1.xpose.msra.mxu0 0.0
        %2778 = vmatprep.subr.mxu0 0.0
        %2779 = vmatpush1.xpose.msra.mxu0 0.0
        %2780 = vmatprep.subr.mxu0 0.0
        %2781 = vmatpush1.xpose.msra.mxu0 0.0
        %2782 = vmatprep.subr.mxu0 0.0
        %2783 = vmatpush1.xpose.msra.mxu0 0.0
        %2784 = vmatprep.subr.mxu0 0.0
        %2785 = vmatpush1.xpose.msra.mxu0 0.0
        %2786 = vmatprep.subr.mxu0 0.0
        %2787 = vmatpush1.xpose.msra.mxu0 0.0
        %2788 = vmatprep.subr.mxu0 0.0
        %2789 = vmatpush1.xpose.msra.mxu0 0.0
        %2790 = vmatprep.subr.mxu0 0.0
        %2791 = vmatpush1.xpose.msra.mxu0 0.0
        %2792 = vmatprep.subr.mxu0 0.0
        %2793 = vmatpush1.xpose.msra.mxu0 0.0
        %2794 = vmatprep.subr.mxu0 0.0
        %2795 = vmatpush1.xpose.msra.mxu0 0.0
        %2796 = vmatprep.subr.mxu0 0.0
        %2797 = vmatpush1.xpose.msra.mxu0 0.0
        %2798 = vmatprep.subr.mxu0 0.0
        %2799 = vmatpush1.xpose.msra.mxu0 0.0
        %2800 = vmatprep.subr.mxu0 0.0
        %2801 = vmatpush1.xpose.msra.mxu0 0.0
        %2802 = vmatprep.subr.mxu0 0.0
        %2803 = vmatpush1.xpose.msra.mxu0 0.0
        %2804 = vmatprep.subr.mxu0 0.0
        %2805 = vmatpush1.xpose.msra.mxu0 0.0
        %2806 = vmatprep.subr.mxu0 0.0
        %2807 = vmatpush1.xpose.msra.mxu0 0.0
        %2808 = vmatprep.subr.mxu0 0.0
        %2809 = vmatpush1.xpose.msra.mxu0 0.0
        %2810 = vmatprep.subr.mxu0 0.0
        %2811 = vmatpush1.xpose.msra.mxu0 0.0
        %2812 = vmatprep.subr.mxu0 0.0
        %2813 = vmatpush1.xpose.msra.mxu0 0.0
        %2814 = vmatprep.subr.mxu0 0.0
        %2815 = vmatpush1.xpose.msra.mxu0 0.0
        %2816 = vmatprep.mubr.f32.mxu0 0.0
        %2817 = vmatmul.mubr.f32.gmra.mrb[0].mxu0 %v2736
        %v2818 = vpop.f32.mrb[0].mxu0
        %v2819 = vadd.f32 0.0, %v2818
        %v2820 = vpop.f32.mrb[0].mxu0
        %2821 = vmatprep.mubr.f32.mxu0 0.0
        %2822 = vmatmul.mubr.f32.gmra.mrb[0].mxu0 %v2738
        %v2823 = vpop.f32.mrb[0].mxu0
        %v2824 = vadd.f32 0.0, %v2823
        %v2825 = vpop.f32.mrb[0].mxu0
        %2826 = vmatprep.mubr.f32.mxu0 0.0
        %2827 = vmatmul.mubr.f32.gmra.mrb[0].mxu0 %v2740
        %v2828 = vpop.f32.mrb[0].mxu0
        %v2829 = vadd.f32 0.0, %v2828
        %v2830 = vpop.f32.mrb[0].mxu0
        %2831 = vmatprep.mubr.f32.mxu0 0.0
        %2832 = vmatmul.mubr.f32.gmra.mrb[0].mxu0 %v2742
        %v2833 = vpop.f32.mrb[0].mxu0
        %v2834 = vadd.f32 0.0, %v2833
        %v2835 = vpop.f32.mrb[0].mxu0
        %2836 = vdwg.mxu0
        %2841 = vrot.lane.b32.xlu0 %v2706, 96
        %v2842 = vpop.permute.xlu0 %2841
        %2843 = vrot.lane.b32.xlu0 %v2711, 96
        %v2844 = vpop.permute.xlu0 %2843
        %2845 = vrot.lane.b32.xlu0 %v2716, 96
        %v2846 = vpop.permute.xlu0 %2845
        %2847 = vrot.lane.b32.xlu0 %v2721, 96
        %v2848 = vpop.permute.xlu0 %2847
        %v2849 = vsel %vm1244, %v2706, 0
        %v2851 = vsel %vm1244, %v2711, 0
        %v2853 = vsel %vm1244, %v2716, 0
        %v2855 = vsel %vm1244, %v2721, 0
        %v2857 = vsel %vm1244, %v2842, 0
        %v2859 = vsel %vm1244, %v2844, 0
        %v2861 = vsel %vm1244, %v2846, 0
        %v2863 = vsel %vm1244, %v2848, 0
        %2865 = vmatprep.subr.mxu0 0.0
        %2866 = vmatpush1.xpose.msra.mxu0 %v2857
        %2867 = vmatprep.subr.mxu0 0.0
        %2868 = vmatpush1.xpose.msra.mxu0 %v2859
        %2869 = vmatprep.subr.mxu0 0.0
        %2870 = vmatpush1.xpose.msra.mxu0 %v2861
        %2871 = vmatprep.subr.mxu0 0.0
        %2872 = vmatpush1.xpose.msra.mxu0 %v2863
        %2873 = vmatprep.subr.mxu0 0.0
        %2874 = vmatpush1.xpose.msra.mxu0 0.0
        %2875 = vmatprep.subr.mxu0 0.0
        %2876 = vmatpush1.xpose.msra.mxu0 0.0
        %2877 = vmatprep.subr.mxu0 0.0
        %2878 = vmatpush1.xpose.msra.mxu0 0.0
        %2879 = vmatprep.subr.mxu0 0.0
        %2880 = vmatpush1.xpose.msra.mxu0 0.0
        %2881 = vmatprep.subr.mxu0 0.0
        %2882 = vmatpush1.xpose.msra.mxu0 0.0
        %2883 = vmatprep.subr.mxu0 0.0
        %2884 = vmatpush1.xpose.msra.mxu0 0.0
        %2885 = vmatprep.subr.mxu0 0.0
        %2886 = vmatpush1.xpose.msra.mxu0 0.0
        %2887 = vmatprep.subr.mxu0 0.0
        %2888 = vmatpush1.xpose.msra.mxu0 0.0
        %2889 = vmatprep.subr.mxu0 0.0
        %2890 = vmatpush1.xpose.msra.mxu0 0.0
        %2891 = vmatprep.subr.mxu0 0.0
        %2892 = vmatpush1.xpose.msra.mxu0 0.0
        %2893 = vmatprep.subr.mxu0 0.0
        %2894 = vmatpush1.xpose.msra.mxu0 0.0
        %2895 = vmatprep.subr.mxu0 0.0
        %2896 = vmatpush1.xpose.msra.mxu0 0.0
        %2897 = vmatprep.subr.mxu0 0.0
        %2898 = vmatpush1.xpose.msra.mxu0 0.0
        %2899 = vmatprep.subr.mxu0 0.0
        %2900 = vmatpush1.xpose.msra.mxu0 0.0
        %2901 = vmatprep.subr.mxu0 0.0
        %2902 = vmatpush1.xpose.msra.mxu0 0.0
        %2903 = vmatprep.subr.mxu0 0.0
        %2904 = vmatpush1.xpose.msra.mxu0 0.0
        %2905 = vmatprep.subr.mxu0 0.0
        %2906 = vmatpush1.xpose.msra.mxu0 0.0
        %2907 = vmatprep.subr.mxu0 0.0
        %2908 = vmatpush1.xpose.msra.mxu0 0.0
        %2909 = vmatprep.subr.mxu0 0.0
        %2910 = vmatpush1.xpose.msra.mxu0 0.0
        %2911 = vmatprep.subr.mxu0 0.0
        %2912 = vmatpush1.xpose.msra.mxu0 0.0
        %2913 = vmatprep.subr.mxu0 0.0
        %2914 = vmatpush1.xpose.msra.mxu0 0.0
        %2915 = vmatprep.subr.mxu0 0.0
        %2916 = vmatpush1.xpose.msra.mxu0 0.0
        %2917 = vmatprep.subr.mxu0 0.0
        %2918 = vmatpush1.xpose.msra.mxu0 0.0
        %2919 = vmatprep.subr.mxu0 0.0
        %2920 = vmatpush1.xpose.msra.mxu0 0.0
        %2921 = vmatprep.subr.mxu0 0.0
        %2922 = vmatpush1.xpose.msra.mxu0 0.0
        %2923 = vmatprep.subr.mxu0 0.0
        %2924 = vmatpush1.xpose.msra.mxu0 0.0
        %2925 = vmatprep.subr.mxu0 0.0
        %2926 = vmatpush1.xpose.msra.mxu0 0.0
        %2927 = vmatprep.subr.mxu0 0.0
        %2928 = vmatpush1.xpose.msra.mxu0 0.0
        %2929 = vmatprep.mubr.f32.mxu0 0.0
        %2930 = vmatmul.mubr.f32.gmra.mrb[0].mxu0 %v2849
        %v2931 = vpop.f32.mrb[0].mxu0
        %v2932 = vadd.f32 0.0, %v2931
        %v2933 = vpop.f32.mrb[0].mxu0
        %2934 = vmatprep.mubr.f32.mxu0 0.0
        %2935 = vmatmul.mubr.f32.gmra.mrb[0].mxu0 %v2851
        %v2936 = vpop.f32.mrb[0].mxu0
        %v2937 = vadd.f32 0.0, %v2936
        %v2938 = vpop.f32.mrb[0].mxu0
        %2939 = vmatprep.mubr.f32.mxu0 0.0
        %2940 = vmatmul.mubr.f32.gmra.mrb[0].mxu0 %v2853
        %v2941 = vpop.f32.mrb[0].mxu0
        %v2942 = vadd.f32 0.0, %v2941
        %v2943 = vpop.f32.mrb[0].mxu0
        %2944 = vmatprep.mubr.f32.mxu0 0.0
        %2945 = vmatmul.mubr.f32.gmra.mrb[0].mxu0 %v2855
        %v2946 = vpop.f32.mrb[0].mxu0
        %v2947 = vadd.f32 0.0, %v2946
        %v2948 = vpop.f32.mrb[0].mxu0
        %2949 = vdwg.mxu0
        %v2950 = vsel %vm1015, %v2819, -inf
        %2951 = vmax.xlane.f32.xlu0 %v2950
        %v2952 = vpop.xlane.xlu0 %2951
        %v2953 = vsel %vm1015, %v2824, -inf
        %2954 = vmax.xlane.f32.xlu0 %v2953
        %v2955 = vpop.xlane.xlu0 %2954
        %v2956 = vsel %vm1015, %v2829, -inf
        %2957 = vmax.xlane.f32.xlu0 %v2956
        %v2958 = vpop.xlane.xlu0 %2957
        %v2959 = vsel %vm1015, %v2834, -inf
        %2960 = vmax.xlane.f32.xlu0 %v2959
        %v2961 = vpop.xlane.xlu0 %2960
        %v2962 = vsel %vm1015, %v2932, -inf
        %2963 = vmax.xlane.f32.xlu0 %v2962
        %v2964 = vpop.xlane.xlu0 %2963
        %v2965 = vsel %vm1015, %v2937, -inf
        %2966 = vmax.xlane.f32.xlu0 %v2965
        %v2967 = vpop.xlane.xlu0 %2966
        %v2968 = vsel %vm1015, %v2942, -inf
        %2969 = vmax.xlane.f32.xlu0 %v2968
        %v2970 = vpop.xlane.xlu0 %2969
        %v2971 = vsel %vm1015, %v2947, -inf
        %2972 = vmax.xlane.f32.xlu0 %v2971
        %v2973 = vpop.xlane.xlu0 %2972
        %v2974 = vsub.f32 %v2819, %v2952
        %v2975 = vsub.f32 %v2824, %v2955
        %v2976 = vsub.f32 %v2829, %v2958
        %v2977 = vsub.f32 %v2834, %v2961
        %v2978 = vsub.f32 %v2932, %v2964
        %v2979 = vsub.f32 %v2937, %v2967
        %v2980 = vsub.f32 %v2942, %v2970
        %v2981 = vsub.f32 %v2947, %v2973
        %v2982 = vmul.f32 %v2974, 1.442695
        %v2983 = vpow.pop %v2982
        %v2984 = vmul.f32 %v2975, 1.442695
        %v2985 = vpow.pop %v2984
        %v2986 = vmul.f32 %v2976, 1.442695
        %v2987 = vpow.pop %v2986
        %v2988 = vmul.f32 %v2977, 1.442695
        %v2989 = vpow.pop %v2988
        %v2990 = vmul.f32 %v2978, 1.442695
        %v2991 = vpow.pop %v2990
        %v2992 = vmul.f32 %v2979, 1.442695
        %v2993 = vpow.pop %v2992
        %v2994 = vmul.f32 %v2980, 1.442695
        %v2995 = vpow.pop %v2994
        %v2996 = vmul.f32 %v2981, 1.442695
        %v2997 = vpow.pop %v2996
        %v2998 = vsel %vm1015, %v2983, 0.0
        %2999 = vadd.xlane.f32.xlu0 %v2998
        %v3000 = vpop.xlane.xlu0 %2999
        %v3001 = vsel %vm1015, %v2985, 0.0
        %3002 = vadd.xlane.f32.xlu0 %v3001
        %v3003 = vpop.xlane.xlu0 %3002
        %v3004 = vsel %vm1015, %v2987, 0.0
        %3005 = vadd.xlane.f32.xlu0 %v3004
        %v3006 = vpop.xlane.xlu0 %3005
        %v3007 = vsel %vm1015, %v2989, 0.0
        %3008 = vadd.xlane.f32.xlu0 %v3007
        %v3009 = vpop.xlane.xlu0 %3008
        %v3010 = vsel %vm1015, %v2991, 0.0
        %3011 = vadd.xlane.f32.xlu0 %v3010
        %v3012 = vpop.xlane.xlu0 %3011
        %v3013 = vsel %vm1015, %v2993, 0.0
        %3014 = vadd.xlane.f32.xlu0 %v3013
        %v3015 = vpop.xlane.xlu0 %3014
        %v3016 = vsel %vm1015, %v2995, 0.0
        %3017 = vadd.xlane.f32.xlu0 %v3016
        %v3018 = vpop.xlane.xlu0 %3017
        %v3019 = vsel %vm1015, %v2997, 0.0
        %3020 = vadd.xlane.f32.xlu0 %v3019
        %v3021 = vpop.xlane.xlu0 %3020
        %v3022 = vrcp.pop %v3000
        %v3023 = vmul.f32 %v2983, %v3022
        %v3024 = vrcp.pop %v3003
        %v3025 = vmul.f32 %v2985, %v3024
        %v3026 = vrcp.pop %v3006
        %v3027 = vmul.f32 %v2987, %v3026
        %v3028 = vrcp.pop %v3009
        %v3029 = vmul.f32 %v2989, %v3028
        %v3030 = vrcp.pop %v3012
        %v3031 = vmul.f32 %v2991, %v3030
        %v3032 = vrcp.pop %v3015
        %v3033 = vmul.f32 %v2993, %v3032
        %v3034 = vrcp.pop %v3018
        %v3035 = vmul.f32 %v2995, %v3034
        %v3036 = vrcp.pop %v3021
        %v3037 = vmul.f32 %v2997, %v3036
        %3038 = vrot.lane.b32.xlu0 %v2686, 64
        %v3039 = vpop.permute.xlu0 %3038
        %3040 = vrot.lane.b32.xlu0 %v2691, 64
        %v3041 = vpop.permute.xlu0 %3040
        %3042 = vrot.lane.b32.xlu0 %v2696, 64
        %v3043 = vpop.permute.xlu0 %3042
        %3044 = vrot.lane.b32.xlu0 %v2701, 64
        %v3045 = vpop.permute.xlu0 %3044
        %v3051 = vsel %vm1015, %v3023, 0
        %v3054 = vsel %vm1015, %v3025, 0
        %v3057 = vsel %vm1015, %v3027, 0
        %v3060 = vsel %vm1015, %v3029, 0
        %3062 = vmatprep.subr.mxu0 0.0
        %3063 = vmatpush1.msra.mxu0 %v3039
        %3064 = vmatprep.subr.mxu0 0.0
        %3065 = vmatpush1.msra.mxu0 %v3041
        %3066 = vmatprep.subr.mxu0 0.0
        %3067 = vmatpush1.msra.mxu0 %v3043
        %3068 = vmatprep.subr.mxu0 0.0
        %3069 = vmatpush1.msra.mxu0 %v3045
        %3070 = vmatprep.subr.mxu0 0.0
        %3071 = vmatpush1.msra.mxu0 0.0
        %3072 = vmatprep.subr.mxu0 0.0
        %3073 = vmatpush1.msra.mxu0 0.0
        %3074 = vmatprep.subr.mxu0 0.0
        %3075 = vmatpush1.msra.mxu0 0.0
        %3076 = vmatprep.subr.mxu0 0.0
        %3077 = vmatpush1.msra.mxu0 0.0
        %3078 = vmatprep.subr.mxu0 0.0
        %3079 = vmatpush1.msra.mxu0 0.0
        %3080 = vmatprep.subr.mxu0 0.0
        %3081 = vmatpush1.msra.mxu0 0.0
        %3082 = vmatprep.subr.mxu0 0.0
        %3083 = vmatpush1.msra.mxu0 0.0
        %3084 = vmatprep.subr.mxu0 0.0
        %3085 = vmatpush1.msra.mxu0 0.0
        %3086 = vmatprep.subr.mxu0 0.0
        %3087 = vmatpush1.msra.mxu0 0.0
        %3088 = vmatprep.subr.mxu0 0.0
        %3089 = vmatpush1.msra.mxu0 0.0
        %3090 = vmatprep.subr.mxu0 0.0
        %3091 = vmatpush1.msra.mxu0 0.0
        %3092 = vmatprep.subr.mxu0 0.0
        %3093 = vmatpush1.msra.mxu0 0.0
        %3094 = vmatprep.subr.mxu0 0.0
        %3095 = vmatpush1.msra.mxu0 0.0
        %3096 = vmatprep.subr.mxu0 0.0
        %3097 = vmatpush1.msra.mxu0 0.0
        %3098 = vmatprep.subr.mxu0 0.0
        %3099 = vmatpush1.msra.mxu0 0.0
        %3100 = vmatprep.subr.mxu0 0.0
        %3101 = vmatpush1.msra.mxu0 0.0
        %3102 = vmatprep.subr.mxu0 0.0
        %3103 = vmatpush1.msra.mxu0 0.0
        %3104 = vmatprep.subr.mxu0 0.0
        %3105 = vmatpush1.msra.mxu0 0.0
        %3106 = vmatprep.subr.mxu0 0.0
        %3107 = vmatpush1.msra.mxu0 0.0
        %3108 = vmatprep.subr.mxu0 0.0
        %3109 = vmatpush1.msra.mxu0 0.0
        %3110 = vmatprep.subr.mxu0 0.0
        %3111 = vmatpush1.msra.mxu0 0.0
        %3112 = vmatprep.subr.mxu0 0.0
        %3113 = vmatpush1.msra.mxu0 0.0
        %3114 = vmatprep.subr.mxu0 0.0
        %3115 = vmatpush1.msra.mxu0 0.0
        %3116 = vmatprep.subr.mxu0 0.0
        %3117 = vmatpush1.msra.mxu0 0.0
        %3118 = vmatprep.subr.mxu0 0.0
        %3119 = vmatpush1.msra.mxu0 0.0
        %3120 = vmatprep.subr.mxu0 0.0
        %3121 = vmatpush1.msra.mxu0 0.0
        %3122 = vmatprep.subr.mxu0 0.0
        %3123 = vmatpush1.msra.mxu0 0.0
        %3124 = vmatprep.subr.mxu0 0.0
        %3125 = vmatpush1.msra.mxu0 0.0
        %3126 = vmatprep.mubr.f32.mxu0 0.0
        %3127 = vmatmul.mubr.f32.gmra.mrb[0].mxu0 %v3051
        %v3128 = vpop.f32.mrb[0].mxu0
        %v3129 = vadd.f32 0.0, %v3128
        %v3130 = vpop.f32.mrb[0].mxu0
        %3131 = vmatprep.mubr.f32.mxu0 0.0
        %3132 = vmatmul.mubr.f32.gmra.mrb[0].mxu0 %v3054
        %v3133 = vpop.f32.mrb[0].mxu0
        %v3134 = vadd.f32 0.0, %v3133
        %v3135 = vpop.f32.mrb[0].mxu0
        %3136 = vmatprep.mubr.f32.mxu0 0.0
        %3137 = vmatmul.mubr.f32.gmra.mrb[0].mxu0 %v3057
        %v3138 = vpop.f32.mrb[0].mxu0
        %v3139 = vadd.f32 0.0, %v3138
        %v3140 = vpop.f32.mrb[0].mxu0
        %3141 = vmatprep.mubr.f32.mxu0 0.0
        %3142 = vmatmul.mubr.f32.gmra.mrb[0].mxu0 %v3060
        %v3143 = vpop.f32.mrb[0].mxu0
        %v3144 = vadd.f32 0.0, %v3143
        %v3145 = vpop.f32.mrb[0].mxu0
        %3146 = vdwg.mxu0
        %3147 = vrot.lane.b32.xlu0 %v2706, 64
        %v3148 = vpop.permute.xlu0 %3147
        %3149 = vrot.lane.b32.xlu0 %v2711, 64
        %v3150 = vpop.permute.xlu0 %3149
        %3151 = vrot.lane.b32.xlu0 %v2716, 64
        %v3152 = vpop.permute.xlu0 %3151
        %3153 = vrot.lane.b32.xlu0 %v2721, 64
        %v3154 = vpop.permute.xlu0 %3153
        %v3160 = vsel %vm1015, %v3031, 0
        %v3163 = vsel %vm1015, %v3033, 0
        %v3166 = vsel %vm1015, %v3035, 0
        %v3169 = vsel %vm1015, %v3037, 0
        %3171 = vmatprep.subr.mxu0 0.0
        %3172 = vmatpush1.msra.mxu0 %v3148
        %3173 = vmatprep.subr.mxu0 0.0
        %3174 = vmatpush1.msra.mxu0 %v3150
        %3175 = vmatprep.subr.mxu0 0.0
        %3176 = vmatpush1.msra.mxu0 %v3152
        %3177 = vmatprep.subr.mxu0 0.0
        %3178 = vmatpush1.msra.mxu0 %v3154
        %3179 = vmatprep.subr.mxu0 0.0
        %3180 = vmatpush1.msra.mxu0 0.0
        %3181 = vmatprep.subr.mxu0 0.0
        %3182 = vmatpush1.msra.mxu0 0.0
        %3183 = vmatprep.subr.mxu0 0.0
        %3184 = vmatpush1.msra.mxu0 0.0
        %3185 = vmatprep.subr.mxu0 0.0
        %3186 = vmatpush1.msra.mxu0 0.0
        %3187 = vmatprep.subr.mxu0 0.0
        %3188 = vmatpush1.msra.mxu0 0.0
        %3189 = vmatprep.subr.mxu0 0.0
        %3190 = vmatpush1.msra.mxu0 0.0
        %3191 = vmatprep.subr.mxu0 0.0
        %3192 = vmatpush1.msra.mxu0 0.0
        %3193 = vmatprep.subr.mxu0 0.0
        %3194 = vmatpush1.msra.mxu0 0.0
        %3195 = vmatprep.subr.mxu0 0.0
        %3196 = vmatpush1.msra.mxu0 0.0
        %3197 = vmatprep.subr.mxu0 0.0
        %3198 = vmatpush1.msra.mxu0 0.0
        %3199 = vmatprep.subr.mxu0 0.0
        %3200 = vmatpush1.msra.mxu0 0.0
        %3201 = vmatprep.subr.mxu0 0.0
        %3202 = vmatpush1.msra.mxu0 0.0
        %3203 = vmatprep.subr.mxu0 0.0
        %3204 = vmatpush1.msra.mxu0 0.0
        %3205 = vmatprep.subr.mxu0 0.0
        %3206 = vmatpush1.msra.mxu0 0.0
        %3207 = vmatprep.subr.mxu0 0.0
        %3208 = vmatpush1.msra.mxu0 0.0
        %3209 = vmatprep.subr.mxu0 0.0
        %3210 = vmatpush1.msra.mxu0 0.0
        %3211 = vmatprep.subr.mxu0 0.0
        %3212 = vmatpush1.msra.mxu0 0.0
        %3213 = vmatprep.subr.mxu0 0.0
        %3214 = vmatpush1.msra.mxu0 0.0
        %3215 = vmatprep.subr.mxu0 0.0
        %3216 = vmatpush1.msra.mxu0 0.0
        %3217 = vmatprep.subr.mxu0 0.0
        %3218 = vmatpush1.msra.mxu0 0.0
        %3219 = vmatprep.subr.mxu0 0.0
        %3220 = vmatpush1.msra.mxu0 0.0
        %3221 = vmatprep.subr.mxu0 0.0
        %3222 = vmatpush1.msra.mxu0 0.0
        %3223 = vmatprep.subr.mxu0 0.0
        %3224 = vmatpush1.msra.mxu0 0.0
        %3225 = vmatprep.subr.mxu0 0.0
        %3226 = vmatpush1.msra.mxu0 0.0
        %3227 = vmatprep.subr.mxu0 0.0
        %3228 = vmatpush1.msra.mxu0 0.0
        %3229 = vmatprep.subr.mxu0 0.0
        %3230 = vmatpush1.msra.mxu0 0.0
        %3231 = vmatprep.subr.mxu0 0.0
        %3232 = vmatpush1.msra.mxu0 0.0
        %3233 = vmatprep.subr.mxu0 0.0
        %3234 = vmatpush1.msra.mxu0 0.0
        %3235 = vmatprep.mubr.f32.mxu0 0.0
        %3236 = vmatmul.mubr.f32.gmra.mrb[0].mxu0 %v3160
        %v3237 = vpop.f32.mrb[0].mxu0
        %v3238 = vadd.f32 0.0, %v3237
        %v3239 = vpop.f32.mrb[0].mxu0
        %3240 = vmatprep.mubr.f32.mxu0 0.0
        %3241 = vmatmul.mubr.f32.gmra.mrb[0].mxu0 %v3163
        %v3242 = vpop.f32.mrb[0].mxu0
        %v3243 = vadd.f32 0.0, %v3242
        %v3244 = vpop.f32.mrb[0].mxu0
        %3245 = vmatprep.mubr.f32.mxu0 0.0
        %3246 = vmatmul.mubr.f32.gmra.mrb[0].mxu0 %v3166
        %v3247 = vpop.f32.mrb[0].mxu0
        %v3248 = vadd.f32 0.0, %v3247
        %v3249 = vpop.f32.mrb[0].mxu0
        %3250 = vmatprep.mubr.f32.mxu0 0.0
        %3251 = vmatmul.mubr.f32.gmra.mrb[0].mxu0 %v3169
        %v3252 = vpop.f32.mrb[0].mxu0
        %v3253 = vadd.f32 0.0, %v3252
        %v3254 = vpop.f32.mrb[0].mxu0
        %3255 = vdwg.mxu0
        %3256 = vrot.lane.b32.xlu0 %v2686, 112
        %v3257 = vpop.permute.xlu0 %3256
        %3258 = vrot.lane.b32.xlu0 %v2691, 112
        %v3259 = vpop.permute.xlu0 %3258
        %3260 = vrot.lane.b32.xlu0 %v2696, 112
        %v3261 = vpop.permute.xlu0 %3260
        %3262 = vrot.lane.b32.xlu0 %v2701, 112
        %v3263 = vpop.permute.xlu0 %3262
        %3264 = vrot.lane.b32.xlu0 %v2686, 80
        %v3265 = vpop.permute.xlu0 %3264
        %3266 = vrot.lane.b32.xlu0 %v2691, 80
        %v3267 = vpop.permute.xlu0 %3266
        %3268 = vrot.lane.b32.xlu0 %v2696, 80
        %v3269 = vpop.permute.xlu0 %3268
        %3270 = vrot.lane.b32.xlu0 %v2701, 80
        %v3271 = vpop.permute.xlu0 %3270
        %v3272 = vsel %vm1244, %v3257, 0
        %v3274 = vsel %vm1244, %v3259, 0
        %v3276 = vsel %vm1244, %v3261, 0
        %v3278 = vsel %vm1244, %v3263, 0
        %v3280 = vsel %vm1244, %v3265, 0
        %v3282 = vsel %vm1244, %v3267, 0
        %v3284 = vsel %vm1244, %v3269, 0
        %v3286 = vsel %vm1244, %v3271, 0
        %3288 = vmatprep.subr.mxu0 0.0
        %3289 = vmatpush1.xpose.msra.mxu0 %v3280
        %3290 = vmatprep.subr.mxu0 0.0
        %3291 = vmatpush1.xpose.msra.mxu0 %v3282
        %3292 = vmatprep.subr.mxu0 0.0
        %3293 = vmatpush1.xpose.msra.mxu0 %v3284
        %3294 = vmatprep.subr.mxu0 0.0
        %3295 = vmatpush1.xpose.msra.mxu0 %v3286
        %3296 = vmatprep.subr.mxu0 0.0
        %3297 = vmatpush1.xpose.msra.mxu0 0.0
        %3298 = vmatprep.subr.mxu0 0.0
        %3299 = vmatpush1.xpose.msra.mxu0 0.0
        %3300 = vmatprep.subr.mxu0 0.0
        %3301 = vmatpush1.xpose.msra.mxu0 0.0
        %3302 = vmatprep.subr.mxu0 0.0
        %3303 = vmatpush1.xpose.msra.mxu0 0.0
        %3304 = vmatprep.subr.mxu0 0.0
        %3305 = vmatpush1.xpose.msra.mxu0 0.0
        %3306 = vmatprep.subr.mxu0 0.0
        %3307 = vmatpush1.xpose.msra.mxu0 0.0
        %3308 = vmatprep.subr.mxu0 0.0
        %3309 = vmatpush1.xpose.msra.mxu0 0.0
        %3310 = vmatprep.subr.mxu0 0.0
        %3311 = vmatpush1.xpose.msra.mxu0 0.0
        %3312 = vmatprep.subr.mxu0 0.0
        %3313 = vmatpush1.xpose.msra.mxu0 0.0
        %3314 = vmatprep.subr.mxu0 0.0
        %3315 = vmatpush1.xpose.msra.mxu0 0.0
        %3316 = vmatprep.subr.mxu0 0.0
        %3317 = vmatpush1.xpose.msra.mxu0 0.0
        %3318 = vmatprep.subr.mxu0 0.0
        %3319 = vmatpush1.xpose.msra.mxu0 0.0
        %3320 = vmatprep.subr.mxu0 0.0
        %3321 = vmatpush1.xpose.msra.mxu0 0.0
        %3322 = vmatprep.subr.mxu0 0.0
        %3323 = vmatpush1.xpose.msra.mxu0 0.0
        %3324 = vmatprep.subr.mxu0 0.0
        %3325 = vmatpush1.xpose.msra.mxu0 0.0
        %3326 = vmatprep.subr.mxu0 0.0
        %3327 = vmatpush1.xpose.msra.mxu0 0.0
        %3328 = vmatprep.subr.mxu0 0.0
        %3329 = vmatpush1.xpose.msra.mxu0 0.0
        %3330 = vmatprep.subr.mxu0 0.0
        %3331 = vmatpush1.xpose.msra.mxu0 0.0
        %3332 = vmatprep.subr.mxu0 0.0
        %3333 = vmatpush1.xpose.msra.mxu0 0.0
        %3334 = vmatprep.subr.mxu0 0.0
        %3335 = vmatpush1.xpose.msra.mxu0 0.0
        %3336 = vmatprep.subr.mxu0 0.0
        %3337 = vmatpush1.xpose.msra.mxu0 0.0
        %3338 = vmatprep.subr.mxu0 0.0
        %3339 = vmatpush1.xpose.msra.mxu0 0.0
        %3340 = vmatprep.subr.mxu0 0.0
        %3341 = vmatpush1.xpose.msra.mxu0 0.0
        %3342 = vmatprep.subr.mxu0 0.0
        %3343 = vmatpush1.xpose.msra.mxu0 0.0
        %3344 = vmatprep.subr.mxu0 0.0
        %3345 = vmatpush1.xpose.msra.mxu0 0.0
        %3346 = vmatprep.subr.mxu0 0.0
        %3347 = vmatpush1.xpose.msra.mxu0 0.0
        %3348 = vmatprep.subr.mxu0 0.0
        %3349 = vmatpush1.xpose.msra.mxu0 0.0
        %3350 = vmatprep.subr.mxu0 0.0
        %3351 = vmatpush1.xpose.msra.mxu0 0.0
        %3352 = vmatprep.mubr.f32.mxu0 0.0
        %3353 = vmatmul.mubr.f32.gmra.mrb[0].mxu0 %v3272
        %v3354 = vpop.f32.mrb[0].mxu0
        %v3355 = vadd.f32 0.0, %v3354
        %v3356 = vpop.f32.mrb[0].mxu0
        %3357 = vmatprep.mubr.f32.mxu0 0.0
        %3358 = vmatmul.mubr.f32.gmra.mrb[0].mxu0 %v3274
        %v3359 = vpop.f32.mrb[0].mxu0
        %v3360 = vadd.f32 0.0, %v3359
        %v3361 = vpop.f32.mrb[0].mxu0
        %3362 = vmatprep.mubr.f32.mxu0 0.0
        %3363 = vmatmul.mubr.f32.gmra.mrb[0].mxu0 %v3276
        %v3364 = vpop.f32.mrb[0].mxu0
        %v3365 = vadd.f32 0.0, %v3364
        %v3366 = vpop.f32.mrb[0].mxu0
        %3367 = vmatprep.mubr.f32.mxu0 0.0
        %3368 = vmatmul.mubr.f32.gmra.mrb[0].mxu0 %v3278
        %v3369 = vpop.f32.mrb[0].mxu0
        %v3370 = vadd.f32 0.0, %v3369
        %v3371 = vpop.f32.mrb[0].mxu0
        %3372 = vdwg.mxu0
        %3373 = vrot.lane.b32.xlu0 %v2706, 112
        %v3374 = vpop.permute.xlu0 %3373
        %3375 = vrot.lane.b32.xlu0 %v2711, 112
        %v3376 = vpop.permute.xlu0 %3375
        %3377 = vrot.lane.b32.xlu0 %v2716, 112
        %v3378 = vpop.permute.xlu0 %3377
        %3379 = vrot.lane.b32.xlu0 %v2721, 112
        %v3380 = vpop.permute.xlu0 %3379
        %3381 = vrot.lane.b32.xlu0 %v2706, 80
        %v3382 = vpop.permute.xlu0 %3381
        %3383 = vrot.lane.b32.xlu0 %v2711, 80
        %v3384 = vpop.permute.xlu0 %3383
        %3385 = vrot.lane.b32.xlu0 %v2716, 80
        %v3386 = vpop.permute.xlu0 %3385
        %3387 = vrot.lane.b32.xlu0 %v2721, 80
        %v3388 = vpop.permute.xlu0 %3387
        %v3389 = vsel %vm1244, %v3374, 0
        %v3391 = vsel %vm1244, %v3376, 0
        %v3393 = vsel %vm1244, %v3378, 0
        %v3395 = vsel %vm1244, %v3380, 0
        %v3397 = vsel %vm1244, %v3382, 0
        %v3399 = vsel %vm1244, %v3384, 0
        %v3401 = vsel %vm1244, %v3386, 0
        %v3403 = vsel %vm1244, %v3388, 0
        %3405 = vmatprep.subr.mxu0 0.0
        %3406 = vmatpush1.xpose.msra.mxu0 %v3397
        %3407 = vmatprep.subr.mxu0 0.0
        %3408 = vmatpush1.xpose.msra.mxu0 %v3399
        %3409 = vmatprep.subr.mxu0 0.0
        %3410 = vmatpush1.xpose.msra.mxu0 %v3401
        %3411 = vmatprep.subr.mxu0 0.0
        %3412 = vmatpush1.xpose.msra.mxu0 %v3403
        %3413 = vmatprep.subr.mxu0 0.0
        %3414 = vmatpush1.xpose.msra.mxu0 0.0
        %3415 = vmatprep.subr.mxu0 0.0
        %3416 = vmatpush1.xpose.msra.mxu0 0.0
        %3417 = vmatprep.subr.mxu0 0.0
        %3418 = vmatpush1.xpose.msra.mxu0 0.0
        %3419 = vmatprep.subr.mxu0 0.0
        %3420 = vmatpush1.xpose.msra.mxu0 0.0
        %3421 = vmatprep.subr.mxu0 0.0
        %3422 = vmatpush1.xpose.msra.mxu0 0.0
        %3423 = vmatprep.subr.mxu0 0.0
        %3424 = vmatpush1.xpose.msra.mxu0 0.0
        %3425 = vmatprep.subr.mxu0 0.0
        %3426 = vmatpush1.xpose.msra.mxu0 0.0
        %3427 = vmatprep.subr.mxu0 0.0
        %3428 = vmatpush1.xpose.msra.mxu0 0.0
        %3429 = vmatprep.subr.mxu0 0.0
        %3430 = vmatpush1.xpose.msra.mxu0 0.0
        %3431 = vmatprep.subr.mxu0 0.0
        %3432 = vmatpush1.xpose.msra.mxu0 0.0
        %3433 = vmatprep.subr.mxu0 0.0
        %3434 = vmatpush1.xpose.msra.mxu0 0.0
        %3435 = vmatprep.subr.mxu0 0.0
        %3436 = vmatpush1.xpose.msra.mxu0 0.0
        %3437 = vmatprep.subr.mxu0 0.0
        %3438 = vmatpush1.xpose.msra.mxu0 0.0
        %3439 = vmatprep.subr.mxu0 0.0
        %3440 = vmatpush1.xpose.msra.mxu0 0.0
        %3441 = vmatprep.subr.mxu0 0.0
        %3442 = vmatpush1.xpose.msra.mxu0 0.0
        %3443 = vmatprep.subr.mxu0 0.0
        %3444 = vmatpush1.xpose.msra.mxu0 0.0
        %3445 = vmatprep.subr.mxu0 0.0
        %3446 = vmatpush1.xpose.msra.mxu0 0.0
        %3447 = vmatprep.subr.mxu0 0.0
        %3448 = vmatpush1.xpose.msra.mxu0 0.0
        %3449 = vmatprep.subr.mxu0 0.0
        %3450 = vmatpush1.xpose.msra.mxu0 0.0
        %3451 = vmatprep.subr.mxu0 0.0
        %3452 = vmatpush1.xpose.msra.mxu0 0.0
        %3453 = vmatprep.subr.mxu0 0.0
        %3454 = vmatpush1.xpose.msra.mxu0 0.0
        %3455 = vmatprep.subr.mxu0 0.0
        %3456 = vmatpush1.xpose.msra.mxu0 0.0
        %3457 = vmatprep.subr.mxu0 0.0
        %3458 = vmatpush1.xpose.msra.mxu0 0.0
        %3459 = vmatprep.subr.mxu0 0.0
        %3460 = vmatpush1.xpose.msra.mxu0 0.0
        %3461 = vmatprep.subr.mxu0 0.0
        %3462 = vmatpush1.xpose.msra.mxu0 0.0
        %3463 = vmatprep.subr.mxu0 0.0
        %3464 = vmatpush1.xpose.msra.mxu0 0.0
        %3465 = vmatprep.subr.mxu0 0.0
        %3466 = vmatpush1.xpose.msra.mxu0 0.0
        %3467 = vmatprep.subr.mxu0 0.0
        %3468 = vmatpush1.xpose.msra.mxu0 0.0
        %3469 = vmatprep.mubr.f32.mxu0 0.0
        %3470 = vmatmul.mubr.f32.gmra.mrb[0].mxu0 %v3389
        %v3471 = vpop.f32.mrb[0].mxu0
        %v3472 = vadd.f32 0.0, %v3471
        %v3473 = vpop.f32.mrb[0].mxu0
        %3474 = vmatprep.mubr.f32.mxu0 0.0
        %3475 = vmatmul.mubr.f32.gmra.mrb[0].mxu0 %v3391
        %v3476 = vpop.f32.mrb[0].mxu0
        %v3477 = vadd.f32 0.0, %v3476
        %v3478 = vpop.f32.mrb[0].mxu0
        %3479 = vmatprep.mubr.f32.mxu0 0.0
        %3480 = vmatmul.mubr.f32.gmra.mrb[0].mxu0 %v3393
        %v3481 = vpop.f32.mrb[0].mxu0
        %v3482 = vadd.f32 0.0, %v3481
        %v3483 = vpop.f32.mrb[0].mxu0
        %3484 = vmatprep.mubr.f32.mxu0 0.0
        %3485 = vmatmul.mubr.f32.gmra.mrb[0].mxu0 %v3395
        %v3486 = vpop.f32.mrb[0].mxu0
        %v3487 = vadd.f32 0.0, %v3486
        %v3488 = vpop.f32.mrb[0].mxu0
        %3489 = vdwg.mxu0
        %v3490 = vsel %vm1015, %v3355, -inf
        %3491 = vmax.xlane.f32.xlu0 %v3490
        %v3492 = vpop.xlane.xlu0 %3491
        %v3493 = vsel %vm1015, %v3360, -inf
        %3494 = vmax.xlane.f32.xlu0 %v3493
        %v3495 = vpop.xlane.xlu0 %3494
        %v3496 = vsel %vm1015, %v3365, -inf
        %3497 = vmax.xlane.f32.xlu0 %v3496
        %v3498 = vpop.xlane.xlu0 %3497
        %v3499 = vsel %vm1015, %v3370, -inf
        %3500 = vmax.xlane.f32.xlu0 %v3499
        %v3501 = vpop.xlane.xlu0 %3500
        %v3502 = vsel %vm1015, %v3472, -inf
        %3503 = vmax.xlane.f32.xlu0 %v3502
        %v3504 = vpop.xlane.xlu0 %3503
        %v3505 = vsel %vm1015, %v3477, -inf
        %3506 = vmax.xlane.f32.xlu0 %v3505
        %v3507 = vpop.xlane.xlu0 %3506
        %v3508 = vsel %vm1015, %v3482, -inf
        %3509 = vmax.xlane.f32.xlu0 %v3508
        %v3510 = vpop.xlane.xlu0 %3509
        %v3511 = vsel %vm1015, %v3487, -inf
        %3512 = vmax.xlane.f32.xlu0 %v3511
        %v3513 = vpop.xlane.xlu0 %3512
        %v3514 = vsub.f32 %v3355, %v3492
        %v3515 = vsub.f32 %v3360, %v3495
        %v3516 = vsub.f32 %v3365, %v3498
        %v3517 = vsub.f32 %v3370, %v3501
        %v3518 = vsub.f32 %v3472, %v3504
        %v3519 = vsub.f32 %v3477, %v3507
        %v3520 = vsub.f32 %v3482, %v3510
        %v3521 = vsub.f32 %v3487, %v3513
        %v3522 = vmul.f32 %v3514, 1.442695
        %v3523 = vpow.pop %v3522
        %v3524 = vmul.f32 %v3515, 1.442695
        %v3525 = vpow.pop %v3524
        %v3526 = vmul.f32 %v3516, 1.442695
        %v3527 = vpow.pop %v3526
        %v3528 = vmul.f32 %v3517, 1.442695
        %v3529 = vpow.pop %v3528
        %v3530 = vmul.f32 %v3518, 1.442695
        %v3531 = vpow.pop %v3530
        %v3532 = vmul.f32 %v3519, 1.442695
        %v3533 = vpow.pop %v3532
        %v3534 = vmul.f32 %v3520, 1.442695
        %v3535 = vpow.pop %v3534
        %v3536 = vmul.f32 %v3521, 1.442695
        %v3537 = vpow.pop %v3536
        %v3538 = vsel %vm1015, %v3523, 0.0
        %3539 = vadd.xlane.f32.xlu0 %v3538
        %v3540 = vpop.xlane.xlu0 %3539
        %v3541 = vsel %vm1015, %v3525, 0.0
        %3542 = vadd.xlane.f32.xlu0 %v3541
        %v3543 = vpop.xlane.xlu0 %3542
        %v3544 = vsel %vm1015, %v3527, 0.0
        %3545 = vadd.xlane.f32.xlu0 %v3544
        %v3546 = vpop.xlane.xlu0 %3545
        %v3547 = vsel %vm1015, %v3529, 0.0
        %3548 = vadd.xlane.f32.xlu0 %v3547
        %v3549 = vpop.xlane.xlu0 %3548
        %v3550 = vsel %vm1015, %v3531, 0.0
        %3551 = vadd.xlane.f32.xlu0 %v3550
        %v3552 = vpop.xlane.xlu0 %3551
        %v3553 = vsel %vm1015, %v3533, 0.0
        %3554 = vadd.xlane.f32.xlu0 %v3553
        %v3555 = vpop.xlane.xlu0 %3554
        %v3556 = vsel %vm1015, %v3535, 0.0
        %3557 = vadd.xlane.f32.xlu0 %v3556
        %v3558 = vpop.xlane.xlu0 %3557
        %v3559 = vsel %vm1015, %v3537, 0.0
        %3560 = vadd.xlane.f32.xlu0 %v3559
        %v3561 = vpop.xlane.xlu0 %3560
        %v3562 = vrcp.pop %v3540
        %v3563 = vmul.f32 %v3523, %v3562
        %v3564 = vrcp.pop %v3543
        %v3565 = vmul.f32 %v3525, %v3564
        %v3566 = vrcp.pop %v3546
        %v3567 = vmul.f32 %v3527, %v3566
        %v3568 = vrcp.pop %v3549
        %v3569 = vmul.f32 %v3529, %v3568
        %v3570 = vrcp.pop %v3552
        %v3571 = vmul.f32 %v3531, %v3570
        %v3572 = vrcp.pop %v3555
        %v3573 = vmul.f32 %v3533, %v3572
        %v3574 = vrcp.pop %v3558
        %v3575 = vmul.f32 %v3535, %v3574
        %v3576 = vrcp.pop %v3561
        %v3577 = vmul.f32 %v3537, %v3576
        %3578 = vrot.lane.b32.xlu0 %v2686, 48
        %v3579 = vpop.permute.xlu0 %3578
        %3580 = vrot.lane.b32.xlu0 %v2691, 48
        %v3581 = vpop.permute.xlu0 %3580
        %3582 = vrot.lane.b32.xlu0 %v2696, 48
        %v3583 = vpop.permute.xlu0 %3582
        %3584 = vrot.lane.b32.xlu0 %v2701, 48
        %v3585 = vpop.permute.xlu0 %3584
        %v3591 = vsel %vm1015, %v3563, 0
        %v3594 = vsel %vm1015, %v3565, 0
        %v3597 = vsel %vm1015, %v3567, 0
        %v3600 = vsel %vm1015, %v3569, 0
        %3602 = vmatprep.subr.mxu0 0.0
        %3603 = vmatpush1.msra.mxu0 %v3579
        %3604 = vmatprep.subr.mxu0 0.0
        %3605 = vmatpush1.msra.mxu0 %v3581
        %3606 = vmatprep.subr.mxu0 0.0
        %3607 = vmatpush1.msra.mxu0 %v3583
        %3608 = vmatprep.subr.mxu0 0.0
        %3609 = vmatpush1.msra.mxu0 %v3585
        %3610 = vmatprep.subr.mxu0 0.0
        %3611 = vmatpush1.msra.mxu0 0.0
        %3612 = vmatprep.subr.mxu0 0.0
        %3613 = vmatpush1.msra.mxu0 0.0
        %3614 = vmatprep.subr.mxu0 0.0
        %3615 = vmatpush1.msra.mxu0 0.0
        %3616 = vmatprep.subr.mxu0 0.0
        %3617 = vmatpush1.msra.mxu0 0.0
        %3618 = vmatprep.subr.mxu0 0.0
        %3619 = vmatpush1.msra.mxu0 0.0
        %3620 = vmatprep.subr.mxu0 0.0
        %3621 = vmatpush1.msra.mxu0 0.0
        %3622 = vmatprep.subr.mxu0 0.0
        %3623 = vmatpush1.msra.mxu0 0.0
        %3624 = vmatprep.subr.mxu0 0.0
        %3625 = vmatpush1.msra.mxu0 0.0
        %3626 = vmatprep.subr.mxu0 0.0
        %3627 = vmatpush1.msra.mxu0 0.0
        %3628 = vmatprep.subr.mxu0 0.0
        %3629 = vmatpush1.msra.mxu0 0.0
        %3630 = vmatprep.subr.mxu0 0.0
        %3631 = vmatpush1.msra.mxu0 0.0
        %3632 = vmatprep.subr.mxu0 0.0
        %3633 = vmatpush1.msra.mxu0 0.0
        %3634 = vmatprep.subr.mxu0 0.0
        %3635 = vmatpush1.msra.mxu0 0.0
        %3636 = vmatprep.subr.mxu0 0.0
        %3637 = vmatpush1.msra.mxu0 0.0
        %3638 = vmatprep.subr.mxu0 0.0
        %3639 = vmatpush1.msra.mxu0 0.0
        %3640 = vmatprep.subr.mxu0 0.0
        %3641 = vmatpush1.msra.mxu0 0.0
        %3642 = vmatprep.subr.mxu0 0.0
        %3643 = vmatpush1.msra.mxu0 0.0
        %3644 = vmatprep.subr.mxu0 0.0
        %3645 = vmatpush1.msra.mxu0 0.0
        %3646 = vmatprep.subr.mxu0 0.0
        %3647 = vmatpush1.msra.mxu0 0.0
        %3648 = vmatprep.subr.mxu0 0.0
        %3649 = vmatpush1.msra.mxu0 0.0
        %3650 = vmatprep.subr.mxu0 0.0
        %3651 = vmatpush1.msra.mxu0 0.0
        %3652 = vmatprep.subr.mxu0 0.0
        %3653 = vmatpush1.msra.mxu0 0.0
        %3654 = vmatprep.subr.mxu0 0.0
        %3655 = vmatpush1.msra.mxu0 0.0
        %3656 = vmatprep.subr.mxu0 0.0
        %3657 = vmatpush1.msra.mxu0 0.0
        %3658 = vmatprep.subr.mxu0 0.0
        %3659 = vmatpush1.msra.mxu0 0.0
        %3660 = vmatprep.subr.mxu0 0.0
        %3661 = vmatpush1.msra.mxu0 0.0
        %3662 = vmatprep.subr.mxu0 0.0
        %3663 = vmatpush1.msra.mxu0 0.0
        %3664 = vmatprep.subr.mxu0 0.0
        %3665 = vmatpush1.msra.mxu0 0.0
        %3666 = vmatprep.mubr.f32.mxu0 0.0
        %3667 = vmatmul.mubr.f32.gmra.mrb[0].mxu0 %v3591
        %v3668 = vpop.f32.mrb[0].mxu0
        %v3669 = vadd.f32 0.0, %v3668
        %v3670 = vpop.f32.mrb[0].mxu0
        %3671 = vmatprep.mubr.f32.mxu0 0.0
        %3672 = vmatmul.mubr.f32.gmra.mrb[0].mxu0 %v3594
        %v3673 = vpop.f32.mrb[0].mxu0
        %v3674 = vadd.f32 0.0, %v3673
        %v3675 = vpop.f32.mrb[0].mxu0
        %3676 = vmatprep.mubr.f32.mxu0 0.0
        %3677 = vmatmul.mubr.f32.gmra.mrb[0].mxu0 %v3597
        %v3678 = vpop.f32.mrb[0].mxu0
        %v3679 = vadd.f32 0.0, %v3678
        %v3680 = vpop.f32.mrb[0].mxu0
        %3681 = vmatprep.mubr.f32.mxu0 0.0
        %3682 = vmatmul.mubr.f32.gmra.mrb[0].mxu0 %v3600
        %v3683 = vpop.f32.mrb[0].mxu0
        %v3684 = vadd.f32 0.0, %v3683
        %v3685 = vpop.f32.mrb[0].mxu0
        %3686 = vdwg.mxu0
        %3687 = vrot.lane.b32.xlu0 %v2706, 48
        %v3688 = vpop.permute.xlu0 %3687
        %3689 = vrot.lane.b32.xlu0 %v2711, 48
        %v3690 = vpop.permute.xlu0 %3689
        %3691 = vrot.lane.b32.xlu0 %v2716, 48
        %v3692 = vpop.permute.xlu0 %3691
        %3693 = vrot.lane.b32.xlu0 %v2721, 48
        %v3694 = vpop.permute.xlu0 %3693
        %v3700 = vsel %vm1015, %v3571, 0
        %v3703 = vsel %vm1015, %v3573, 0
        %v3706 = vsel %vm1015, %v3575, 0
        %v3709 = vsel %vm1015, %v3577, 0
        %3711 = vmatprep.subr.mxu0 0.0
        %3712 = vmatpush1.msra.mxu0 %v3688
        %3713 = vmatprep.subr.mxu0 0.0
        %3714 = vmatpush1.msra.mxu0 %v3690
        %3715 = vmatprep.subr.mxu0 0.0
        %3716 = vmatpush1.msra.mxu0 %v3692
        %3717 = vmatprep.subr.mxu0 0.0
        %3718 = vmatpush1.msra.mxu0 %v3694
        %3719 = vmatprep.subr.mxu0 0.0
        %3720 = vmatpush1.msra.mxu0 0.0
        %3721 = vmatprep.subr.mxu0 0.0
        %3722 = vmatpush1.msra.mxu0 0.0
        %3723 = vmatprep.subr.mxu0 0.0
        %3724 = vmatpush1.msra.mxu0 0.0
        %3725 = vmatprep.subr.mxu0 0.0
        %3726 = vmatpush1.msra.mxu0 0.0
        %3727 = vmatprep.subr.mxu0 0.0
        %3728 = vmatpush1.msra.mxu0 0.0
        %3729 = vmatprep.subr.mxu0 0.0
        %3730 = vmatpush1.msra.mxu0 0.0
        %3731 = vmatprep.subr.mxu0 0.0
        %3732 = vmatpush1.msra.mxu0 0.0
        %3733 = vmatprep.subr.mxu0 0.0
        %3734 = vmatpush1.msra.mxu0 0.0
        %3735 = vmatprep.subr.mxu0 0.0
        %3736 = vmatpush1.msra.mxu0 0.0
        %3737 = vmatprep.subr.mxu0 0.0
        %3738 = vmatpush1.msra.mxu0 0.0
        %3739 = vmatprep.subr.mxu0 0.0
        %3740 = vmatpush1.msra.mxu0 0.0
        %3741 = vmatprep.subr.mxu0 0.0
        %3742 = vmatpush1.msra.mxu0 0.0
        %3743 = vmatprep.subr.mxu0 0.0
        %3744 = vmatpush1.msra.mxu0 0.0
        %3745 = vmatprep.subr.mxu0 0.0
        %3746 = vmatpush1.msra.mxu0 0.0
        %3747 = vmatprep.subr.mxu0 0.0
        %3748 = vmatpush1.msra.mxu0 0.0
        %3749 = vmatprep.subr.mxu0 0.0
        %3750 = vmatpush1.msra.mxu0 0.0
        %3751 = vmatprep.subr.mxu0 0.0
        %3752 = vmatpush1.msra.mxu0 0.0
        %3753 = vmatprep.subr.mxu0 0.0
        %3754 = vmatpush1.msra.mxu0 0.0
        %3755 = vmatprep.subr.mxu0 0.0
        %3756 = vmatpush1.msra.mxu0 0.0
        %3757 = vmatprep.subr.mxu0 0.0
        %3758 = vmatpush1.msra.mxu0 0.0
        %3759 = vmatprep.subr.mxu0 0.0
        %3760 = vmatpush1.msra.mxu0 0.0
        %3761 = vmatprep.subr.mxu0 0.0
        %3762 = vmatpush1.msra.mxu0 0.0
        %3763 = vmatprep.subr.mxu0 0.0
        %3764 = vmatpush1.msra.mxu0 0.0
        %3765 = vmatprep.subr.mxu0 0.0
        %3766 = vmatpush1.msra.mxu0 0.0
        %3767 = vmatprep.subr.mxu0 0.0
        %3768 = vmatpush1.msra.mxu0 0.0
        %3769 = vmatprep.subr.mxu0 0.0
        %3770 = vmatpush1.msra.mxu0 0.0
        %3771 = vmatprep.subr.mxu0 0.0
        %3772 = vmatpush1.msra.mxu0 0.0
        %3773 = vmatprep.subr.mxu0 0.0
        %3774 = vmatpush1.msra.mxu0 0.0
        %3775 = vmatprep.mubr.f32.mxu0 0.0
        %3776 = vmatmul.mubr.f32.gmra.mrb[0].mxu0 %v3700
        %v3777 = vpop.f32.mrb[0].mxu0
        %v3778 = vadd.f32 0.0, %v3777
        %v3779 = vpop.f32.mrb[0].mxu0
        %3780 = vmatprep.mubr.f32.mxu0 0.0
        %3781 = vmatmul.mubr.f32.gmra.mrb[0].mxu0 %v3703
        %v3782 = vpop.f32.mrb[0].mxu0
        %v3783 = vadd.f32 0.0, %v3782
        %v3784 = vpop.f32.mrb[0].mxu0
        %3785 = vmatprep.mubr.f32.mxu0 0.0
        %3786 = vmatmul.mubr.f32.gmra.mrb[0].mxu0 %v3706
        %v3787 = vpop.f32.mrb[0].mxu0
        %v3788 = vadd.f32 0.0, %v3787
        %v3789 = vpop.f32.mrb[0].mxu0
        %3790 = vmatprep.mubr.f32.mxu0 0.0
        %3791 = vmatmul.mubr.f32.gmra.mrb[0].mxu0 %v3709
        %v3792 = vpop.f32.mrb[0].mxu0
        %v3793 = vadd.f32 0.0, %v3792
        %v3794 = vpop.f32.mrb[0].mxu0
        %3795 = vdwg.mxu0
        %3804 = vrot.lane.b32.xlu0 %v3669, 16
        %v3805 = vpop.permute.xlu0 %3804
        %3806 = vrot.lane.b32.xlu0 %v3674, 16
        %v3807 = vpop.permute.xlu0 %3806
        %3808 = vrot.lane.b32.xlu0 %v3679, 16
        %v3809 = vpop.permute.xlu0 %3808
        %3810 = vrot.lane.b32.xlu0 %v3684, 16
        %v3811 = vpop.permute.xlu0 %3810
        %3812 = vrot.lane.b32.xlu0 %v3778, 16
        %v3813 = vpop.permute.xlu0 %3812
        %3814 = vrot.lane.b32.xlu0 %v3783, 16
        %v3815 = vpop.permute.xlu0 %3814
        %3816 = vrot.lane.b32.xlu0 %v3788, 16
        %v3817 = vpop.permute.xlu0 %3816
        %3818 = vrot.lane.b32.xlu0 %v3793, 16
        %v3819 = vpop.permute.xlu0 %3818
        %v3828 = vsel %vm1244, %v3129, %v3805
        %v3829 = vsel %vm1244, %v3134, %v3807
        %v3830 = vsel %vm1244, %v3139, %v3809
        %v3831 = vsel %vm1244, %v3144, %v3811
        %v3832 = vsel %vm1244, %v3238, %v3813
        %v3833 = vsel %vm1244, %v3243, %v3815
        %v3834 = vsel %vm1244, %v3248, %v3817
        %v3835 = vsel %vm1244, %v3253, %v3819
        %v3837 = vlaneseq
        %v3838 = vshrl.u32 %v3837, 7
        %v3839 = vsub.s32 0, %v3838
        %v3840 = vrot.slane %v2588, %v3839
        %v3843 = vsel %vm1015, %v3828, 0
        %v3846 = vsel %vm1015, %v3829, 0
        %v3849 = vsel %vm1015, %v3830, 0
        %v3852 = vsel %vm1015, %v3831, 0
        %v3855 = vsel %vm1015, %v3832, 0
        %v3858 = vsel %vm1015, %v3833, 0
        %v3861 = vsel %vm1015, %v3834, 0
        %v3864 = vsel %vm1015, %v3835, 0
        %3866 = vmatprep.subr.mxu0 0.0
        %3867 = vmatpush1.msra.mxu0 %v2584
        %3868 = vmatprep.subr.mxu0 0.0
        %3869 = vmatpush1.msra.mxu0 %v2585
        %3870 = vmatprep.subr.mxu0 0.0
        %3871 = vmatpush1.msra.mxu0 %v2586
        %3872 = vmatprep.subr.mxu0 0.0
        %3873 = vmatpush1.msra.mxu0 %v2587
        %3874 = vmatprep.subr.mxu0 0.0
        %3875 = vmatpush1.msra.mxu0 0.0
        %3876 = vmatprep.subr.mxu0 0.0
        %3877 = vmatpush1.msra.mxu0 0.0
        %3878 = vmatprep.subr.mxu0 0.0
        %3879 = vmatpush1.msra.mxu0 0.0
        %3880 = vmatprep.subr.mxu0 0.0
        %3881 = vmatpush1.msra.mxu0 0.0
        %3882 = vmatprep.subr.mxu0 0.0
        %3883 = vmatpush1.msra.mxu0 0.0
        %3884 = vmatprep.subr.mxu0 0.0
        %3885 = vmatpush1.msra.mxu0 0.0
        %3886 = vmatprep.subr.mxu0 0.0
        %3887 = vmatpush1.msra.mxu0 0.0
        %3888 = vmatprep.subr.mxu0 0.0
        %3889 = vmatpush1.msra.mxu0 0.0
        %3890 = vmatprep.subr.mxu0 0.0
        %3891 = vmatpush1.msra.mxu0 0.0
        %3892 = vmatprep.subr.mxu0 0.0
        %3893 = vmatpush1.msra.mxu0 0.0
        %3894 = vmatprep.subr.mxu0 0.0
        %3895 = vmatpush1.msra.mxu0 0.0
        %3896 = vmatprep.subr.mxu0 0.0
        %3897 = vmatpush1.msra.mxu0 0.0
        %3898 = vmatprep.subr.mxu0 0.0
        %3899 = vmatpush1.msra.mxu0 0.0
        %3900 = vmatprep.subr.mxu0 0.0
        %3901 = vmatpush1.msra.mxu0 0.0
        %3902 = vmatprep.subr.mxu0 0.0
        %3903 = vmatpush1.msra.mxu0 0.0
        %3904 = vmatprep.subr.mxu0 0.0
        %3905 = vmatpush1.msra.mxu0 0.0
        %3906 = vmatprep.subr.mxu0 0.0
        %3907 = vmatpush1.msra.mxu0 0.0
        %3908 = vmatprep.subr.mxu0 0.0
        %3909 = vmatpush1.msra.mxu0 0.0
        %3910 = vmatprep.subr.mxu0 0.0
        %3911 = vmatpush1.msra.mxu0 0.0
        %3912 = vmatprep.subr.mxu0 0.0
        %3913 = vmatpush1.msra.mxu0 0.0
        %3914 = vmatprep.subr.mxu0 0.0
        %3915 = vmatpush1.msra.mxu0 0.0
        %3916 = vmatprep.subr.mxu0 0.0
        %3917 = vmatpush1.msra.mxu0 0.0
        %3918 = vmatprep.subr.mxu0 0.0
        %3919 = vmatpush1.msra.mxu0 0.0
        %3920 = vmatprep.subr.mxu0 0.0
        %3921 = vmatpush1.msra.mxu0 0.0
        %3922 = vmatprep.subr.mxu0 0.0
        %3923 = vmatpush1.msra.mxu0 0.0
        %3924 = vmatprep.subr.mxu0 0.0
        %3925 = vmatpush1.msra.mxu0 0.0
        %3926 = vmatprep.subr.mxu0 0.0
        %3927 = vmatpush1.msra.mxu0 0.0
        %3928 = vmatprep.subr.mxu0 0.0
        %3929 = vmatpush1.msra.mxu0 0.0
        %3930 = vmatprep.mubr.f32.mxu0 0.0
        %3931 = vmatmul.mubr.f32.gmra.mrb[0].mxu0 %v3843
        %v3932 = vpop.f32.mrb[0].mxu0
        %v3933 = vadd.f32 %v3840, %v3932
        %v3934 = vpop.f32.mrb[0].mxu0
        %3935 = vmatprep.mubr.f32.mxu0 0.0
        %3936 = vmatmul.mubr.f32.gmra.mrb[0].mxu0 %v3846
        %v3937 = vpop.f32.mrb[0].mxu0
        %v3938 = vadd.f32 %v3840, %v3937
        %v3939 = vpop.f32.mrb[0].mxu0
        %3940 = vmatprep.mubr.f32.mxu0 0.0
        %3941 = vmatmul.mubr.f32.gmra.mrb[0].mxu0 %v3849
        %v3942 = vpop.f32.mrb[0].mxu0
        %v3943 = vadd.f32 %v3840, %v3942
        %v3944 = vpop.f32.mrb[0].mxu0
        %3945 = vmatprep.mubr.f32.mxu0 0.0
        %3946 = vmatmul.mubr.f32.gmra.mrb[0].mxu0 %v3852
        %v3947 = vpop.f32.mrb[0].mxu0
        %v3948 = vadd.f32 %v3840, %v3947
        %v3949 = vpop.f32.mrb[0].mxu0
        %3950 = vmatprep.mubr.f32.mxu0 0.0
        %3951 = vmatmul.mubr.f32.gmra.mrb[0].mxu0 %v3855
        %v3952 = vpop.f32.mrb[0].mxu0
        %v3953 = vadd.f32 %v3840, %v3952
        %v3954 = vpop.f32.mrb[0].mxu0
        %3955 = vmatprep.mubr.f32.mxu0 0.0
        %3956 = vmatmul.mubr.f32.gmra.mrb[0].mxu0 %v3858
        %v3957 = vpop.f32.mrb[0].mxu0
        %v3958 = vadd.f32 %v3840, %v3957
        %v3959 = vpop.f32.mrb[0].mxu0
        %3960 = vmatprep.mubr.f32.mxu0 0.0
        %3961 = vmatmul.mubr.f32.gmra.mrb[0].mxu0 %v3861
        %v3962 = vpop.f32.mrb[0].mxu0
        %v3963 = vadd.f32 %v3840, %v3962
        %v3964 = vpop.f32.mrb[0].mxu0
        %3965 = vmatprep.mubr.f32.mxu0 0.0
        %3966 = vmatmul.mubr.f32.gmra.mrb[0].mxu0 %v3864
        %v3967 = vpop.f32.mrb[0].mxu0
        %v3968 = vadd.f32 %v3840, %v3967
        %v3969 = vpop.f32.mrb[0].mxu0
        %3970 = vdwg.mxu0
        %v3971 = vadd.f32 %v2499, %v3933
        %v3972 = vadd.f32 %v2500, %v3938
        %v3973 = vadd.f32 %v2501, %v3943
        %v3974 = vadd.f32 %v2502, %v3948
        %v3975 = vadd.f32 %v2503, %v3953
        %v3976 = vadd.f32 %v2504, %v3958
        %v3977 = vadd.f32 %v2505, %v3963
        %v3978 = vadd.f32 %v2506, %v3968
        %3979 = vst.msk [vmem:[#allocation2] sm:$0xff] %vm1015, %v3971
        %3980 = vst.msk [vmem:[#allocation2 + $0x8] sm:$0xff] %vm1015, %v3972
        %3981 = vst.msk [vmem:[#allocation2 + $0x10] sm:$0xff] %vm1015, %v3973
        %3982 = vst.msk [vmem:[#allocation2 + $0x18] sm:$0xff] %vm1015, %v3974
        %3983 = vst.msk [vmem:[#allocation2 + $0x20] sm:$0xff] %vm1015, %v3975
        %3984 = vst.msk [vmem:[#allocation2 + $0x28] sm:$0xff] %vm1015, %v3976
        %3985 = vst.msk [vmem:[#allocation2 + $0x30] sm:$0xff] %vm1015, %v3977
        %3986 = vst.msk [vmem:[#allocation2 + $0x38] sm:$0xff] %vm1015, %v3978
      $region92: #{t5_forward.1} parent=83 // pred_fallthru
        _
      %v3987 = vld [vmem:[#allocation2] sm:$0xff]
      %v3988 = vld [vmem:[#allocation2 + $0x8] sm:$0xff]
      %v3989 = vld [vmem:[#allocation2 + $0x10] sm:$0xff]
      %v3990 = vld [vmem:[#allocation2 + $0x18] sm:$0xff]
      %v3991 = vld [vmem:[#allocation2 + $0x20] sm:$0xff]
      %v3992 = vld [vmem:[#allocation2 + $0x28] sm:$0xff]
      %v3993 = vld [vmem:[#allocation2 + $0x30] sm:$0xff]
      %v3994 = vld [vmem:[#allocation2 + $0x38] sm:$0xff]
      %v3995 = vmul.f32 %v3987, %v3987
      %v3996 = vmul.f32 %v3988, %v3988
      %v3997 = vmul.f32 %v3989, %v3989
      %v3998 = vmul.f32 %v3990, %v3990
      %v3999 = vmul.f32 %v3991, %v3991
      %v4000 = vmul.f32 %v3992, %v3992
      %v4001 = vmul.f32 %v3993, %v3993
      %v4002 = vmul.f32 %v3994, %v3994
      %v4003 = vsel %vm1015, %v3995, 0.0
      %4004 = vadd.xlane.f32.xlu0 %v4003
      %v4005 = vpop.xlane.xlu0 %4004
      %v4006 = vsel %vm1015, %v3996, 0.0
      %4007 = vadd.xlane.f32.xlu0 %v4006
      %v4008 = vpop.xlane.xlu0 %4007
      %v4009 = vsel %vm1015, %v3997, 0.0
      %4010 = vadd.xlane.f32.xlu0 %v4009
      %v4011 = vpop.xlane.xlu0 %4010
      %v4012 = vsel %vm1015, %v3998, 0.0
      %4013 = vadd.xlane.f32.xlu0 %v4012
      %v4014 = vpop.xlane.xlu0 %4013
      %v4015 = vsel %vm1015, %v3999, 0.0
      %4016 = vadd.xlane.f32.xlu0 %v4015
      %v4017 = vpop.xlane.xlu0 %4016
      %v4018 = vsel %vm1015, %v4000, 0.0
      %4019 = vadd.xlane.f32.xlu0 %v4018
      %v4020 = vpop.xlane.xlu0 %4019
      %v4021 = vsel %vm1015, %v4001, 0.0
      %4022 = vadd.xlane.f32.xlu0 %v4021
      %v4023 = vpop.xlane.xlu0 %4022
      %v4024 = vsel %vm1015, %v4002, 0.0
      %4025 = vadd.xlane.f32.xlu0 %v4024
      %v4026 = vpop.xlane.xlu0 %4025
      %v4027 = vmul.f32 %v4005, %v1040
      %v4028 = vmul.f32 %v4008, %v1040
      %v4029 = vmul.f32 %v4011, %v1040
      %v4030 = vmul.f32 %v4014, %v1040
      %v4031 = vmul.f32 %v4017, %v1040
      %v4032 = vmul.f32 %v4020, %v1040
      %v4033 = vmul.f32 %v4023, %v1040
      %v4034 = vmul.f32 %v4026, %v1040
      %v4035 = vadd.f32 %v4027, 1e-06
      %v4036 = vadd.f32 %v4028, 1e-06
      %v4037 = vadd.f32 %v4029, 1e-06
      %v4038 = vadd.f32 %v4030, 1e-06
      %v4039 = vadd.f32 %v4031, 1e-06
      %v4040 = vadd.f32 %v4032, 1e-06
      %v4041 = vadd.f32 %v4033, 1e-06
      %v4042 = vadd.f32 %v4034, 1e-06
      %v4043 = vrsqrt.pop %v4035
      %v4044 = vrsqrt.pop %v4036
      %v4045 = vrsqrt.pop %v4037
      %v4046 = vrsqrt.pop %v4038
      %v4047 = vrsqrt.pop %v4039
      %v4048 = vrsqrt.pop %v4040
      %v4049 = vrsqrt.pop %v4041
      %v4050 = vrsqrt.pop %v4042
      %v4051 = vmul.f32 %v3987, %v4043
      %v4052 = vmul.f32 %v3988, %v4044
      %v4053 = vmul.f32 %v3989, %v4045
      %v4054 = vmul.f32 %v3990, %v4046
      %v4055 = vmul.f32 %v3991, %v4047
      %v4056 = vmul.f32 %v3992, %v4048
      %v4057 = vmul.f32 %v3993, %v4049
      %v4058 = vmul.f32 %v3994, %v4050
      %v4059 = vmul.f32 %v1077, %v4051
      %v4060 = vmul.f32 %v1077, %v4052
      %v4061 = vmul.f32 %v1077, %v4053
      %v4062 = vmul.f32 %v1077, %v4054
      %v4063 = vmul.f32 %v1077, %v4055
      %v4064 = vmul.f32 %v1077, %v4056
      %v4065 = vmul.f32 %v1077, %v4057
      %v4066 = vmul.f32 %v1077, %v4058
      %v4067 = vld [vmem:[%s936] sm:$0xff]
      %v4068 = vld [vmem:[%s936 + $0x8] sm:$0xff]
      %v4069 = vld [vmem:[%s936 + $0x10] sm:$0xff]
      %v4070 = vld [vmem:[%s936 + $0x18] sm:$0xff]
      %v4071 = vld [vmem:[%s943] sm:$0x1]
      %v4073 = vlaneseq
      %v4074 = vshrl.u32 %v4073, 7
      %v4075 = vsub.s32 0, %v4074
      %v4076 = vrot.slane %v4071, %v4075
      %v4079 = vsel %vm1015, %v4059, 0
      %v4082 = vsel %vm1015, %v4060, 0
      %v4085 = vsel %vm1015, %v4061, 0
      %v4088 = vsel %vm1015, %v4062, 0
      %v4091 = vsel %vm1015, %v4063, 0
      %v4094 = vsel %vm1015, %v4064, 0
      %v4097 = vsel %vm1015, %v4065, 0
      %v4100 = vsel %vm1015, %v4066, 0
      %4102 = vmatprep.subr.mxu0 0.0
      %4103 = vmatpush1.msra.mxu0 %v4067
      %4104 = vmatprep.subr.mxu0 0.0
      %4105 = vmatpush1.msra.mxu0 %v4068
      %4106 = vmatprep.subr.mxu0 0.0
      %4107 = vmatpush1.msra.mxu0 %v4069
      %4108 = vmatprep.subr.mxu0 0.0
      %4109 = vmatpush1.msra.mxu0 %v4070
      %4110 = vmatprep.subr.mxu0 0.0
      %4111 = vmatpush1.msra.mxu0 0.0
      %4112 = vmatprep.subr.mxu0 0.0
      %4113 = vmatpush1.msra.mxu0 0.0
      %4114 = vmatprep.subr.mxu0 0.0
      %4115 = vmatpush1.msra.mxu0 0.0
      %4116 = vmatprep.subr.mxu0 0.0
      %4117 = vmatpush1.msra.mxu0 0.0
      %4118 = vmatprep.subr.mxu0 0.0
      %4119 = vmatpush1.msra.mxu0 0.0
      %4120 = vmatprep.subr.mxu0 0.0
      %4121 = vmatpush1.msra.mxu0 0.0
      %4122 = vmatprep.subr.mxu0 0.0
      %4123 = vmatpush1.msra.mxu0 0.0
      %4124 = vmatprep.subr.mxu0 0.0
      %4125 = vmatpush1.msra.mxu0 0.0
      %4126 = vmatprep.subr.mxu0 0.0
      %4127 = vmatpush1.msra.mxu0 0.0
      %4128 = vmatprep.subr.mxu0 0.0
      %4129 = vmatpush1.msra.mxu0 0.0
      %4130 = vmatprep.subr.mxu0 0.0
      %4131 = vmatpush1.msra.mxu0 0.0
      %4132 = vmatprep.subr.mxu0 0.0
      %4133 = vmatpush1.msra.mxu0 0.0
      %4134 = vmatprep.subr.mxu0 0.0
      %4135 = vmatpush1.msra.mxu0 0.0
      %4136 = vmatprep.subr.mxu0 0.0
      %4137 = vmatpush1.msra.mxu0 0.0
      %4138 = vmatprep.subr.mxu0 0.0
      %4139 = vmatpush1.msra.mxu0 0.0
      %4140 = vmatprep.subr.mxu0 0.0
      %4141 = vmatpush1.msra.mxu0 0.0
      %4142 = vmatprep.subr.mxu0 0.0
      %4143 = vmatpush1.msra.mxu0 0.0
      %4144 = vmatprep.subr.mxu0 0.0
      %4145 = vmatpush1.msra.mxu0 0.0
      %4146 = vmatprep.subr.mxu0 0.0
      %4147 = vmatpush1.msra.mxu0 0.0
      %4148 = vmatprep.subr.mxu0 0.0
      %4149 = vmatpush1.msra.mxu0 0.0
      %4150 = vmatprep.subr.mxu0 0.0
      %4151 = vmatpush1.msra.mxu0 0.0
      %4152 = vmatprep.subr.mxu0 0.0
      %4153 = vmatpush1.msra.mxu0 0.0
      %4154 = vmatprep.subr.mxu0 0.0
      %4155 = vmatpush1.msra.mxu0 0.0
      %4156 = vmatprep.subr.mxu0 0.0
      %4157 = vmatpush1.msra.mxu0 0.0
      %4158 = vmatprep.subr.mxu0 0.0
      %4159 = vmatpush1.msra.mxu0 0.0
      %4160 = vmatprep.subr.mxu0 0.0
      %4161 = vmatpush1.msra.mxu0 0.0
      %4162 = vmatprep.subr.mxu0 0.0
      %4163 = vmatpush1.msra.mxu0 0.0
      %4164 = vmatprep.subr.mxu0 0.0
      %4165 = vmatpush1.msra.mxu0 0.0
      %4166 = vmatprep.mubr.f32.mxu0 0.0
      %4167 = vmatmul.mubr.f32.gmra.mrb[0].mxu0 %v4079
      %v4168 = vpop.f32.mrb[0].mxu0
      %v4169 = vadd.f32 %v4076, %v4168
      %v4170 = vpop.f32.mrb[0].mxu0
      %4171 = vmatprep.mubr.f32.mxu0 0.0
      %4172 = vmatmul.mubr.f32.gmra.mrb[0].mxu0 %v4082
      %v4173 = vpop.f32.mrb[0].mxu0
      %v4174 = vadd.f32 %v4076, %v4173
      %v4175 = vpop.f32.mrb[0].mxu0
      %4176 = vmatprep.mubr.f32.mxu0 0.0
      %4177 = vmatmul.mubr.f32.gmra.mrb[0].mxu0 %v4085
      %v4178 = vpop.f32.mrb[0].mxu0
      %v4179 = vadd.f32 %v4076, %v4178
      %v4180 = vpop.f32.mrb[0].mxu0
      %4181 = vmatprep.mubr.f32.mxu0 0.0
      %4182 = vmatmul.mubr.f32.gmra.mrb[0].mxu0 %v4088
      %v4183 = vpop.f32.mrb[0].mxu0
      %v4184 = vadd.f32 %v4076, %v4183
      %v4185 = vpop.f32.mrb[0].mxu0
      %4186 = vmatprep.mubr.f32.mxu0 0.0
      %4187 = vmatmul.mubr.f32.gmra.mrb[0].mxu0 %v4091
      %v4188 = vpop.f32.mrb[0].mxu0
      %v4189 = vadd.f32 %v4076, %v4188
      %v4190 = vpop.f32.mrb[0].mxu0
      %4191 = vmatprep.mubr.f32.mxu0 0.0
      %4192 = vmatmul.mubr.f32.gmra.mrb[0].mxu0 %v4094
      %v4193 = vpop.f32.mrb[0].mxu0
      %v4194 = vadd.f32 %v4076, %v4193
      %v4195 = vpop.f32.mrb[0].mxu0
      %4196 = vmatprep.mubr.f32.mxu0 0.0
      %4197 = vmatmul.mubr.f32.gmra.mrb[0].mxu0 %v4097
      %v4198 = vpop.f32.mrb[0].mxu0
      %v4199 = vadd.f32 %v4076, %v4198
      %v4200 = vpop.f32.mrb[0].mxu0
      %4201 = vmatprep.mubr.f32.mxu0 0.0
      %4202 = vmatmul.mubr.f32.gmra.mrb[0].mxu0 %v4100
      %v4203 = vpop.f32.mrb[0].mxu0
      %v4204 = vadd.f32 %v4076, %v4203
      %v4205 = vpop.f32.mrb[0].mxu0
      %4206 = vdwg.mxu0
      %v4207 = vmax.f32 %v4169, 0.0
      %v4208 = vmax.f32 %v4174, 0.0
      %v4209 = vmax.f32 %v4179, 0.0
      %v4210 = vmax.f32 %v4184, 0.0
      %v4211 = vmax.f32 %v4189, 0.0
      %v4212 = vmax.f32 %v4194, 0.0
      %v4213 = vmax.f32 %v4199, 0.0
      %v4214 = vmax.f32 %v4204, 0.0
      %v4215 = vld [vmem:[%s952] sm:$0xff]
      %v4216 = vld [vmem:[%s952 + $0x8] sm:$0xff]
      %v4217 = vld [vmem:[%s952 + $0x10] sm:$0xff]
      %v4218 = vld [vmem:[%s952 + $0x18] sm:$0xff]
      %v4219 = vld [vmem:[%s952 + $0x20] sm:$0xff]
      %v4220 = vld [vmem:[%s952 + $0x28] sm:$0xff]
      %v4221 = vld [vmem:[%s952 + $0x30] sm:$0xff]
      %v4222 = vld [vmem:[%s952 + $0x38] sm:$0xff]
      %v4223 = vld [vmem:[%s959] sm:$0x1]
      %v4225 = vlaneseq
      %v4226 = vshrl.u32 %v4225, 7
      %v4227 = vsub.s32 0, %v4226
      %v4228 = vrot.slane %v4223, %v4227
      %vm4230 = vcmask 523264
      %v4232 = vsel %vm4230, %v4207, 0
      %v4235 = vsel %vm4230, %v4208, 0
      %v4238 = vsel %vm4230, %v4209, 0
      %v4241 = vsel %vm4230, %v4210, 0
      %v4244 = vsel %vm4230, %v4211, 0
      %v4247 = vsel %vm4230, %v4212, 0
      %v4250 = vsel %vm4230, %v4213, 0
      %v4253 = vsel %vm4230, %v4214, 0
      %4255 = vmatprep.subr.mxu0 0.0
      %4256 = vmatpush1.msra.mxu0 %v4215
      %4257 = vmatprep.subr.mxu0 0.0
      %4258 = vmatpush1.msra.mxu0 %v4216
      %4259 = vmatprep.subr.mxu0 0.0
      %4260 = vmatpush1.msra.mxu0 %v4217
      %4261 = vmatprep.subr.mxu0 0.0
      %4262 = vmatpush1.msra.mxu0 %v4218
      %4263 = vmatprep.subr.mxu0 0.0
      %4264 = vmatpush1.msra.mxu0 %v4219
      %4265 = vmatprep.subr.mxu0 0.0
      %4266 = vmatpush1.msra.mxu0 %v4220
      %4267 = vmatprep.subr.mxu0 0.0
      %4268 = vmatpush1.msra.mxu0 %v4221
      %4269 = vmatprep.subr.mxu0 0.0
      %4270 = vmatpush1.msra.mxu0 %v4222
      %4271 = vmatprep.subr.mxu0 0.0
      %4272 = vmatpush1.msra.mxu0 0.0
      %4273 = vmatprep.subr.mxu0 0.0
      %4274 = vmatpush1.msra.mxu0 0.0
      %4275 = vmatprep.subr.mxu0 0.0
      %4276 = vmatpush1.msra.mxu0 0.0
      %4277 = vmatprep.subr.mxu0 0.0
      %4278 = vmatpush1.msra.mxu0 0.0
      %4279 = vmatprep.subr.mxu0 0.0
      %4280 = vmatpush1.msra.mxu0 0.0
      %4281 = vmatprep.subr.mxu0 0.0
      %4282 = vmatpush1.msra.mxu0 0.0
      %4283 = vmatprep.subr.mxu0 0.0
      %4284 = vmatpush1.msra.mxu0 0.0
      %4285 = vmatprep.subr.mxu0 0.0
      %4286 = vmatpush1.msra.mxu0 0.0
      %4287 = vmatprep.subr.mxu0 0.0
      %4288 = vmatpush1.msra.mxu0 0.0
      %4289 = vmatprep.subr.mxu0 0.0
      %4290 = vmatpush1.msra.mxu0 0.0
      %4291 = vmatprep.subr.mxu0 0.0
      %4292 = vmatpush1.msra.mxu0 0.0
      %4293 = vmatprep.subr.mxu0 0.0
      %4294 = vmatpush1.msra.mxu0 0.0
      %4295 = vmatprep.subr.mxu0 0.0
      %4296 = vmatpush1.msra.mxu0 0.0
      %4297 = vmatprep.subr.mxu0 0.0
      %4298 = vmatpush1.msra.mxu0 0.0
      %4299 = vmatprep.subr.mxu0 0.0
      %4300 = vmatpush1.msra.mxu0 0.0
      %4301 = vmatprep.subr.mxu0 0.0
      %4302 = vmatpush1.msra.mxu0 0.0
      %4303 = vmatprep.subr.mxu0 0.0
      %4304 = vmatpush1.msra.mxu0 0.0
      %4305 = vmatprep.subr.mxu0 0.0
      %4306 = vmatpush1.msra.mxu0 0.0
      %4307 = vmatprep.subr.mxu0 0.0
      %4308 = vmatpush1.msra.mxu0 0.0
      %4309 = vmatprep.subr.mxu0 0.0
      %4310 = vmatpush1.msra.mxu0 0.0
      %4311 = vmatprep.subr.mxu0 0.0
      %4312 = vmatpush1.msra.mxu0 0.0
      %4313 = vmatprep.subr.mxu0 0.0
      %4314 = vmatpush1.msra.mxu0 0.0
      %4315 = vmatprep.subr.mxu0 0.0
      %4316 = vmatpush1.msra.mxu0 0.0
      %4317 = vmatprep.subr.mxu0 0.0
      %4318 = vmatpush1.msra.mxu0 0.0
      %4319 = vmatprep.mubr.f32.mxu0 0.0
      %4320 = vmatmul.mubr.f32.gmra.mrb[0].mxu0 %v4232
      %v4321 = vpop.f32.mrb[0].mxu0
      %v4322 = vadd.f32 %v4228, %v4321
      %v4323 = vpop.f32.mrb[0].mxu0
      %4324 = vmatprep.mubr.f32.mxu0 0.0
      %4325 = vmatmul.mubr.f32.gmra.mrb[0].mxu0 %v4235
      %v4326 = vpop.f32.mrb[0].mxu0
      %v4327 = vadd.f32 %v4228, %v4326
      %v4328 = vpop.f32.mrb[0].mxu0
      %4329 = vmatprep.mubr.f32.mxu0 0.0
      %4330 = vmatmul.mubr.f32.gmra.mrb[0].mxu0 %v4238
      %v4331 = vpop.f32.mrb[0].mxu0
      %v4332 = vadd.f32 %v4228, %v4331
      %v4333 = vpop.f32.mrb[0].mxu0
      %4334 = vmatprep.mubr.f32.mxu0 0.0
      %4335 = vmatmul.mubr.f32.gmra.mrb[0].mxu0 %v4241
      %v4336 = vpop.f32.mrb[0].mxu0
      %v4337 = vadd.f32 %v4228, %v4336
      %v4338 = vpop.f32.mrb[0].mxu0
      %4339 = vmatprep.mubr.f32.mxu0 0.0
      %4340 = vmatmul.mubr.f32.gmra.mrb[0].mxu0 %v4244
      %v4341 = vpop.f32.mrb[0].mxu0
      %v4342 = vadd.f32 %v4228, %v4341
      %v4343 = vpop.f32.mrb[0].mxu0
      %4344 = vmatprep.mubr.f32.mxu0 0.0
      %4345 = vmatmul.mubr.f32.gmra.mrb[0].mxu0 %v4247
      %v4346 = vpop.f32.mrb[0].mxu0
      %v4347 = vadd.f32 %v4228, %v4346
      %v4348 = vpop.f32.mrb[0].mxu0
      %4349 = vmatprep.mubr.f32.mxu0 0.0
      %4350 = vmatmul.mubr.f32.gmra.mrb[0].mxu0 %v4250
      %v4351 = vpop.f32.mrb[0].mxu0
      %v4352 = vadd.f32 %v4228, %v4351
      %v4353 = vpop.f32.mrb[0].mxu0
      %4354 = vmatprep.mubr.f32.mxu0 0.0
      %4355 = vmatmul.mubr.f32.gmra.mrb[0].mxu0 %v4253
      %v4356 = vpop.f32.mrb[0].mxu0
      %v4357 = vadd.f32 %v4228, %v4356
      %v4358 = vpop.f32.mrb[0].mxu0
      %4359 = vdwg.mxu0
      %v4360 = vadd.f32 %v3987, %v4322
      %v4361 = vadd.f32 %v3988, %v4327
      %v4362 = vadd.f32 %v3989, %v4332
      %v4363 = vadd.f32 %v3990, %v4337
      %v4364 = vadd.f32 %v3991, %v4342
      %v4365 = vadd.f32 %v3992, %v4347
      %v4366 = vadd.f32 %v3993, %v4352
      %v4367 = vadd.f32 %v3994, %v4357
      %4368 = vst.msk [vmem:[#allocation2] sm:$0xff] %vm1015, %v4360
      %4369 = vst.msk [vmem:[#allocation2 + $0x8] sm:$0xff] %vm1015, %v4361
      %4370 = vst.msk [vmem:[#allocation2 + $0x10] sm:$0xff] %vm1015, %v4362
      %4371 = vst.msk [vmem:[#allocation2 + $0x18] sm:$0xff] %vm1015, %v4363
      %4372 = vst.msk [vmem:[#allocation2 + $0x20] sm:$0xff] %vm1015, %v4364
      %4373 = vst.msk [vmem:[#allocation2 + $0x28] sm:$0xff] %vm1015, %v4365
      %4374 = vst.msk [vmem:[#allocation2 + $0x30] sm:$0xff] %vm1015, %v4366
      %4375 = vst.msk [vmem:[#allocation2 + $0x38] sm:$0xff] %vm1015, %v4367
      %p4376 = scmp.eq.s32.totalorder %s32, 1
      // Predicated region
      $region93: #{t5_forward.1} parent=83 // pred_check
        %p4377 = pneg %p4376
      $region94: #{t5_forward.1} parent=83 // pred_check_branch
        %4379 = sbr.rel (%p4377) target = $region96
      $region95: #{t5_forward.1} parent=83 // pred_region
        %v4380 = vld [vmem:[#allocation2] sm:$0xff]
        %v4381 = vld [vmem:[#allocation2 + $0x8] sm:$0xff]
        %v4382 = vld [vmem:[#allocation2 + $0x10] sm:$0xff]
        %v4383 = vld [vmem:[#allocation2 + $0x18] sm:$0xff]
        %v4384 = vld [vmem:[#allocation2 + $0x20] sm:$0xff]
        %v4385 = vld [vmem:[#allocation2 + $0x28] sm:$0xff]
        %v4386 = vld [vmem:[#allocation2 + $0x30] sm:$0xff]
        %v4387 = vld [vmem:[#allocation2 + $0x38] sm:$0xff]
        %v4388 = vld [vmem:[%s962] sm:$0x1]
        %v4389 = vmul.f32 %v4380, %v4380
        %v4390 = vmul.f32 %v4381, %v4381
        %v4391 = vmul.f32 %v4382, %v4382
        %v4392 = vmul.f32 %v4383, %v4383
        %v4393 = vmul.f32 %v4384, %v4384
        %v4394 = vmul.f32 %v4385, %v4385
        %v4395 = vmul.f32 %v4386, %v4386
        %v4396 = vmul.f32 %v4387, %v4387
        %v4397 = vsel %vm1015, %v4389, 0.0
        %4398 = vadd.xlane.f32.xlu0 %v4397
        %v4399 = vpop.xlane.xlu0 %4398
        %v4400 = vsel %vm1015, %v4390, 0.0
        %4401 = vadd.xlane.f32.xlu0 %v4400
        %v4402 = vpop.xlane.xlu0 %4401
        %v4403 = vsel %vm1015, %v4391, 0.0
        %4404 = vadd.xlane.f32.xlu0 %v4403
        %v4405 = vpop.xlane.xlu0 %4404
        %v4406 = vsel %vm1015, %v4392, 0.0
        %4407 = vadd.xlane.f32.xlu0 %v4406
        %v4408 = vpop.xlane.xlu0 %4407
        %v4409 = vsel %vm1015, %v4393, 0.0
        %4410 = vadd.xlane.f32.xlu0 %v4409
        %v4411 = vpop.xlane.xlu0 %4410
        %v4412 = vsel %vm1015, %v4394, 0.0
        %4413 = vadd.xlane.f32.xlu0 %v4412
        %v4414 = vpop.xlane.xlu0 %4413
        %v4415 = vsel %vm1015, %v4395, 0.0
        %4416 = vadd.xlane.f32.xlu0 %v4415
        %v4417 = vpop.xlane.xlu0 %4416
        %v4418 = vsel %vm1015, %v4396, 0.0
        %4419 = vadd.xlane.f32.xlu0 %v4418
        %v4420 = vpop.xlane.xlu0 %4419
        %v4421 = vmul.f32 %v4399, %v1040
        %v4422 = vmul.f32 %v4402, %v1040
        %v4423 = vmul.f32 %v4405, %v1040
        %v4424 = vmul.f32 %v4408, %v1040
        %v4425 = vmul.f32 %v4411, %v1040
        %v4426 = vmul.f32 %v4414, %v1040
        %v4427 = vmul.f32 %v4417, %v1040
        %v4428 = vmul.f32 %v4420, %v1040
        %v4429 = vadd.f32 %v4421, 1e-06
        %v4430 = vadd.f32 %v4422, 1e-06
        %v4431 = vadd.f32 %v4423, 1e-06
        %v4432 = vadd.f32 %v4424, 1e-06
        %v4433 = vadd.f32 %v4425, 1e-06
        %v4434 = vadd.f32 %v4426, 1e-06
        %v4435 = vadd.f32 %v4427, 1e-06
        %v4436 = vadd.f32 %v4428, 1e-06
        %v4437 = vrsqrt.pop %v4429
        %v4438 = vrsqrt.pop %v4430
        %v4439 = vrsqrt.pop %v4431
        %v4440 = vrsqrt.pop %v4432
        %v4441 = vrsqrt.pop %v4433
        %v4442 = vrsqrt.pop %v4434
        %v4443 = vrsqrt.pop %v4435
        %v4444 = vrsqrt.pop %v4436
        %v4445 = vmul.f32 %v4380, %v4437
        %v4446 = vmul.f32 %v4381, %v4438
        %v4447 = vmul.f32 %v4382, %v4439
        %v4448 = vmul.f32 %v4383, %v4440
        %v4449 = vmul.f32 %v4384, %v4441
        %v4450 = vmul.f32 %v4385, %v4442
        %v4451 = vmul.f32 %v4386, %v4443
        %v4452 = vmul.f32 %v4387, %v4444
        %v4454 = vlaneseq
        %v4455 = vshrl.u32 %v4454, 7
        %v4456 = vsub.s32 0, %v4455
        %v4457 = vrot.slane %v4388, %v4456
        %v4459 = vmul.f32 %v4457, %v4445
        %v4460 = vmul.f32 %v4457, %v4446
        %v4461 = vmul.f32 %v4457, %v4447
        %v4462 = vmul.f32 %v4457, %v4448
        %v4463 = vmul.f32 %v4457, %v4449
        %v4464 = vmul.f32 %v4457, %v4450
        %v4465 = vmul.f32 %v4457, %v4451
        %v4466 = vmul.f32 %v4457, %v4452
        %4467 = vst.msk [vmem:[%s967] sm:$0xff] %vm1015, %v4459
        %4468 = vst.msk [vmem:[%s967 + $0x8] sm:$0xff] %vm1015, %v4460
        %4469 = vst.msk [vmem:[%s967 + $0x10] sm:$0xff] %vm1015, %v4461
        %4470 = vst.msk [vmem:[%s967 + $0x18] sm:$0xff] %vm1015, %v4462
        %4471 = vst.msk [vmem:[%s967 + $0x20] sm:$0xff] %vm1015, %v4463
        %4472 = vst.msk [vmem:[%s967 + $0x28] sm:$0xff] %vm1015, %v4464
        %4473 = vst.msk [vmem:[%s967 + $0x30] sm:$0xff] %vm1015, %v4465
        %4474 = vst.msk [vmem:[%s967 + $0x38] sm:$0xff] %vm1015, %v4466
      $region96: #{t5_forward.1} parent=83 // pred_fallthru
        _
      %p4475 = scmp.lt.s32.totalorder %s31, 1
      %s4476 = scalar_select %p4475, %s31, 1
      %s4477 = smul.addr %s4476, 8
      %s4478 = smul.addr %s4477, 8
      %s4479 = scalar_lea.vmem %s16, %s4478
      // Predicated region
      $region97: #{t5_forward.1} parent=83 // pred_check
        %p4480 = pneg %p499
      $region98: #{t5_forward.1} parent=83 // pred_check_branch
        %4482 = sbr.rel (%p4480) target = $region100
      $region99: #{t5_forward.1} parent=83 // pred_region
        _
      $region100: #{t5_forward.1} parent=83 // pred_fallthru
        _
    $region84: #{t5_forward.1} parent=5 // pred_fallthru
      _
    %p4483 = scmp.le.s32.totalorder 2, %s22
    // Predicated region
    $region101: #{t5_forward.1} parent=5 // pred_check
      %p4484 = pneg %p4483
    $region102: #{t5_forward.1} parent=5 // pred_check_branch
      %4486 = sbr.rel (%p4484) target = $region104
    $region103: #{t5_forward.1} parent=5 // pred_region
      %s4487 = ssub.s32 %s22, 2
      // Predicated region
      $region105: #{t5_forward.1} parent=103 // pred_check
        %p4488 = pneg %p505
      $region106: #{t5_forward.1} parent=103 // pred_check_branch
        %4490 = sbr.rel (%p4488) target = $region108
      $region107: #{t5_forward.1} parent=103 // pred_region
        %p4491 = scmp.lt.s32.totalorder %s33, 1
        %s4492 = scalar_select %p4491, %s33, 1
        %s4493 = smul.addr %s4492, 8
        %s4494 = smul.addr %s4493, 8
        %s4495 = scalar_lea.vmem %s16, %s4494
      $region108: #{t5_forward.1} parent=103 // pred_fallthru
        _
    $region104: #{t5_forward.1} parent=5 // pred_fallthru
      _
  $region6: #{t5_forward.1} parent=0 // loop_footer
    %s26 = sadd.s32 1, %s22
  $region7: #{t5_forward.1} parent=0 // loop_footer_branch
    %21 = sbr.rel target = $region3
  $region8: #{t5_forward.1} parent=0 // loop_exit
    _

</llo_original>
